<compile_context>
chip_gen: v6e
topology: v6e:2x2x1
jax: 0.10.0
libtpu: 0.0.40
codegen_flags: <defaults>
</compile_context>

<pallas_src>
import functools

import jax
import jax.numpy as jnp
from jax.experimental import pallas as pl
from jax.experimental.pallas import tpu as pltpu

N_FUSED = 4
RANK = 8


# ----------------------------------------------------------------------------- kernel
def fused_mlp_kernel(x_ref, tkw_ref, mask_wt_ref, qa_gu_ref, gu_w_ref, qb_gu_ref,
                     dwa_ref, dqb_ref,
                     out_ref,
                     x_bf, inter_a, acc,
                     *, tile_n, hidden):
    j = pl.program_id(0)

    tkw = tkw_ref[...]                                        # (B, n_fused) f32
    msk = (jnp.abs(tkw) > 1e-6).astype(jnp.float32)           # active-row masks
    wm = tkw * msk                                            # weight * mask, per row

    # -------- one-time work (grid step 0): x-adjust, batched LoRA-A, acc init --------
    @pl.when(j == 0)
    def _init():
        # x = x + mask_up_proj(top_k_weights): K=4 contraction as VPU broadcast-MACs.
        xa = x_ref[...]
        mw = mask_wt_ref[...]
        for i in range(N_FUSED):
            xa = xa + tkw[:, i:i + 1] * mw[i:i + 1, :]
        xb = xa.astype(jnp.bfloat16)
        x_bf[...] = xb
        # All 2*n_fused LoRA-A matmuls (gate+up, every adapter) in ONE MXU push.
        inter_a[...] = jnp.dot(xb, qa_gu_ref[...], preferred_element_type=jnp.float32)
        acc[...] = jnp.zeros_like(acc)

    # -------- gate_proj & up_proj (fused along lanes) for this intermediate tile -----
    gu = jnp.dot(x_bf[...], gu_w_ref[...], preferred_element_type=jnp.float32)  # (B, 2T)
    gu_sq = gu * gu                                           # hoisted out of adapter loop
    ia_all = inter_a[...]                                     # (B, nf*2r) f32
    for i in range(N_FUSED):
        ia = ia_all[:, i * 2 * RANK:(i + 1) * 2 * RANK].astype(jnp.bfloat16)  # (B, 2r)
        # block-diag LoRA-B covers gate and up halves in one matmul
        ao = jnp.dot(ia, qb_gu_ref[i * 2 * RANK:(i + 1) * 2 * RANK, :],
                     preferred_element_type=jnp.float32)                      # (B, 2T)
        ao = ao * wm[:, i:i + 1]            # weight*mask applied in f32 after the matmul
        fused_sq = jnp.sum(msk[:, i:i + 1] * gu_sq, axis=0, keepdims=True)
        lora_sq = jnp.sum(ao * ao, axis=0, keepdims=True)
        inv_ln = pl.reciprocal(jnp.sqrt(lora_sq) + 1e-8, approx=True)         # EUP
        gu = gu + (0.1 * jnp.sqrt(fused_sq) * inv_ln) * ao    # accumulate in place
    gate = gu[:, :tile_n]
    up = gu[:, tile_n:]
    h = (gate * jax.nn.sigmoid(gate) * up).astype(jnp.bfloat16)   # SiLU in f32 -> bf16

    # -------- down_proj: fused output AND LoRA-A in ONE matmul per step --------------
    acc[...] += jnp.dot(h, dwa_ref[...], preferred_element_type=jnp.float32)

    # -------- finalize: down_proj adapters + write output -----------------------------
    @pl.when(j == pl.num_programs(0) - 1)
    def _finalize():
        acc_all = acc[...]
        outf = acc_all[:, :hidden]                                            # (B, H)
        acc_ld = acc_all[:, hidden:hidden + N_FUSED * RANK]                   # (B, nf*r)
        out_sq = outf * outf
        result = outf
        for i in range(N_FUSED):
            ld_i = acc_ld[:, i * RANK:(i + 1) * RANK].astype(jnp.bfloat16)    # (B, r)
            ao = jnp.dot(ld_i, dqb_ref[i * RANK:(i + 1) * RANK, :],
                         preferred_element_type=jnp.float32)                  # (B, H)
            ao = ao * wm[:, i:i + 1]
            fused_sq = jnp.sum(msk[:, i:i + 1] * out_sq, axis=0, keepdims=True)
            lora_sq = jnp.sum(ao * ao, axis=0, keepdims=True)
            inv_ln = pl.reciprocal(jnp.sqrt(lora_sq) + 1e-8, approx=True)
            result = result + (0.1 * jnp.sqrt(fused_sq) * inv_ln) * ao
        out_ref[...] = result.astype(out_ref.dtype)


# ------------------------------------------------------------------------ param packing
def pack_params(params, *, tile_n):
    """One-time wrapper-side pre-transpose / fuse / bf16-cast of all weights."""
    f32, bf16 = jnp.float32, jnp.bfloat16
    inter, hidden = params["gate_w"].shape
    assert inter % tile_n == 0
    nt = inter // tile_n

    # gate/up fused along lanes; ONE CONTIGUOUS HBM slab per streamed tile:
    # gu_w[j] = [gate tile j | up tile j], shape (H, 2*tile_n)
    gwt = params["gate_w"].T.reshape(hidden, nt, tile_n)
    uwt = params["up_w"].T.reshape(hidden, nt, tile_n)
    gu_w = jnp.concatenate([gwt, uwt], axis=2)                   # (H, nt, 2*tile_n)
    gu_w = jnp.transpose(gu_w, (1, 0, 2)).astype(bf16)           # (nt, H, 2*tile_n)

    # batched LoRA-A (gate+up, all adapters): columns [i*2r : i*2r+r]=gate_i, [+r:]=up_i
    ga = jnp.transpose(params["gate_qa"], (2, 0, 1))             # (H, nf, r)
    ua = jnp.transpose(params["up_qa"], (2, 0, 1))
    qa_gu = jnp.stack([ga, ua], axis=2).reshape(hidden, N_FUSED * 2 * RANK).astype(bf16)

    # LoRA-B per (tile, adapter): block-diag(gate_qb_i^T tile_j, up_qb_i^T tile_j)
    gqb = jnp.transpose(params["gate_qb"], (0, 2, 1)).reshape(N_FUSED, RANK, nt, tile_n)
    uqb = jnp.transpose(params["up_qb"], (0, 2, 1)).reshape(N_FUSED, RANK, nt, tile_n)
    qb_gu = jnp.zeros((nt, N_FUSED, 2 * RANK, 2 * tile_n), f32)
    qb_gu = qb_gu.at[:, :, :RANK, :tile_n].set(jnp.transpose(gqb, (2, 0, 1, 3)))
    qb_gu = qb_gu.at[:, :, RANK:, tile_n:].set(jnp.transpose(uqb, (2, 0, 1, 3)))
    qb_gu = qb_gu.reshape(nt * N_FUSED * 2 * RANK, 2 * tile_n).astype(bf16)

    # down_proj: fold LoRA-A into the base weight along the output (lane) axis,
    # padding nf*rank up to a 128-lane multiple so the accumulator slices cleanly.
    ld_pad = ((N_FUSED * RANK + 127) // 128) * 128
    dw = params["down_w"].T                                                  # (inter, H)
    dqa = jnp.transpose(params["down_qa"], (2, 0, 1)).reshape(inter, N_FUSED * RANK)
    dqa_p = jnp.zeros((inter, ld_pad), f32).at[:, :N_FUSED * RANK].set(dqa)
    dwa = jnp.concatenate([dw, dqa_p], axis=1).astype(bf16)                  # (inter, H+pad)

    dqb = jnp.transpose(params["down_qb"], (0, 2, 1)).reshape(
        N_FUSED * RANK, hidden).astype(bf16)                                 # (nf*r, H)
    mask_wt = params["mask_w"].T.astype(f32)                                 # (nf, H)

    return dict(gu_w=gu_w, qa_gu=qa_gu, qb_gu=qb_gu, dwa=dwa, dqb=dqb,
                mask_wt=mask_wt, hidden=hidden, inter=inter, nt=nt,
                tile_n=tile_n, ld_pad=ld_pad)


# ----------------------------------------------------------------------------- wrapper
def _resident_spec(shape, mode):
    """Constant-index (resident) input; single-buffered when `mode` is given."""
    nd = len(shape)
    imap = lambda j: (0,) * nd
    if mode is None:
        return pl.BlockSpec(shape, imap)
    return pl.BlockSpec(shape, imap, pipeline_mode=mode)


def _build_call(B, H, packed, resident_mode):
    tile_n, nt, ld_pad = packed["tile_n"], packed["nt"], packed["ld_pad"]
    f32, bf16 = jnp.float32, jnp.bfloat16

    grid_spec = pltpu.PrefetchScalarGridSpec(
        num_scalar_prefetch=0,
        grid=(nt,),                                          # K-reduction over inter tiles
        in_specs=[
            _resident_spec((B, H), resident_mode),                           # x
            _resident_spec((B, N_FUSED), resident_mode),                     # top_k_weights
            _resident_spec((N_FUSED, H), resident_mode),                     # mask_up_proj^T
            _resident_spec((H, N_FUSED * 2 * RANK), resident_mode),          # batched LoRA-A
            pl.BlockSpec((None, H, 2 * tile_n), lambda j: (j, 0, 0)),        # gate/up weight (contiguous tile, streamed)
            pl.BlockSpec((N_FUSED * 2 * RANK, 2 * tile_n), lambda j: (j, 0)),# gate/up LoRA-B (streamed)
            pl.BlockSpec((tile_n, H + ld_pad), lambda j: (j, 0)),            # down weight + down LoRA-A (streamed)
            _resident_spec((N_FUSED * RANK, H), resident_mode),              # down LoRA-B
        ],
        out_specs=pl.BlockSpec((B, H), lambda j: (0, 0)),
        scratch_shapes=[
            pltpu.VMEM((B, H), bf16),                        # x + mask_up(tkw), bf16
            pltpu.VMEM((B, N_FUSED * 2 * RANK), f32),        # batched LoRA-A output (gate/up)
            pltpu.VMEM((B, H + ld_pad), f32),                # fused down output + down LoRA-A accumulator
        ],
    )
    return pl.pallas_call(
        functools.partial(fused_mlp_kernel, tile_n=tile_n, hidden=H),
        out_shape=jax.ShapeDtypeStruct((B, H), jnp.float32),
        grid_spec=grid_spec,
        compiler_params=pltpu.CompilerParams(
            dimension_semantics=("arbitrary",),              # reduction axis for down_proj
            # NOTE: re-derive tile_n/vmem limit per generation: ~48 MiB fits v7x's
            # 64 MiB VMEM with headroom; on v5e/v6e (128 MiB) raise toward ~100 MiB
            # and grow tile_n (or Buffered(3) on the streamed weights).
            vmem_limit_bytes=48 * 1024 * 1024,
        ),
    )


def fused_mlp(x, top_k_weights, packed):
    B, H = x.shape
    args = (x, top_k_weights, packed["mask_wt"], packed["qa_gu"], packed["gu_w"],
            packed["qb_gu"], packed["dwa"], packed["dqb"])
    last_err = None
    # Prefer single-buffered resident inputs (pipeline_mode=pl.Buffered(1));
    # fall back to default double-buffering if the running jax rejects it.
    for mode in (pl.Buffered(1), None):
        try:
            out = _build_call(B, H, packed, mode)(*args)
            return jax.block_until_ready(out)
        except Exception as e:  # noqa: BLE001 - identical semantics on fallback
            last_err = e
    raise last_err


# ------------------------------------------------------------------- pure-JAX reference
def _ref_fused_linear(x, w, qa, qb, tkw):
    out = x @ w.T
    adapter = jnp.zeros_like(out)
    for i in range(N_FUSED):
        wi = tkw[:, i:i + 1]
        m = (jnp.abs(wi) > 1e-6).astype(x.dtype)
        ao = ((x @ qa[i].T) @ qb[i].T) * wi * m
        fn = jnp.sqrt(jnp.sum(m * out * out, axis=0))
        ln = jnp.sqrt(jnp.sum(ao * ao, axis=0)) + 1e-8
        adapter = adapter + 0.1 * ao * (fn / ln)[None, :]
    return out + adapter


def fused_mlp_ref(x, tkw, p):
    x = x + tkw @ p["mask_w"].T
    g = _ref_fused_linear(x, p["gate_w"], p["gate_qa"], p["gate_qb"], tkw)
    u = _ref_fused_linear(x, p["up_w"], p["up_qa"], p["up_qb"], tkw)
    h = g * jax.nn.sigmoid(g) * u
    return _ref_fused_linear(h, p["down_w"], p["down_qa"], p["down_qb"], tkw)


# -------------------------------------------------------------------------------- setup
def init_params(key, hidden, inter, n_fused=N_FUSED, rank=RANK):
    ks = jax.random.split(key, 10)
    p = {}
    p["mask_w"] = jax.random.normal(ks[0], (hidden, n_fused), jnp.float32) * 0.02
    p["gate_w"] = jax.random.normal(ks[1], (inter, hidden), jnp.float32) * 0.05
    p["gate_qa"] = jax.random.normal(ks[2], (n_fused, rank, hidden), jnp.float32) * 0.02
    p["gate_qb"] = jax.random.normal(ks[3], (n_fused, inter, rank), jnp.float32) * 0.02
    p["up_w"] = jax.random.normal(ks[4], (inter, hidden), jnp.float32) * 0.05
    p["up_qa"] = jax.random.normal(ks[5], (n_fused, rank, hidden), jnp.float32) * 0.02
    p["up_qb"] = jax.random.normal(ks[6], (n_fused, inter, rank), jnp.float32) * 0.02
    p["down_w"] = jax.random.normal(ks[7], (hidden, inter), jnp.float32) * 0.05
    p["down_qa"] = jax.random.normal(ks[8], (n_fused, rank, inter), jnp.float32) * 0.02
    p["down_qb"] = jax.random.normal(ks[9], (n_fused, hidden, rank), jnp.float32) * 0.02
    return p


if __name__ == "__main__":
    # small but tile-able shapes: hidden=128, intermediate=512, 2 inter tiles of 256
    batch, hidden, inter, tile_n = 8, 128, 512, 256
    key = jax.random.PRNGKey(0)
    k_x, k_w, k_p = jax.random.split(key, 3)
    x = jax.random.normal(k_x, (batch, hidden), jnp.float32)
    top_k_weights = jax.random.normal(k_w, (batch, N_FUSED), jnp.float32)
    params = init_params(k_p, hidden, inter)

    packed = pack_params(params, tile_n=tile_n)
    out = fused_mlp(x, top_k_weights, packed)
    jax.block_until_ready(out)
    assert out.shape == (batch, hidden)

    ref = fused_mlp_ref(x, top_k_weights, params)
    err = float(jnp.max(jnp.abs(out - ref)))
    assert err < 8e-2, f"kernel deviates from fp32 reference, max abs err={err}"
    print("KERNEL_OK")
</pallas_src>

<mosaic_0001>
module attributes {stable_mosaic.version = 11 : i64} {
  func.func @fused_mlp_kernel(%arg0: i32, %arg1: memref<8x128xf32, #tpu.memory_space<vmem>>, %arg2: memref<8x4xf32, #tpu.memory_space<vmem>>, %arg3: memref<4x128xf32, #tpu.memory_space<vmem>>, %arg4: memref<128x64xbf16, #tpu.memory_space<vmem>>, %arg5: memref<1x128x512xbf16, #tpu.memory_space<vmem>>, %arg6: memref<64x512xbf16, #tpu.memory_space<vmem>>, %arg7: memref<256x256xbf16, #tpu.memory_space<vmem>>, %arg8: memref<32x128xbf16, #tpu.memory_space<vmem>>, %arg9: memref<8x128xf32, #tpu.memory_space<vmem>>, %arg10: memref<8x128xbf16, #tpu.memory_space<vmem>>, %arg11: memref<8x64xf32, #tpu.memory_space<vmem>>, %arg12: memref<8x256xf32, #tpu.memory_space<vmem>>) attributes {dimension_semantics = [#tpu.dimension_semantics<arbitrary>], iteration_bounds = array<i64: 2>, scalar_prefetch = 0 : i64, scratch_operands = 3 : i64, tpu.core_type = #tpu.core_type<tc>, window_params = [{pipeline_mode = #tpu.pipeline_mode<synchronous>, transform_indices = @transform_0, window_bounds = array<i64: 8, 128>}, {pipeline_mode = #tpu.pipeline_mode<synchronous>, transform_indices = @transform_1, window_bounds = array<i64: 8, 4>}, {pipeline_mode = #tpu.pipeline_mode<synchronous>, transform_indices = @transform_2, window_bounds = array<i64: 4, 128>}, {pipeline_mode = #tpu.pipeline_mode<synchronous>, transform_indices = @transform_3, window_bounds = array<i64: 128, 64>}, {transform_indices = @transform_4, window_bounds = array<i64: 1, 128, 512>}, {transform_indices = @transform_5, window_bounds = array<i64: 64, 512>}, {transform_indices = @transform_6, window_bounds = array<i64: 256, 256>}, {pipeline_mode = #tpu.pipeline_mode<synchronous>, transform_indices = @transform_7, window_bounds = array<i64: 32, 128>}, {pipeline_mode = #tpu.pipeline_mode<synchronous>, transform_indices = @transform_8, window_bounds = array<i64: 8, 128>}]} {
    %c0 = arith.constant 0 : index
    %c0_0 = arith.constant 0 : index
    %0 = vector.load %arg2[%c0, %c0_0] : memref<8x4xf32, #tpu.memory_space<vmem>>, vector<8x4xf32>
    %1 = math.absf %0 : vector<8x4xf32>
    %cst = arith.constant 9.99999997E-7 : f32
    %2 = vector.broadcast %cst : f32 to vector<8x4xf32>
    %3 = arith.cmpf ogt, %1, %2 : vector<8x4xf32>
    %4 = arith.extui %3 : vector<8x4xi1> to vector<8x4xi32>
    %5 = arith.sitofp %4 : vector<8x4xi32> to vector<8x4xf32>
    %6 = arith.mulf %0, %5 : vector<8x4xf32>
    %c0_i32 = arith.constant 0 : i32
    %7 = arith.cmpi eq, %arg0, %c0_i32 : i32
    %8 = arith.extui %7 : i1 to i32
    %c0_i32_1 = arith.constant 0 : i32
    %9 = arith.cmpi ne, %8, %c0_i32_1 : i32
    scf.if %9 {
      %c0_44 = arith.constant 0 : index
      %c0_45 = arith.constant 0 : index
      %138 = vector.load %arg1[%c0_44, %c0_45] : memref<8x128xf32, #tpu.memory_space<vmem>>, vector<8x128xf32>
      %c0_46 = arith.constant 0 : index
      %c0_47 = arith.constant 0 : index
      %139 = vector.load %arg3[%c0_46, %c0_47] : memref<4x128xf32, #tpu.memory_space<vmem>>, vector<4x128xf32>
      %140 = vector.extract_strided_slice %0 {offsets = [0, 0], sizes = [8, 1], strides = [1, 1]} : vector<8x4xf32> to vector<8x1xf32>
      %141 = vector.extract_strided_slice %139 {offsets = [0, 0], sizes = [1, 128], strides = [1, 1]} : vector<4x128xf32> to vector<1x128xf32>
      %142 = vector.broadcast %140 : vector<8x1xf32> to vector<8x128xf32>
      %143 = vector.broadcast %141 : vector<1x128xf32> to vector<8x128xf32>
      %144 = arith.mulf %142, %143 : vector<8x128xf32>
      %145 = arith.addf %138, %144 : vector<8x128xf32>
      %146 = vector.extract_strided_slice %0 {offsets = [0, 1], sizes = [8, 1], strides = [1, 1]} : vector<8x4xf32> to vector<8x1xf32>
      %147 = vector.extract_strided_slice %139 {offsets = [1, 0], sizes = [1, 128], strides = [1, 1]} : vector<4x128xf32> to vector<1x128xf32>
      %148 = vector.broadcast %146 : vector<8x1xf32> to vector<8x128xf32>
      %149 = vector.broadcast %147 : vector<1x128xf32> to vector<8x128xf32>
      %150 = arith.mulf %148, %149 : vector<8x128xf32>
      %151 = arith.addf %145, %150 : vector<8x128xf32>
      %152 = vector.extract_strided_slice %0 {offsets = [0, 2], sizes = [8, 1], strides = [1, 1]} : vector<8x4xf32> to vector<8x1xf32>
      %153 = vector.extract_strided_slice %139 {offsets = [2, 0], sizes = [1, 128], strides = [1, 1]} : vector<4x128xf32> to vector<1x128xf32>
      %154 = vector.broadcast %152 : vector<8x1xf32> to vector<8x128xf32>
      %155 = vector.broadcast %153 : vector<1x128xf32> to vector<8x128xf32>
      %156 = arith.mulf %154, %155 : vector<8x128xf32>
      %157 = arith.addf %151, %156 : vector<8x128xf32>
      %158 = vector.extract_strided_slice %0 {offsets = [0, 3], sizes = [8, 1], strides = [1, 1]} : vector<8x4xf32> to vector<8x1xf32>
      %159 = vector.extract_strided_slice %139 {offsets = [3, 0], sizes = [1, 128], strides = [1, 1]} : vector<4x128xf32> to vector<1x128xf32>
      %160 = vector.broadcast %158 : vector<8x1xf32> to vector<8x128xf32>
      %161 = vector.broadcast %159 : vector<1x128xf32> to vector<8x128xf32>
      %162 = arith.mulf %160, %161 : vector<8x128xf32>
      %163 = arith.addf %157, %162 : vector<8x128xf32>
      %164 = arith.truncf %163 : vector<8x128xf32> to vector<8x128xbf16>
      %c0_48 = arith.constant 0 : index
      %c0_49 = arith.constant 0 : index
      %165 = vector.load %arg10[%c0_48, %c0_49] : memref<8x128xbf16, #tpu.memory_space<vmem>>, vector<8x128xbf16>
      tpu.vector_store %arg10[%c0_48, %c0_49], %164 {strides = array<i32>} : memref<8x128xbf16, #tpu.memory_space<vmem>>, vector<8x128xbf16>,
      %c0_50 = arith.constant 0 : index
      %c0_51 = arith.constant 0 : index
      %166 = vector.load %arg4[%c0_50, %c0_51] : memref<128x64xbf16, #tpu.memory_space<vmem>>, vector<128x64xbf16>
      %cst_52 = arith.constant dense<0.000000e+00> : vector<8x64xf32>
      %167 = tpu.matmul %164, %166, %cst_52 {dimension_numbers = #tpu.dot_dimension_numbers<[1], [0], [0], [1], [0, 0, 1, 1], [], []>} : vector<8x128xbf16>, vector<128x64xbf16>, vector<8x64xf32> -> vector<8x64xf32>
      %c0_53 = arith.constant 0 : index
      %c0_54 = arith.constant 0 : index
      %168 = vector.load %arg11[%c0_53, %c0_54] : memref<8x64xf32, #tpu.memory_space<vmem>>, vector<8x64xf32>
      tpu.vector_store %arg11[%c0_53, %c0_54], %167 {strides = array<i32>} : memref<8x64xf32, #tpu.memory_space<vmem>>, vector<8x64xf32>,
      %cst_55 = arith.constant 0.000000e+00 : f32
      %169 = vector.broadcast %cst_55 : f32 to vector<8x256xf32>
      %c0_56 = arith.constant 0 : index
      %c0_57 = arith.constant 0 : index
      %170 = vector.load %arg12[%c0_56, %c0_57] : memref<8x256xf32, #tpu.memory_space<vmem>>, vector<8x256xf32>
      tpu.vector_store %arg12[%c0_56, %c0_57], %169 {strides = array<i32>} : memref<8x256xf32, #tpu.memory_space<vmem>>, vector<8x256xf32>,
    } else {
    }
    %c0_2 = arith.constant 0 : index
    %c0_3 = arith.constant 0 : index
    %10 = vector.load %arg10[%c0_2, %c0_3] : memref<8x128xbf16, #tpu.memory_space<vmem>>, vector<8x128xbf16>
    %c0_4 = arith.constant 0 : index
    %c0_5 = arith.constant 0 : index
    %c0_6 = arith.constant 0 : index
    %11 = vector.load %arg5[%c0_4, %c0_5, %c0_6] : memref<1x128x512xbf16, #tpu.memory_space<vmem>>, vector<1x128x512xbf16>
    %12 = vector.shape_cast %11 : vector<1x128x512xbf16> to vector<128x512xbf16>
    %cst_7 = arith.constant dense<0.000000e+00> : vector<8x512xf32>
    %13 = tpu.matmul %10, %12, %cst_7 {dimension_numbers = #tpu.dot_dimension_numbers<[1], [0], [0], [1], [0, 0, 1, 1], [], []>} : vector<8x128xbf16>, vector<128x512xbf16>, vector<8x512xf32> -> vector<8x512xf32>
    %14 = arith.mulf %13, %13 : vector<8x512xf32>
    %c0_8 = arith.constant 0 : index
    %c0_9 = arith.constant 0 : index
    %15 = vector.load %arg11[%c0_8, %c0_9] : memref<8x64xf32, #tpu.memory_space<vmem>>, vector<8x64xf32>
    %16 = vector.extract_strided_slice %15 {offsets = [0, 0], sizes = [8, 16], strides = [1, 1]} : vector<8x64xf32> to vector<8x16xf32>
    %17 = arith.truncf %16 : vector<8x16xf32> to vector<8x16xbf16>
    %c0_10 = arith.constant 0 : index
    %c0_11 = arith.constant 0 : index
    %18 = vector.load %arg6[%c0_10, %c0_11] : memref<64x512xbf16, #tpu.memory_space<vmem>>, vector<16x512xbf16>
    %cst_12 = arith.constant dense<0.000000e+00> : vector<8x512xf32>
    %19 = tpu.matmul %17, %18, %cst_12 {dimension_numbers = #tpu.dot_dimension_numbers<[1], [0], [0], [1], [0, 0, 1, 1], [], []>} : vector<8x16xbf16>, vector<16x512xbf16>, vector<8x512xf32> -> vector<8x512xf32>
    %20 = vector.extract_strided_slice %6 {offsets = [0, 0], sizes = [8, 1], strides = [1, 1]} : vector<8x4xf32> to vector<8x1xf32>
    %21 = vector.broadcast %20 : vector<8x1xf32> to vector<8x512xf32>
    %22 = arith.mulf %19, %21 : vector<8x512xf32>
    %23 = vector.extract_strided_slice %5 {offsets = [0, 0], sizes = [8, 1], strides = [1, 1]} : vector<8x4xf32> to vector<8x1xf32>
    %24 = vector.broadcast %23 : vector<8x1xf32> to vector<8x512xf32>
    %25 = arith.mulf %24, %14 : vector<8x512xf32>
    %cst_13 = arith.constant dense<0.000000e+00> : vector<512xf32>
    %26 = vector.multi_reduction <add>, %25, %cst_13 [0] : vector<8x512xf32> to vector<512xf32>
    %27 = vector.shape_cast %26 : vector<512xf32> to vector<1x512xf32>
    %28 = arith.mulf %22, %22 : vector<8x512xf32>
    %cst_14 = arith.constant dense<0.000000e+00> : vector<512xf32>
    %29 = vector.multi_reduction <add>, %28, %cst_14 [0] : vector<8x512xf32> to vector<512xf32>
    %30 = vector.shape_cast %29 : vector<512xf32> to vector<1x512xf32>
    %31 = math.sqrt %30 : vector<1x512xf32>
    %cst_15 = arith.constant 9.99999993E-9 : f32
    %32 = vector.broadcast %cst_15 : f32 to vector<1x512xf32>
    %33 = arith.addf %31, %32 : vector<1x512xf32>
    %34 = tpu.reciprocal %33 {approx = true} : vector<1x512xf32> -> vector<1x512xf32>
    %35 = math.sqrt %27 : vector<1x512xf32>
    %cst_16 = arith.constant 1.000000e-01 : f32
    %36 = vector.broadcast %cst_16 : f32 to vector<1x512xf32>
    %37 = arith.mulf %36, %35 : vector<1x512xf32>
    %38 = arith.mulf %37, %34 : vector<1x512xf32>
    %39 = vector.broadcast %38 : vector<1x512xf32> to vector<8x512xf32>
    %40 = arith.mulf %39, %22 : vector<8x512xf32>
    %41 = arith.addf %13, %40 : vector<8x512xf32>
    %42 = vector.extract_strided_slice %15 {offsets = [0, 16], sizes = [8, 16], strides = [1, 1]} : vector<8x64xf32> to vector<8x16xf32>
    %43 = arith.truncf %42 : vector<8x16xf32> to vector<8x16xbf16>
    %c16 = arith.constant 16 : index
    %c0_17 = arith.constant 0 : index
    %44 = vector.load %arg6[%c16, %c0_17] : memref<64x512xbf16, #tpu.memory_space<vmem>>, vector<16x512xbf16>
    %cst_18 = arith.constant dense<0.000000e+00> : vector<8x512xf32>
    %45 = tpu.matmul %43, %44, %cst_18 {dimension_numbers = #tpu.dot_dimension_numbers<[1], [0], [0], [1], [0, 0, 1, 1], [], []>} : vector<8x16xbf16>, vector<16x512xbf16>, vector<8x512xf32> -> vector<8x512xf32>
    %46 = vector.extract_strided_slice %6 {offsets = [0, 1], sizes = [8, 1], strides = [1, 1]} : vector<8x4xf32> to vector<8x1xf32>
    %47 = vector.broadcast %46 : vector<8x1xf32> to vector<8x512xf32>
    %48 = arith.mulf %45, %47 : vector<8x512xf32>
    %49 = vector.extract_strided_slice %5 {offsets = [0, 1], sizes = [8, 1], strides = [1, 1]} : vector<8x4xf32> to vector<8x1xf32>
    %50 = vector.broadcast %49 : vector<8x1xf32> to vector<8x512xf32>
    %51 = arith.mulf %50, %14 : vector<8x512xf32>
    %cst_19 = arith.constant dense<0.000000e+00> : vector<512xf32>
    %52 = vector.multi_reduction <add>, %51, %cst_19 [0] : vector<8x512xf32> to vector<512xf32>
    %53 = vector.shape_cast %52 : vector<512xf32> to vector<1x512xf32>
    %54 = arith.mulf %48, %48 : vector<8x512xf32>
    %cst_20 = arith.constant dense<0.000000e+00> : vector<512xf32>
    %55 = vector.multi_reduction <add>, %54, %cst_20 [0] : vector<8x512xf32> to vector<512xf32>
    %56 = vector.shape_cast %55 : vector<512xf32> to vector<1x512xf32>
    %57 = math.sqrt %56 : vector<1x512xf32>
    %cst_21 = arith.constant 9.99999993E-9 : f32
    %58 = vector.broadcast %cst_21 : f32 to vector<1x512xf32>
    %59 = arith.addf %57, %58 : vector<1x512xf32>
    %60 = tpu.reciprocal %59 {approx = true} : vector<1x512xf32> -> vector<1x512xf32>
    %61 = math.sqrt %53 : vector<1x512xf32>
    %cst_22 = arith.constant 1.000000e-01 : f32
    %62 = vector.broadcast %cst_22 : f32 to vector<1x512xf32>
    %63 = arith.mulf %62, %61 : vector<1x512xf32>
    %64 = arith.mulf %63, %60 : vector<1x512xf32>
    %65 = vector.broadcast %64 : vector<1x512xf32> to vector<8x512xf32>
    %66 = arith.mulf %65, %48 : vector<8x512xf32>
    %67 = arith.addf %41, %66 : vector<8x512xf32>
    %68 = vector.extract_strided_slice %15 {offsets = [0, 32], sizes = [8, 16], strides = [1, 1]} : vector<8x64xf32> to vector<8x16xf32>
    %69 = arith.truncf %68 : vector<8x16xf32> to vector<8x16xbf16>
    %c32 = arith.constant 32 : index
    %c0_23 = arith.constant 0 : index
    %70 = vector.load %arg6[%c32, %c0_23] : memref<64x512xbf16, #tpu.memory_space<vmem>>, vector<16x512xbf16>
    %cst_24 = arith.constant dense<0.000000e+00> : vector<8x512xf32>
    %71 = tpu.matmul %69, %70, %cst_24 {dimension_numbers = #tpu.dot_dimension_numbers<[1], [0], [0], [1], [0, 0, 1, 1], [], []>} : vector<8x16xbf16>, vector<16x512xbf16>, vector<8x512xf32> -> vector<8x512xf32>
    %72 = vector.extract_strided_slice %6 {offsets = [0, 2], sizes = [8, 1], strides = [1, 1]} : vector<8x4xf32> to vector<8x1xf32>
    %73 = vector.broadcast %72 : vector<8x1xf32> to vector<8x512xf32>
    %74 = arith.mulf %71, %73 : vector<8x512xf32>
    %75 = vector.extract_strided_slice %5 {offsets = [0, 2], sizes = [8, 1], strides = [1, 1]} : vector<8x4xf32> to vector<8x1xf32>
    %76 = vector.broadcast %75 : vector<8x1xf32> to vector<8x512xf32>
    %77 = arith.mulf %76, %14 : vector<8x512xf32>
    %cst_25 = arith.constant dense<0.000000e+00> : vector<512xf32>
    %78 = vector.multi_reduction <add>, %77, %cst_25 [0] : vector<8x512xf32> to vector<512xf32>
    %79 = vector.shape_cast %78 : vector<512xf32> to vector<1x512xf32>
    %80 = arith.mulf %74, %74 : vector<8x512xf32>
    %cst_26 = arith.constant dense<0.000000e+00> : vector<512xf32>
    %81 = vector.multi_reduction <add>, %80, %cst_26 [0] : vector<8x512xf32> to vector<512xf32>
    %82 = vector.shape_cast %81 : vector<512xf32> to vector<1x512xf32>
    %83 = math.sqrt %82 : vector<1x512xf32>
    %cst_27 = arith.constant 9.99999993E-9 : f32
    %84 = vector.broadcast %cst_27 : f32 to vector<1x512xf32>
    %85 = arith.addf %83, %84 : vector<1x512xf32>
    %86 = tpu.reciprocal %85 {approx = true} : vector<1x512xf32> -> vector<1x512xf32>
    %87 = math.sqrt %79 : vector<1x512xf32>
    %cst_28 = arith.constant 1.000000e-01 : f32
    %88 = vector.broadcast %cst_28 : f32 to vector<1x512xf32>
    %89 = arith.mulf %88, %87 : vector<1x512xf32>
    %90 = arith.mulf %89, %86 : vector<1x512xf32>
    %91 = vector.broadcast %90 : vector<1x512xf32> to vector<8x512xf32>
    %92 = arith.mulf %91, %74 : vector<8x512xf32>
    %93 = arith.addf %67, %92 : vector<8x512xf32>
    %94 = vector.extract_strided_slice %15 {offsets = [0, 48], sizes = [8, 16], strides = [1, 1]} : vector<8x64xf32> to vector<8x16xf32>
    %95 = arith.truncf %94 : vector<8x16xf32> to vector<8x16xbf16>
    %c48 = arith.constant 48 : index
    %c0_29 = arith.constant 0 : index
    %96 = vector.load %arg6[%c48, %c0_29] : memref<64x512xbf16, #tpu.memory_space<vmem>>, vector<16x512xbf16>
    %cst_30 = arith.constant dense<0.000000e+00> : vector<8x512xf32>
    %97 = tpu.matmul %95, %96, %cst_30 {dimension_numbers = #tpu.dot_dimension_numbers<[1], [0], [0], [1], [0, 0, 1, 1], [], []>} : vector<8x16xbf16>, vector<16x512xbf16>, vector<8x512xf32> -> vector<8x512xf32>
    %98 = vector.extract_strided_slice %6 {offsets = [0, 3], sizes = [8, 1], strides = [1, 1]} : vector<8x4xf32> to vector<8x1xf32>
    %99 = vector.broadcast %98 : vector<8x1xf32> to vector<8x512xf32>
    %100 = arith.mulf %97, %99 : vector<8x512xf32>
    %101 = vector.extract_strided_slice %5 {offsets = [0, 3], sizes = [8, 1], strides = [1, 1]} : vector<8x4xf32> to vector<8x1xf32>
    %102 = vector.broadcast %101 : vector<8x1xf32> to vector<8x512xf32>
    %103 = arith.mulf %102, %14 : vector<8x512xf32>
    %cst_31 = arith.constant dense<0.000000e+00> : vector<512xf32>
    %104 = vector.multi_reduction <add>, %103, %cst_31 [0] : vector<8x512xf32> to vector<512xf32>
    %105 = vector.shape_cast %104 : vector<512xf32> to vector<1x512xf32>
    %106 = arith.mulf %100, %100 : vector<8x512xf32>
    %cst_32 = arith.constant dense<0.000000e+00> : vector<512xf32>
    %107 = vector.multi_reduction <add>, %106, %cst_32 [0] : vector<8x512xf32> to vector<512xf32>
    %108 = vector.shape_cast %107 : vector<512xf32> to vector<1x512xf32>
    %109 = math.sqrt %108 : vector<1x512xf32>
    %cst_33 = arith.constant 9.99999993E-9 : f32
    %110 = vector.broadcast %cst_33 : f32 to vector<1x512xf32>
    %111 = arith.addf %109, %110 : vector<1x512xf32>
    %112 = tpu.reciprocal %111 {approx = true} : vector<1x512xf32> -> vector<1x512xf32>
    %113 = math.sqrt %105 : vector<1x512xf32>
    %cst_34 = arith.constant 1.000000e-01 : f32
    %114 = vector.broadcast %cst_34 : f32 to vector<1x512xf32>
    %115 = arith.mulf %114, %113 : vector<1x512xf32>
    %116 = arith.mulf %115, %112 : vector<1x512xf32>
    %117 = vector.broadcast %116 : vector<1x512xf32> to vector<8x512xf32>
    %118 = arith.mulf %117, %100 : vector<8x512xf32>
    %119 = arith.addf %93, %118 : vector<8x512xf32>
    %120 = vector.extract_strided_slice %119 {offsets = [0, 0], sizes = [8, 256], strides = [1, 1]} : vector<8x512xf32> to vector<8x256xf32>
    %121 = vector.extract_strided_slice %119 {offsets = [0, 256], sizes = [8, 256], strides = [1, 1]} : vector<8x512xf32> to vector<8x256xf32>
    %122 = arith.negf %120 : vector<8x256xf32>
    %123 = math.exp %122 : vector<8x256xf32>
    %cst_35 = arith.constant 1.000000e+00 : f32
    %124 = vector.broadcast %cst_35 : f32 to vector<8x256xf32>
    %125 = arith.addf %124, %123 : vector<8x256xf32>
    %126 = arith.divf %124, %125 : vector<8x256xf32>
    %127 = arith.mulf %120, %126 : vector<8x256xf32>
    %128 = arith.mulf %127, %121 : vector<8x256xf32>
    %129 = arith.truncf %128 : vector<8x256xf32> to vector<8x256xbf16>
    %c0_36 = arith.constant 0 : index
    %c0_37 = arith.constant 0 : index
    %130 = vector.load %arg12[%c0_36, %c0_37] : memref<8x256xf32, #tpu.memory_space<vmem>>, vector<8x256xf32>
    %c0_38 = arith.constant 0 : index
    %c0_39 = arith.constant 0 : index
    %131 = vector.load %arg7[%c0_38, %c0_39] : memref<256x256xbf16, #tpu.memory_space<vmem>>, vector<256x256xbf16>
    %cst_40 = arith.constant dense<0.000000e+00> : vector<8x256xf32>
    %132 = tpu.matmul %129, %131, %cst_40 {dimension_numbers = #tpu.dot_dimension_numbers<[1], [0], [0], [1], [0, 0, 1, 1], [], []>} : vector<8x256xbf16>, vector<256x256xbf16>, vector<8x256xf32> -> vector<8x256xf32>
    %133 = arith.addf %130, %132 : vector<8x256xf32>
    %c0_41 = arith.constant 0 : index
    %c0_42 = arith.constant 0 : index
    %134 = vector.load %arg12[%c0_41, %c0_42] : memref<8x256xf32, #tpu.memory_space<vmem>>, vector<8x256xf32>
    tpu.vector_store %arg12[%c0_41, %c0_42], %133 {strides = array<i32>} : memref<8x256xf32, #tpu.memory_space<vmem>>, vector<8x256xf32>,
    %c1_i32 = arith.constant 1 : i32
    %135 = arith.cmpi eq, %arg0, %c1_i32 : i32
    %136 = arith.extui %135 : i1 to i32
    %c0_i32_43 = arith.constant 0 : i32
    %137 = arith.cmpi ne, %136, %c0_i32_43 : i32
    scf.if %137 {
      %c0_44 = arith.constant 0 : index
      %c0_45 = arith.constant 0 : index
      %138 = vector.load %arg12[%c0_44, %c0_45] : memref<8x256xf32, #tpu.memory_space<vmem>>, vector<8x256xf32>
      %139 = vector.extract_strided_slice %138 {offsets = [0, 0], sizes = [8, 128], strides = [1, 1]} : vector<8x256xf32> to vector<8x128xf32>
      %140 = vector.extract_strided_slice %138 {offsets = [0, 128], sizes = [8, 32], strides = [1, 1]} : vector<8x256xf32> to vector<8x32xf32>
      %141 = arith.mulf %139, %139 : vector<8x128xf32>
      %142 = vector.extract_strided_slice %140 {offsets = [0, 0], sizes = [8, 8], strides = [1, 1]} : vector<8x32xf32> to vector<8x8xf32>
      %143 = arith.truncf %142 : vector<8x8xf32> to vector<8x8xbf16>
      %c0_46 = arith.constant 0 : index
      %c0_47 = arith.constant 0 : index
      %144 = vector.load %arg8[%c0_46, %c0_47] : memref<32x128xbf16, #tpu.memory_space<vmem>>, vector<8x128xbf16>
      %cst_48 = arith.constant dense<0.000000e+00> : vector<8x128xf32>
      %145 = tpu.matmul %143, %144, %cst_48 {dimension_numbers = #tpu.dot_dimension_numbers<[1], [0], [0], [1], [0, 0, 1, 1], [], []>} : vector<8x8xbf16>, vector<8x128xbf16>, vector<8x128xf32> -> vector<8x128xf32>
      %146 = vector.extract_strided_slice %6 {offsets = [0, 0], sizes = [8, 1], strides = [1, 1]} : vector<8x4xf32> to vector<8x1xf32>
      %147 = vector.broadcast %146 : vector<8x1xf32> to vector<8x128xf32>
      %148 = arith.mulf %145, %147 : vector<8x128xf32>
      %149 = vector.extract_strided_slice %5 {offsets = [0, 0], sizes = [8, 1], strides = [1, 1]} : vector<8x4xf32> to vector<8x1xf32>
      %150 = vector.broadcast %149 : vector<8x1xf32> to vector<8x128xf32>
      %151 = arith.mulf %150, %141 : vector<8x128xf32>
      %cst_49 = arith.constant dense<0.000000e+00> : vector<128xf32>
      %152 = vector.multi_reduction <add>, %151, %cst_49 [0] : vector<8x128xf32> to vector<128xf32>
      %153 = vector.shape_cast %152 : vector<128xf32> to vector<1x128xf32>
      %154 = arith.mulf %148, %148 : vector<8x128xf32>
      %cst_50 = arith.constant dense<0.000000e+00> : vector<128xf32>
      %155 = vector.multi_reduction <add>, %154, %cst_50 [0] : vector<8x128xf32> to vector<128xf32>
      %156 = vector.shape_cast %155 : vector<128xf32> to vector<1x128xf32>
      %157 = math.sqrt %156 : vector<1x128xf32>
      %cst_51 = arith.constant 9.99999993E-9 : f32
      %158 = vector.broadcast %cst_51 : f32 to vector<1x128xf32>
      %159 = arith.addf %157, %158 : vector<1x128xf32>
      %160 = tpu.reciprocal %159 {approx = true} : vector<1x128xf32> -> vector<1x128xf32>
      %161 = math.sqrt %153 : vector<1x128xf32>
      %cst_52 = arith.constant 1.000000e-01 : f32
      %162 = vector.broadcast %cst_52 : f32 to vector<1x128xf32>
      %163 = arith.mulf %162, %161 : vector<1x128xf32>
      %164 = arith.mulf %163, %160 : vector<1x128xf32>
      %165 = vector.broadcast %164 : vector<1x128xf32> to vector<8x128xf32>
      %166 = arith.mulf %165, %148 : vector<8x128xf32>
      %167 = arith.addf %139, %166 : vector<8x128xf32>
      %168 = vector.extract_strided_slice %140 {offsets = [0, 8], sizes = [8, 8], strides = [1, 1]} : vector<8x32xf32> to vector<8x8xf32>
      %169 = arith.truncf %168 : vector<8x8xf32> to vector<8x8xbf16>
      %c8 = arith.constant 8 : index
      %c0_53 = arith.constant 0 : index
      %170 = vector.load %arg8[%c8, %c0_53] : memref<32x128xbf16, #tpu.memory_space<vmem>>, vector<8x128xbf16>
      %cst_54 = arith.constant dense<0.000000e+00> : vector<8x128xf32>
      %171 = tpu.matmul %169, %170, %cst_54 {dimension_numbers = #tpu.dot_dimension_numbers<[1], [0], [0], [1], [0, 0, 1, 1], [], []>} : vector<8x8xbf16>, vector<8x128xbf16>, vector<8x128xf32> -> vector<8x128xf32>
      %172 = vector.extract_strided_slice %6 {offsets = [0, 1], sizes = [8, 1], strides = [1, 1]} : vector<8x4xf32> to vector<8x1xf32>
      %173 = vector.broadcast %172 : vector<8x1xf32> to vector<8x128xf32>
      %174 = arith.mulf %171, %173 : vector<8x128xf32>
      %175 = vector.extract_strided_slice %5 {offsets = [0, 1], sizes = [8, 1], strides = [1, 1]} : vector<8x4xf32> to vector<8x1xf32>
      %176 = vector.broadcast %175 : vector<8x1xf32> to vector<8x128xf32>
      %177 = arith.mulf %176, %141 : vector<8x128xf32>
      %cst_55 = arith.constant dense<0.000000e+00> : vector<128xf32>
      %178 = vector.multi_reduction <add>, %177, %cst_55 [0] : vector<8x128xf32> to vector<128xf32>
      %179 = vector.shape_cast %178 : vector<128xf32> to vector<1x128xf32>
      %180 = arith.mulf %174, %174 : vector<8x128xf32>
      %cst_56 = arith.constant dense<0.000000e+00> : vector<128xf32>
      %181 = vector.multi_reduction <add>, %180, %cst_56 [0] : vector<8x128xf32> to vector<128xf32>
      %182 = vector.shape_cast %181 : vector<128xf32> to vector<1x128xf32>
      %183 = math.sqrt %182 : vector<1x128xf32>
      %cst_57 = arith.constant 9.99999993E-9 : f32
      %184 = vector.broadcast %cst_57 : f32 to vector<1x128xf32>
      %185 = arith.addf %183, %184 : vector<1x128xf32>
      %186 = tpu.reciprocal %185 {approx = true} : vector<1x128xf32> -> vector<1x128xf32>
      %187 = math.sqrt %179 : vector<1x128xf32>
      %cst_58 = arith.constant 1.000000e-01 : f32
      %188 = vector.broadcast %cst_58 : f32 to vector<1x128xf32>
      %189 = arith.mulf %188, %187 : vector<1x128xf32>
      %190 = arith.mulf %189, %186 : vector<1x128xf32>
      %191 = vector.broadcast %190 : vector<1x128xf32> to vector<8x128xf32>
      %192 = arith.mulf %191, %174 : vector<8x128xf32>
      %193 = arith.addf %167, %192 : vector<8x128xf32>
      %194 = vector.extract_strided_slice %140 {offsets = [0, 16], sizes = [8, 8], strides = [1, 1]} : vector<8x32xf32> to vector<8x8xf32>
      %195 = arith.truncf %194 : vector<8x8xf32> to vector<8x8xbf16>
      %c16_59 = arith.constant 16 : index
      %c0_60 = arith.constant 0 : index
      %196 = vector.load %arg8[%c16_59, %c0_60] : memref<32x128xbf16, #tpu.memory_space<vmem>>, vector<8x128xbf16>
      %cst_61 = arith.constant dense<0.000000e+00> : vector<8x128xf32>
      %197 = tpu.matmul %195, %196, %cst_61 {dimension_numbers = #tpu.dot_dimension_numbers<[1], [0], [0], [1], [0, 0, 1, 1], [], []>} : vector<8x8xbf16>, vector<8x128xbf16>, vector<8x128xf32> -> vector<8x128xf32>
      %198 = vector.extract_strided_slice %6 {offsets = [0, 2], sizes = [8, 1], strides = [1, 1]} : vector<8x4xf32> to vector<8x1xf32>
      %199 = vector.broadcast %198 : vector<8x1xf32> to vector<8x128xf32>
      %200 = arith.mulf %197, %199 : vector<8x128xf32>
      %201 = vector.extract_strided_slice %5 {offsets = [0, 2], sizes = [8, 1], strides = [1, 1]} : vector<8x4xf32> to vector<8x1xf32>
      %202 = vector.broadcast %201 : vector<8x1xf32> to vector<8x128xf32>
      %203 = arith.mulf %202, %141 : vector<8x128xf32>
      %cst_62 = arith.constant dense<0.000000e+00> : vector<128xf32>
      %204 = vector.multi_reduction <add>, %203, %cst_62 [0] : vector<8x128xf32> to vector<128xf32>
      %205 = vector.shape_cast %204 : vector<128xf32> to vector<1x128xf32>
      %206 = arith.mulf %200, %200 : vector<8x128xf32>
      %cst_63 = arith.constant dense<0.000000e+00> : vector<128xf32>
      %207 = vector.multi_reduction <add>, %206, %cst_63 [0] : vector<8x128xf32> to vector<128xf32>
      %208 = vector.shape_cast %207 : vector<128xf32> to vector<1x128xf32>
      %209 = math.sqrt %208 : vector<1x128xf32>
      %cst_64 = arith.constant 9.99999993E-9 : f32
      %210 = vector.broadcast %cst_64 : f32 to vector<1x128xf32>
      %211 = arith.addf %209, %210 : vector<1x128xf32>
      %212 = tpu.reciprocal %211 {approx = true} : vector<1x128xf32> -> vector<1x128xf32>
      %213 = math.sqrt %205 : vector<1x128xf32>
      %cst_65 = arith.constant 1.000000e-01 : f32
      %214 = vector.broadcast %cst_65 : f32 to vector<1x128xf32>
      %215 = arith.mulf %214, %213 : vector<1x128xf32>
      %216 = arith.mulf %215, %212 : vector<1x128xf32>
      %217 = vector.broadcast %216 : vector<1x128xf32> to vector<8x128xf32>
      %218 = arith.mulf %217, %200 : vector<8x128xf32>
      %219 = arith.addf %193, %218 : vector<8x128xf32>
      %220 = vector.extract_strided_slice %140 {offsets = [0, 24], sizes = [8, 8], strides = [1, 1]} : vector<8x32xf32> to vector<8x8xf32>
      %221 = arith.truncf %220 : vector<8x8xf32> to vector<8x8xbf16>
      %c24 = arith.constant 24 : index
      %c0_66 = arith.constant 0 : index
      %222 = vector.load %arg8[%c24, %c0_66] : memref<32x128xbf16, #tpu.memory_space<vmem>>, vector<8x128xbf16>
      %cst_67 = arith.constant dense<0.000000e+00> : vector<8x128xf32>
      %223 = tpu.matmul %221, %222, %cst_67 {dimension_numbers = #tpu.dot_dimension_numbers<[1], [0], [0], [1], [0, 0, 1, 1], [], []>} : vector<8x8xbf16>, vector<8x128xbf16>, vector<8x128xf32> -> vector<8x128xf32>
      %224 = vector.extract_strided_slice %6 {offsets = [0, 3], sizes = [8, 1], strides = [1, 1]} : vector<8x4xf32> to vector<8x1xf32>
      %225 = vector.broadcast %224 : vector<8x1xf32> to vector<8x128xf32>
      %226 = arith.mulf %223, %225 : vector<8x128xf32>
      %227 = vector.extract_strided_slice %5 {offsets = [0, 3], sizes = [8, 1], strides = [1, 1]} : vector<8x4xf32> to vector<8x1xf32>
      %228 = vector.broadcast %227 : vector<8x1xf32> to vector<8x128xf32>
      %229 = arith.mulf %228, %141 : vector<8x128xf32>
      %cst_68 = arith.constant dense<0.000000e+00> : vector<128xf32>
      %230 = vector.multi_reduction <add>, %229, %cst_68 [0] : vector<8x128xf32> to vector<128xf32>
      %231 = vector.shape_cast %230 : vector<128xf32> to vector<1x128xf32>
      %232 = arith.mulf %226, %226 : vector<8x128xf32>
      %cst_69 = arith.constant dense<0.000000e+00> : vector<128xf32>
      %233 = vector.multi_reduction <add>, %232, %cst_69 [0] : vector<8x128xf32> to vector<128xf32>
      %234 = vector.shape_cast %233 : vector<128xf32> to vector<1x128xf32>
      %235 = math.sqrt %234 : vector<1x128xf32>
      %cst_70 = arith.constant 9.99999993E-9 : f32
      %236 = vector.broadcast %cst_70 : f32 to vector<1x128xf32>
      %237 = arith.addf %235, %236 : vector<1x128xf32>
      %238 = tpu.reciprocal %237 {approx = true} : vector<1x128xf32> -> vector<1x128xf32>
      %239 = math.sqrt %231 : vector<1x128xf32>
      %cst_71 = arith.constant 1.000000e-01 : f32
      %240 = vector.broadcast %cst_71 : f32 to vector<1x128xf32>
      %241 = arith.mulf %240, %239 : vector<1x128xf32>
      %242 = arith.mulf %241, %238 : vector<1x128xf32>
      %243 = vector.broadcast %242 : vector<1x128xf32> to vector<8x128xf32>
      %244 = arith.mulf %243, %226 : vector<8x128xf32>
      %245 = arith.addf %219, %244 : vector<8x128xf32>
      %c0_72 = arith.constant 0 : index
      %c0_73 = arith.constant 0 : index
      %246 = vector.load %arg9[%c0_72, %c0_73] : memref<8x128xf32, #tpu.memory_space<vmem>>, vector<8x128xf32>
      tpu.vector_store %arg9[%c0_72, %c0_73], %245 {strides = array<i32>} : memref<8x128xf32, #tpu.memory_space<vmem>>, vector<8x128xf32>,
    } else {
    }
    return
  }
  func.func @transform_0(%arg0: i32) -> (i32, i32) {
    %c0_i32 = arith.constant 0 : i32
    %c0_i32_0 = arith.constant 0 : i32
    %c0_i32_1 = arith.constant 0 : i32
    return %c0_i32, %c0_i32_0 : i32, i32
  }
  func.func @transform_1(%arg0: i32) -> (i32, i32) {
    %c0_i32 = arith.constant 0 : i32
    %c0_i32_0 = arith.constant 0 : i32
    %c0_i32_1 = arith.constant 0 : i32
    return %c0_i32, %c0_i32_0 : i32, i32
  }
  func.func @transform_2(%arg0: i32) -> (i32, i32) {
    %c0_i32 = arith.constant 0 : i32
    %c0_i32_0 = arith.constant 0 : i32
    %c0_i32_1 = arith.constant 0 : i32
    return %c0_i32, %c0_i32_0 : i32, i32
  }
  func.func @transform_3(%arg0: i32) -> (i32, i32) {
    %c0_i32 = arith.constant 0 : i32
    %c0_i32_0 = arith.constant 0 : i32
    %c0_i32_1 = arith.constant 0 : i32
    return %c0_i32, %c0_i32_0 : i32, i32
  }
  func.func @transform_4(%arg0: i32) -> (i32, i32, i32) {
    %c0_i32 = arith.constant 0 : i32
    %c0_i32_0 = arith.constant 0 : i32
    %c0_i32_1 = arith.constant 0 : i32
    return %arg0, %c0_i32, %c0_i32_0 : i32, i32, i32
  }
  func.func @transform_5(%arg0: i32) -> (i32, i32) {
    %c0_i32 = arith.constant 0 : i32
    %c0_i32_0 = arith.constant 0 : i32
    return %arg0, %c0_i32 : i32, i32
  }
  func.func @transform_6(%arg0: i32) -> (i32, i32) {
    %c0_i32 = arith.constant 0 : i32
    %c0_i32_0 = arith.constant 0 : i32
    return %arg0, %c0_i32 : i32, i32
  }
  func.func @transform_7(%arg0: i32) -> (i32, i32) {
    %c0_i32 = arith.constant 0 : i32
    %c0_i32_0 = arith.constant 0 : i32
    %c0_i32_1 = arith.constant 0 : i32
    return %c0_i32, %c0_i32_0 : i32, i32
  }
  func.func @transform_8(%arg0: i32) -> (i32, i32) {
    %c0_i32 = arith.constant 0 : i32
    %c0_i32_0 = arith.constant 0 : i32
    %c0_i32_1 = arith.constant 0 : i32
    return %c0_i32, %c0_i32_0 : i32, i32
  }
}

module attributes {stable_mosaic.version = 11 : i64} {
  func.func @fused_mlp_kernel(%arg0: i32, %arg1: memref<8x128xf32, #tpu.memory_space<vmem>>, %arg2: memref<8x4xf32, #tpu.memory_space<vmem>>, %arg3: memref<4x128xf32, #tpu.memory_space<vmem>>, %arg4: memref<128x64xbf16, #tpu.memory_space<vmem>>, %arg5: memref<1x128x512xbf16, #tpu.memory_space<vmem>>, %arg6: memref<64x512xbf16, #tpu.memory_space<vmem>>, %arg7: memref<256x256xbf16, #tpu.memory_space<vmem>>, %arg8: memref<32x128xbf16, #tpu.memory_space<vmem>>, %arg9: memref<8x128xf32, #tpu.memory_space<vmem>>, %arg10: memref<8x128xbf16, #tpu.memory_space<vmem>>, %arg11: memref<8x64xf32, #tpu.memory_space<vmem>>, %arg12: memref<8x256xf32, #tpu.memory_space<vmem>>) attributes {dimension_semantics = [#tpu.dimension_semantics<arbitrary>], iteration_bounds = array<i64: 2>, scalar_prefetch = 0 : i64, scratch_operands = 3 : i64, tpu.core_type = #tpu.core_type<tc>, window_params = [{pipeline_mode = #tpu.pipeline_mode<synchronous>, transform_indices = @transform_0, window_bounds = array<i64: 8, 128>}, {pipeline_mode = #tpu.pipeline_mode<synchronous>, transform_indices = @transform_1, window_bounds = array<i64: 8, 4>}, {pipeline_mode = #tpu.pipeline_mode<synchronous>, transform_indices = @transform_2, window_bounds = array<i64: 4, 128>}, {pipeline_mode = #tpu.pipeline_mode<synchronous>, transform_indices = @transform_3, window_bounds = array<i64: 128, 64>}, {transform_indices = @transform_4, window_bounds = array<i64: 1, 128, 512>}, {transform_indices = @transform_5, window_bounds = array<i64: 64, 512>}, {transform_indices = @transform_6, window_bounds = array<i64: 256, 256>}, {pipeline_mode = #tpu.pipeline_mode<synchronous>, transform_indices = @transform_7, window_bounds = array<i64: 32, 128>}, {pipeline_mode = #tpu.pipeline_mode<synchronous>, transform_indices = @transform_8, window_bounds = array<i64: 8, 128>}]} {
    %c0 = arith.constant 0 : index
    %c0_0 = arith.constant 0 : index
    %0 = vector.load %arg2[%c0, %c0_0] : memref<8x4xf32, #tpu.memory_space<vmem>>, vector<8x4xf32>
    %1 = math.absf %0 : vector<8x4xf32>
    %cst = arith.constant 9.99999997E-7 : f32
    %2 = vector.broadcast %cst : f32 to vector<8x4xf32>
    %3 = arith.cmpf ogt, %1, %2 : vector<8x4xf32>
    %4 = arith.extui %3 : vector<8x4xi1> to vector<8x4xi32>
    %5 = arith.sitofp %4 : vector<8x4xi32> to vector<8x4xf32>
    %6 = arith.mulf %0, %5 : vector<8x4xf32>
    %c0_i32 = arith.constant 0 : i32
    %7 = arith.cmpi eq, %arg0, %c0_i32 : i32
    %8 = arith.extui %7 : i1 to i32
    %c0_i32_1 = arith.constant 0 : i32
    %9 = arith.cmpi ne, %8, %c0_i32_1 : i32
    scf.if %9 {
      %c0_44 = arith.constant 0 : index
      %c0_45 = arith.constant 0 : index
      %138 = vector.load %arg1[%c0_44, %c0_45] : memref<8x128xf32, #tpu.memory_space<vmem>>, vector<8x128xf32>
      %c0_46 = arith.constant 0 : index
      %c0_47 = arith.constant 0 : index
      %139 = vector.load %arg3[%c0_46, %c0_47] : memref<4x128xf32, #tpu.memory_space<vmem>>, vector<4x128xf32>
      %140 = vector.extract_strided_slice %0 {offsets = [0, 0], sizes = [8, 1], strides = [1, 1]} : vector<8x4xf32> to vector<8x1xf32>
      %141 = vector.extract_strided_slice %139 {offsets = [0, 0], sizes = [1, 128], strides = [1, 1]} : vector<4x128xf32> to vector<1x128xf32>
      %142 = vector.broadcast %140 : vector<8x1xf32> to vector<8x128xf32>
      %143 = vector.broadcast %141 : vector<1x128xf32> to vector<8x128xf32>
      %144 = arith.mulf %142, %143 : vector<8x128xf32>
      %145 = arith.addf %138, %144 : vector<8x128xf32>
      %146 = vector.extract_strided_slice %0 {offsets = [0, 1], sizes = [8, 1], strides = [1, 1]} : vector<8x4xf32> to vector<8x1xf32>
      %147 = vector.extract_strided_slice %139 {offsets = [1, 0], sizes = [1, 128], strides = [1, 1]} : vector<4x128xf32> to vector<1x128xf32>
      %148 = vector.broadcast %146 : vector<8x1xf32> to vector<8x128xf32>
      %149 = vector.broadcast %147 : vector<1x128xf32> to vector<8x128xf32>
      %150 = arith.mulf %148, %149 : vector<8x128xf32>
      %151 = arith.addf %145, %150 : vector<8x128xf32>
      %152 = vector.extract_strided_slice %0 {offsets = [0, 2], sizes = [8, 1], strides = [1, 1]} : vector<8x4xf32> to vector<8x1xf32>
      %153 = vector.extract_strided_slice %139 {offsets = [2, 0], sizes = [1, 128], strides = [1, 1]} : vector<4x128xf32> to vector<1x128xf32>
      %154 = vector.broadcast %152 : vector<8x1xf32> to vector<8x128xf32>
      %155 = vector.broadcast %153 : vector<1x128xf32> to vector<8x128xf32>
      %156 = arith.mulf %154, %155 : vector<8x128xf32>
      %157 = arith.addf %151, %156 : vector<8x128xf32>
      %158 = vector.extract_strided_slice %0 {offsets = [0, 3], sizes = [8, 1], strides = [1, 1]} : vector<8x4xf32> to vector<8x1xf32>
      %159 = vector.extract_strided_slice %139 {offsets = [3, 0], sizes = [1, 128], strides = [1, 1]} : vector<4x128xf32> to vector<1x128xf32>
      %160 = vector.broadcast %158 : vector<8x1xf32> to vector<8x128xf32>
      %161 = vector.broadcast %159 : vector<1x128xf32> to vector<8x128xf32>
      %162 = arith.mulf %160, %161 : vector<8x128xf32>
      %163 = arith.addf %157, %162 : vector<8x128xf32>
      %164 = arith.truncf %163 : vector<8x128xf32> to vector<8x128xbf16>
      %c0_48 = arith.constant 0 : index
      %c0_49 = arith.constant 0 : index
      %165 = vector.load %arg10[%c0_48, %c0_49] : memref<8x128xbf16, #tpu.memory_space<vmem>>, vector<8x128xbf16>
      tpu.vector_store %arg10[%c0_48, %c0_49], %164 {strides = array<i32>} : memref<8x128xbf16, #tpu.memory_space<vmem>>, vector<8x128xbf16>,
      %c0_50 = arith.constant 0 : index
      %c0_51 = arith.constant 0 : index
      %166 = vector.load %arg4[%c0_50, %c0_51] : memref<128x64xbf16, #tpu.memory_space<vmem>>, vector<128x64xbf16>
      %cst_52 = arith.constant dense<0.000000e+00> : vector<8x64xf32>
      %167 = tpu.matmul %164, %166, %cst_52 {dimension_numbers = #tpu.dot_dimension_numbers<[1], [0], [0], [1], [0, 0, 1, 1], [], []>} : vector<8x128xbf16>, vector<128x64xbf16>, vector<8x64xf32> -> vector<8x64xf32>
      %c0_53 = arith.constant 0 : index
      %c0_54 = arith.constant 0 : index
      %168 = vector.load %arg11[%c0_53, %c0_54] : memref<8x64xf32, #tpu.memory_space<vmem>>, vector<8x64xf32>
      tpu.vector_store %arg11[%c0_53, %c0_54], %167 {strides = array<i32>} : memref<8x64xf32, #tpu.memory_space<vmem>>, vector<8x64xf32>,
      %cst_55 = arith.constant 0.000000e+00 : f32
      %169 = vector.broadcast %cst_55 : f32 to vector<8x256xf32>
      %c0_56 = arith.constant 0 : index
      %c0_57 = arith.constant 0 : index
      %170 = vector.load %arg12[%c0_56, %c0_57] : memref<8x256xf32, #tpu.memory_space<vmem>>, vector<8x256xf32>
      tpu.vector_store %arg12[%c0_56, %c0_57], %169 {strides = array<i32>} : memref<8x256xf32, #tpu.memory_space<vmem>>, vector<8x256xf32>,
    } else {
    }
    %c0_2 = arith.constant 0 : index
    %c0_3 = arith.constant 0 : index
    %10 = vector.load %arg10[%c0_2, %c0_3] : memref<8x128xbf16, #tpu.memory_space<vmem>>, vector<8x128xbf16>
    %c0_4 = arith.constant 0 : index
    %c0_5 = arith.constant 0 : index
    %c0_6 = arith.constant 0 : index
    %11 = vector.load %arg5[%c0_4, %c0_5, %c0_6] : memref<1x128x512xbf16, #tpu.memory_space<vmem>>, vector<1x128x512xbf16>
    %12 = vector.shape_cast %11 : vector<1x128x512xbf16> to vector<128x512xbf16>
    %cst_7 = arith.constant dense<0.000000e+00> : vector<8x512xf32>
    %13 = tpu.matmul %10, %12, %cst_7 {dimension_numbers = #tpu.dot_dimension_numbers<[1], [0], [0], [1], [0, 0, 1, 1], [], []>} : vector<8x128xbf16>, vector<128x512xbf16>, vector<8x512xf32> -> vector<8x512xf32>
    %14 = arith.mulf %13, %13 : vector<8x512xf32>
    %c0_8 = arith.constant 0 : index
    %c0_9 = arith.constant 0 : index
    %15 = vector.load %arg11[%c0_8, %c0_9] : memref<8x64xf32, #tpu.memory_space<vmem>>, vector<8x64xf32>
    %16 = vector.extract_strided_slice %15 {offsets = [0, 0], sizes = [8, 16], strides = [1, 1]} : vector<8x64xf32> to vector<8x16xf32>
    %17 = arith.truncf %16 : vector<8x16xf32> to vector<8x16xbf16>
    %c0_10 = arith.constant 0 : index
    %c0_11 = arith.constant 0 : index
    %18 = vector.load %arg6[%c0_10, %c0_11] : memref<64x512xbf16, #tpu.memory_space<vmem>>, vector<16x512xbf16>
    %cst_12 = arith.constant dense<0.000000e+00> : vector<8x512xf32>
    %19 = tpu.matmul %17, %18, %cst_12 {dimension_numbers = #tpu.dot_dimension_numbers<[1], [0], [0], [1], [0, 0, 1, 1], [], []>} : vector<8x16xbf16>, vector<16x512xbf16>, vector<8x512xf32> -> vector<8x512xf32>
    %20 = vector.extract_strided_slice %6 {offsets = [0, 0], sizes = [8, 1], strides = [1, 1]} : vector<8x4xf32> to vector<8x1xf32>
    %21 = vector.broadcast %20 : vector<8x1xf32> to vector<8x512xf32>
    %22 = arith.mulf %19, %21 : vector<8x512xf32>
    %23 = vector.extract_strided_slice %5 {offsets = [0, 0], sizes = [8, 1], strides = [1, 1]} : vector<8x4xf32> to vector<8x1xf32>
    %24 = vector.broadcast %23 : vector<8x1xf32> to vector<8x512xf32>
    %25 = arith.mulf %24, %14 : vector<8x512xf32>
    %cst_13 = arith.constant dense<0.000000e+00> : vector<512xf32>
    %26 = vector.multi_reduction <add>, %25, %cst_13 [0] : vector<8x512xf32> to vector<512xf32>
    %27 = vector.shape_cast %26 : vector<512xf32> to vector<1x512xf32>
    %28 = arith.mulf %22, %22 : vector<8x512xf32>
    %cst_14 = arith.constant dense<0.000000e+00> : vector<512xf32>
    %29 = vector.multi_reduction <add>, %28, %cst_14 [0] : vector<8x512xf32> to vector<512xf32>
    %30 = vector.shape_cast %29 : vector<512xf32> to vector<1x512xf32>
    %31 = math.sqrt %30 : vector<1x512xf32>
    %cst_15 = arith.constant 9.99999993E-9 : f32
    %32 = vector.broadcast %cst_15 : f32 to vector<1x512xf32>
    %33 = arith.addf %31, %32 : vector<1x512xf32>
    %34 = tpu.reciprocal %33 {approx = true} : vector<1x512xf32> -> vector<1x512xf32>
    %35 = math.sqrt %27 : vector<1x512xf32>
    %cst_16 = arith.constant 1.000000e-01 : f32
    %36 = vector.broadcast %cst_16 : f32 to vector<1x512xf32>
    %37 = arith.mulf %36, %35 : vector<1x512xf32>
    %38 = arith.mulf %37, %34 : vector<1x512xf32>
    %39 = vector.broadcast %38 : vector<1x512xf32> to vector<8x512xf32>
    %40 = arith.mulf %39, %22 : vector<8x512xf32>
    %41 = arith.addf %13, %40 : vector<8x512xf32>
    %42 = vector.extract_strided_slice %15 {offsets = [0, 16], sizes = [8, 16], strides = [1, 1]} : vector<8x64xf32> to vector<8x16xf32>
    %43 = arith.truncf %42 : vector<8x16xf32> to vector<8x16xbf16>
    %c16 = arith.constant 16 : index
    %c0_17 = arith.constant 0 : index
    %44 = vector.load %arg6[%c16, %c0_17] : memref<64x512xbf16, #tpu.memory_space<vmem>>, vector<16x512xbf16>
    %cst_18 = arith.constant dense<0.000000e+00> : vector<8x512xf32>
    %45 = tpu.matmul %43, %44, %cst_18 {dimension_numbers = #tpu.dot_dimension_numbers<[1], [0], [0], [1], [0, 0, 1, 1], [], []>} : vector<8x16xbf16>, vector<16x512xbf16>, vector<8x512xf32> -> vector<8x512xf32>
    %46 = vector.extract_strided_slice %6 {offsets = [0, 1], sizes = [8, 1], strides = [1, 1]} : vector<8x4xf32> to vector<8x1xf32>
    %47 = vector.broadcast %46 : vector<8x1xf32> to vector<8x512xf32>
    %48 = arith.mulf %45, %47 : vector<8x512xf32>
    %49 = vector.extract_strided_slice %5 {offsets = [0, 1], sizes = [8, 1], strides = [1, 1]} : vector<8x4xf32> to vector<8x1xf32>
    %50 = vector.broadcast %49 : vector<8x1xf32> to vector<8x512xf32>
    %51 = arith.mulf %50, %14 : vector<8x512xf32>
    %cst_19 = arith.constant dense<0.000000e+00> : vector<512xf32>
    %52 = vector.multi_reduction <add>, %51, %cst_19 [0] : vector<8x512xf32> to vector<512xf32>
    %53 = vector.shape_cast %52 : vector<512xf32> to vector<1x512xf32>
    %54 = arith.mulf %48, %48 : vector<8x512xf32>
    %cst_20 = arith.constant dense<0.000000e+00> : vector<512xf32>
    %55 = vector.multi_reduction <add>, %54, %cst_20 [0] : vector<8x512xf32> to vector<512xf32>
    %56 = vector.shape_cast %55 : vector<512xf32> to vector<1x512xf32>
    %57 = math.sqrt %56 : vector<1x512xf32>
    %cst_21 = arith.constant 9.99999993E-9 : f32
    %58 = vector.broadcast %cst_21 : f32 to vector<1x512xf32>
    %59 = arith.addf %57, %58 : vector<1x512xf32>
    %60 = tpu.reciprocal %59 {approx = true} : vector<1x512xf32> -> vector<1x512xf32>
    %61 = math.sqrt %53 : vector<1x512xf32>
    %cst_22 = arith.constant 1.000000e-01 : f32
    %62 = vector.broadcast %cst_22 : f32 to vector<1x512xf32>
    %63 = arith.mulf %62, %61 : vector<1x512xf32>
    %64 = arith.mulf %63, %60 : vector<1x512xf32>
    %65 = vector.broadcast %64 : vector<1x512xf32> to vector<8x512xf32>
    %66 = arith.mulf %65, %48 : vector<8x512xf32>
    %67 = arith.addf %41, %66 : vector<8x512xf32>
    %68 = vector.extract_strided_slice %15 {offsets = [0, 32], sizes = [8, 16], strides = [1, 1]} : vector<8x64xf32> to vector<8x16xf32>
    %69 = arith.truncf %68 : vector<8x16xf32> to vector<8x16xbf16>
    %c32 = arith.constant 32 : index
    %c0_23 = arith.constant 0 : index
    %70 = vector.load %arg6[%c32, %c0_23] : memref<64x512xbf16, #tpu.memory_space<vmem>>, vector<16x512xbf16>
    %cst_24 = arith.constant dense<0.000000e+00> : vector<8x512xf32>
    %71 = tpu.matmul %69, %70, %cst_24 {dimension_numbers = #tpu.dot_dimension_numbers<[1], [0], [0], [1], [0, 0, 1, 1], [], []>} : vector<8x16xbf16>, vector<16x512xbf16>, vector<8x512xf32> -> vector<8x512xf32>
    %72 = vector.extract_strided_slice %6 {offsets = [0, 2], sizes = [8, 1], strides = [1, 1]} : vector<8x4xf32> to vector<8x1xf32>
    %73 = vector.broadcast %72 : vector<8x1xf32> to vector<8x512xf32>
    %74 = arith.mulf %71, %73 : vector<8x512xf32>
    %75 = vector.extract_strided_slice %5 {offsets = [0, 2], sizes = [8, 1], strides = [1, 1]} : vector<8x4xf32> to vector<8x1xf32>
    %76 = vector.broadcast %75 : vector<8x1xf32> to vector<8x512xf32>
    %77 = arith.mulf %76, %14 : vector<8x512xf32>
    %cst_25 = arith.constant dense<0.000000e+00> : vector<512xf32>
    %78 = vector.multi_reduction <add>, %77, %cst_25 [0] : vector<8x512xf32> to vector<512xf32>
    %79 = vector.shape_cast %78 : vector<512xf32> to vector<1x512xf32>
    %80 = arith.mulf %74, %74 : vector<8x512xf32>
    %cst_26 = arith.constant dense<0.000000e+00> : vector<512xf32>
    %81 = vector.multi_reduction <add>, %80, %cst_26 [0] : vector<8x512xf32> to vector<512xf32>
    %82 = vector.shape_cast %81 : vector<512xf32> to vector<1x512xf32>
    %83 = math.sqrt %82 : vector<1x512xf32>
    %cst_27 = arith.constant 9.99999993E-9 : f32
    %84 = vector.broadcast %cst_27 : f32 to vector<1x512xf32>
    %85 = arith.addf %83, %84 : vector<1x512xf32>
    %86 = tpu.reciprocal %85 {approx = true} : vector<1x512xf32> -> vector<1x512xf32>
    %87 = math.sqrt %79 : vector<1x512xf32>
    %cst_28 = arith.constant 1.000000e-01 : f32
    %88 = vector.broadcast %cst_28 : f32 to vector<1x512xf32>
    %89 = arith.mulf %88, %87 : vector<1x512xf32>
    %90 = arith.mulf %89, %86 : vector<1x512xf32>
    %91 = vector.broadcast %90 : vector<1x512xf32> to vector<8x512xf32>
    %92 = arith.mulf %91, %74 : vector<8x512xf32>
    %93 = arith.addf %67, %92 : vector<8x512xf32>
    %94 = vector.extract_strided_slice %15 {offsets = [0, 48], sizes = [8, 16], strides = [1, 1]} : vector<8x64xf32> to vector<8x16xf32>
    %95 = arith.truncf %94 : vector<8x16xf32> to vector<8x16xbf16>
    %c48 = arith.constant 48 : index
    %c0_29 = arith.constant 0 : index
    %96 = vector.load %arg6[%c48, %c0_29] : memref<64x512xbf16, #tpu.memory_space<vmem>>, vector<16x512xbf16>
    %cst_30 = arith.constant dense<0.000000e+00> : vector<8x512xf32>
    %97 = tpu.matmul %95, %96, %cst_30 {dimension_numbers = #tpu.dot_dimension_numbers<[1], [0], [0], [1], [0, 0, 1, 1], [], []>} : vector<8x16xbf16>, vector<16x512xbf16>, vector<8x512xf32> -> vector<8x512xf32>
    %98 = vector.extract_strided_slice %6 {offsets = [0, 3], sizes = [8, 1], strides = [1, 1]} : vector<8x4xf32> to vector<8x1xf32>
    %99 = vector.broadcast %98 : vector<8x1xf32> to vector<8x512xf32>
    %100 = arith.mulf %97, %99 : vector<8x512xf32>
    %101 = vector.extract_strided_slice %5 {offsets = [0, 3], sizes = [8, 1], strides = [1, 1]} : vector<8x4xf32> to vector<8x1xf32>
    %102 = vector.broadcast %101 : vector<8x1xf32> to vector<8x512xf32>
    %103 = arith.mulf %102, %14 : vector<8x512xf32>
    %cst_31 = arith.constant dense<0.000000e+00> : vector<512xf32>
    %104 = vector.multi_reduction <add>, %103, %cst_31 [0] : vector<8x512xf32> to vector<512xf32>
    %105 = vector.shape_cast %104 : vector<512xf32> to vector<1x512xf32>
    %106 = arith.mulf %100, %100 : vector<8x512xf32>
    %cst_32 = arith.constant dense<0.000000e+00> : vector<512xf32>
    %107 = vector.multi_reduction <add>, %106, %cst_32 [0] : vector<8x512xf32> to vector<512xf32>
    %108 = vector.shape_cast %107 : vector<512xf32> to vector<1x512xf32>
    %109 = math.sqrt %108 : vector<1x512xf32>
    %cst_33 = arith.constant 9.99999993E-9 : f32
    %110 = vector.broadcast %cst_33 : f32 to vector<1x512xf32>
    %111 = arith.addf %109, %110 : vector<1x512xf32>
    %112 = tpu.reciprocal %111 {approx = true} : vector<1x512xf32> -> vector<1x512xf32>
    %113 = math.sqrt %105 : vector<1x512xf32>
    %cst_34 = arith.constant 1.000000e-01 : f32
    %114 = vector.broadcast %cst_34 : f32 to vector<1x512xf32>
    %115 = arith.mulf %114, %113 : vector<1x512xf32>
    %116 = arith.mulf %115, %112 : vector<1x512xf32>
    %117 = vector.broadcast %116 : vector<1x512xf32> to vector<8x512xf32>
    %118 = arith.mulf %117, %100 : vector<8x512xf32>
    %119 = arith.addf %93, %118 : vector<8x512xf32>
    %120 = vector.extract_strided_slice %119 {offsets = [0, 0], sizes = [8, 256], strides = [1, 1]} : vector<8x512xf32> to vector<8x256xf32>
    %121 = vector.extract_strided_slice %119 {offsets = [0, 256], sizes = [8, 256], strides = [1, 1]} : vector<8x512xf32> to vector<8x256xf32>
    %122 = arith.negf %120 : vector<8x256xf32>
    %123 = math.exp %122 : vector<8x256xf32>
    %cst_35 = arith.constant 1.000000e+00 : f32
    %124 = vector.broadcast %cst_35 : f32 to vector<8x256xf32>
    %125 = arith.addf %124, %123 : vector<8x256xf32>
    %126 = arith.divf %124, %125 : vector<8x256xf32>
    %127 = arith.mulf %120, %126 : vector<8x256xf32>
    %128 = arith.mulf %127, %121 : vector<8x256xf32>
    %129 = arith.truncf %128 : vector<8x256xf32> to vector<8x256xbf16>
    %c0_36 = arith.constant 0 : index
    %c0_37 = arith.constant 0 : index
    %130 = vector.load %arg12[%c0_36, %c0_37] : memref<8x256xf32, #tpu.memory_space<vmem>>, vector<8x256xf32>
    %c0_38 = arith.constant 0 : index
    %c0_39 = arith.constant 0 : index
    %131 = vector.load %arg7[%c0_38, %c0_39] : memref<256x256xbf16, #tpu.memory_space<vmem>>, vector<256x256xbf16>
    %cst_40 = arith.constant dense<0.000000e+00> : vector<8x256xf32>
    %132 = tpu.matmul %129, %131, %cst_40 {dimension_numbers = #tpu.dot_dimension_numbers<[1], [0], [0], [1], [0, 0, 1, 1], [], []>} : vector<8x256xbf16>, vector<256x256xbf16>, vector<8x256xf32> -> vector<8x256xf32>
    %133 = arith.addf %130, %132 : vector<8x256xf32>
    %c0_41 = arith.constant 0 : index
    %c0_42 = arith.constant 0 : index
    %134 = vector.load %arg12[%c0_41, %c0_42] : memref<8x256xf32, #tpu.memory_space<vmem>>, vector<8x256xf32>
    tpu.vector_store %arg12[%c0_41, %c0_42], %133 {strides = array<i32>} : memref<8x256xf32, #tpu.memory_space<vmem>>, vector<8x256xf32>,
    %c1_i32 = arith.constant 1 : i32
    %135 = arith.cmpi eq, %arg0, %c1_i32 : i32
    %136 = arith.extui %135 : i1 to i32
    %c0_i32_43 = arith.constant 0 : i32
    %137 = arith.cmpi ne, %136, %c0_i32_43 : i32
    scf.if %137 {
      %c0_44 = arith.constant 0 : index
      %c0_45 = arith.constant 0 : index
      %138 = vector.load %arg12[%c0_44, %c0_45] : memref<8x256xf32, #tpu.memory_space<vmem>>, vector<8x256xf32>
      %139 = vector.extract_strided_slice %138 {offsets = [0, 0], sizes = [8, 128], strides = [1, 1]} : vector<8x256xf32> to vector<8x128xf32>
      %140 = vector.extract_strided_slice %138 {offsets = [0, 128], sizes = [8, 32], strides = [1, 1]} : vector<8x256xf32> to vector<8x32xf32>
      %141 = arith.mulf %139, %139 : vector<8x128xf32>
      %142 = vector.extract_strided_slice %140 {offsets = [0, 0], sizes = [8, 8], strides = [1, 1]} : vector<8x32xf32> to vector<8x8xf32>
      %143 = arith.truncf %142 : vector<8x8xf32> to vector<8x8xbf16>
      %c0_46 = arith.constant 0 : index
      %c0_47 = arith.constant 0 : index
      %144 = vector.load %arg8[%c0_46, %c0_47] : memref<32x128xbf16, #tpu.memory_space<vmem>>, vector<8x128xbf16>
      %cst_48 = arith.constant dense<0.000000e+00> : vector<8x128xf32>
      %145 = tpu.matmul %143, %144, %cst_48 {dimension_numbers = #tpu.dot_dimension_numbers<[1], [0], [0], [1], [0, 0, 1, 1], [], []>} : vector<8x8xbf16>, vector<8x128xbf16>, vector<8x128xf32> -> vector<8x128xf32>
      %146 = vector.extract_strided_slice %6 {offsets = [0, 0], sizes = [8, 1], strides = [1, 1]} : vector<8x4xf32> to vector<8x1xf32>
      %147 = vector.broadcast %146 : vector<8x1xf32> to vector<8x128xf32>
      %148 = arith.mulf %145, %147 : vector<8x128xf32>
      %149 = vector.extract_strided_slice %5 {offsets = [0, 0], sizes = [8, 1], strides = [1, 1]} : vector<8x4xf32> to vector<8x1xf32>
      %150 = vector.broadcast %149 : vector<8x1xf32> to vector<8x128xf32>
      %151 = arith.mulf %150, %141 : vector<8x128xf32>
      %cst_49 = arith.constant dense<0.000000e+00> : vector<128xf32>
      %152 = vector.multi_reduction <add>, %151, %cst_49 [0] : vector<8x128xf32> to vector<128xf32>
      %153 = vector.shape_cast %152 : vector<128xf32> to vector<1x128xf32>
      %154 = arith.mulf %148, %148 : vector<8x128xf32>
      %cst_50 = arith.constant dense<0.000000e+00> : vector<128xf32>
      %155 = vector.multi_reduction <add>, %154, %cst_50 [0] : vector<8x128xf32> to vector<128xf32>
      %156 = vector.shape_cast %155 : vector<128xf32> to vector<1x128xf32>
      %157 = math.sqrt %156 : vector<1x128xf32>
      %cst_51 = arith.constant 9.99999993E-9 : f32
      %158 = vector.broadcast %cst_51 : f32 to vector<1x128xf32>
      %159 = arith.addf %157, %158 : vector<1x128xf32>
      %160 = tpu.reciprocal %159 {approx = true} : vector<1x128xf32> -> vector<1x128xf32>
      %161 = math.sqrt %153 : vector<1x128xf32>
      %cst_52 = arith.constant 1.000000e-01 : f32
      %162 = vector.broadcast %cst_52 : f32 to vector<1x128xf32>
      %163 = arith.mulf %162, %161 : vector<1x128xf32>
      %164 = arith.mulf %163, %160 : vector<1x128xf32>
      %165 = vector.broadcast %164 : vector<1x128xf32> to vector<8x128xf32>
      %166 = arith.mulf %165, %148 : vector<8x128xf32>
      %167 = arith.addf %139, %166 : vector<8x128xf32>
      %168 = vector.extract_strided_slice %140 {offsets = [0, 8], sizes = [8, 8], strides = [1, 1]} : vector<8x32xf32> to vector<8x8xf32>
      %169 = arith.truncf %168 : vector<8x8xf32> to vector<8x8xbf16>
      %c8 = arith.constant 8 : index
      %c0_53 = arith.constant 0 : index
      %170 = vector.load %arg8[%c8, %c0_53] : memref<32x128xbf16, #tpu.memory_space<vmem>>, vector<8x128xbf16>
      %cst_54 = arith.constant dense<0.000000e+00> : vector<8x128xf32>
      %171 = tpu.matmul %169, %170, %cst_54 {dimension_numbers = #tpu.dot_dimension_numbers<[1], [0], [0], [1], [0, 0, 1, 1], [], []>} : vector<8x8xbf16>, vector<8x128xbf16>, vector<8x128xf32> -> vector<8x128xf32>
      %172 = vector.extract_strided_slice %6 {offsets = [0, 1], sizes = [8, 1], strides = [1, 1]} : vector<8x4xf32> to vector<8x1xf32>
      %173 = vector.broadcast %172 : vector<8x1xf32> to vector<8x128xf32>
      %174 = arith.mulf %171, %173 : vector<8x128xf32>
      %175 = vector.extract_strided_slice %5 {offsets = [0, 1], sizes = [8, 1], strides = [1, 1]} : vector<8x4xf32> to vector<8x1xf32>
      %176 = vector.broadcast %175 : vector<8x1xf32> to vector<8x128xf32>
      %177 = arith.mulf %176, %141 : vector<8x128xf32>
      %cst_55 = arith.constant dense<0.000000e+00> : vector<128xf32>
      %178 = vector.multi_reduction <add>, %177, %cst_55 [0] : vector<8x128xf32> to vector<128xf32>
      %179 = vector.shape_cast %178 : vector<128xf32> to vector<1x128xf32>
      %180 = arith.mulf %174, %174 : vector<8x128xf32>
      %cst_56 = arith.constant dense<0.000000e+00> : vector<128xf32>
      %181 = vector.multi_reduction <add>, %180, %cst_56 [0] : vector<8x128xf32> to vector<128xf32>
      %182 = vector.shape_cast %181 : vector<128xf32> to vector<1x128xf32>
      %183 = math.sqrt %182 : vector<1x128xf32>
      %cst_57 = arith.constant 9.99999993E-9 : f32
      %184 = vector.broadcast %cst_57 : f32 to vector<1x128xf32>
      %185 = arith.addf %183, %184 : vector<1x128xf32>
      %186 = tpu.reciprocal %185 {approx = true} : vector<1x128xf32> -> vector<1x128xf32>
      %187 = math.sqrt %179 : vector<1x128xf32>
      %cst_58 = arith.constant 1.000000e-01 : f32
      %188 = vector.broadcast %cst_58 : f32 to vector<1x128xf32>
      %189 = arith.mulf %188, %187 : vector<1x128xf32>
      %190 = arith.mulf %189, %186 : vector<1x128xf32>
      %191 = vector.broadcast %190 : vector<1x128xf32> to vector<8x128xf32>
      %192 = arith.mulf %191, %174 : vector<8x128xf32>
      %193 = arith.addf %167, %192 : vector<8x128xf32>
      %194 = vector.extract_strided_slice %140 {offsets = [0, 16], sizes = [8, 8], strides = [1, 1]} : vector<8x32xf32> to vector<8x8xf32>
      %195 = arith.truncf %194 : vector<8x8xf32> to vector<8x8xbf16>
      %c16_59 = arith.constant 16 : index
      %c0_60 = arith.constant 0 : index
      %196 = vector.load %arg8[%c16_59, %c0_60] : memref<32x128xbf16, #tpu.memory_space<vmem>>, vector<8x128xbf16>
      %cst_61 = arith.constant dense<0.000000e+00> : vector<8x128xf32>
      %197 = tpu.matmul %195, %196, %cst_61 {dimension_numbers = #tpu.dot_dimension_numbers<[1], [0], [0], [1], [0, 0, 1, 1], [], []>} : vector<8x8xbf16>, vector<8x128xbf16>, vector<8x128xf32> -> vector<8x128xf32>
      %198 = vector.extract_strided_slice %6 {offsets = [0, 2], sizes = [8, 1], strides = [1, 1]} : vector<8x4xf32> to vector<8x1xf32>
      %199 = vector.broadcast %198 : vector<8x1xf32> to vector<8x128xf32>
      %200 = arith.mulf %197, %199 : vector<8x128xf32>
      %201 = vector.extract_strided_slice %5 {offsets = [0, 2], sizes = [8, 1], strides = [1, 1]} : vector<8x4xf32> to vector<8x1xf32>
      %202 = vector.broadcast %201 : vector<8x1xf32> to vector<8x128xf32>
      %203 = arith.mulf %202, %141 : vector<8x128xf32>
      %cst_62 = arith.constant dense<0.000000e+00> : vector<128xf32>
      %204 = vector.multi_reduction <add>, %203, %cst_62 [0] : vector<8x128xf32> to vector<128xf32>
      %205 = vector.shape_cast %204 : vector<128xf32> to vector<1x128xf32>
      %206 = arith.mulf %200, %200 : vector<8x128xf32>
      %cst_63 = arith.constant dense<0.000000e+00> : vector<128xf32>
      %207 = vector.multi_reduction <add>, %206, %cst_63 [0] : vector<8x128xf32> to vector<128xf32>
      %208 = vector.shape_cast %207 : vector<128xf32> to vector<1x128xf32>
      %209 = math.sqrt %208 : vector<1x128xf32>
      %cst_64 = arith.constant 9.99999993E-9 : f32
      %210 = vector.broadcast %cst_64 : f32 to vector<1x128xf32>
      %211 = arith.addf %209, %210 : vector<1x128xf32>
      %212 = tpu.reciprocal %211 {approx = true} : vector<1x128xf32> -> vector<1x128xf32>
      %213 = math.sqrt %205 : vector<1x128xf32>
      %cst_65 = arith.constant 1.000000e-01 : f32
      %214 = vector.broadcast %cst_65 : f32 to vector<1x128xf32>
      %215 = arith.mulf %214, %213 : vector<1x128xf32>
      %216 = arith.mulf %215, %212 : vector<1x128xf32>
      %217 = vector.broadcast %216 : vector<1x128xf32> to vector<8x128xf32>
      %218 = arith.mulf %217, %200 : vector<8x128xf32>
      %219 = arith.addf %193, %218 : vector<8x128xf32>
      %220 = vector.extract_strided_slice %140 {offsets = [0, 24], sizes = [8, 8], strides = [1, 1]} : vector<8x32xf32> to vector<8x8xf32>
      %221 = arith.truncf %220 : vector<8x8xf32> to vector<8x8xbf16>
      %c24 = arith.constant 24 : index
      %c0_66 = arith.constant 0 : index
      %222 = vector.load %arg8[%c24, %c0_66] : memref<32x128xbf16, #tpu.memory_space<vmem>>, vector<8x128xbf16>
      %cst_67 = arith.constant dense<0.000000e+00> : vector<8x128xf32>
      %223 = tpu.matmul %221, %222, %cst_67 {dimension_numbers = #tpu.dot_dimension_numbers<[1], [0], [0], [1], [0, 0, 1, 1], [], []>} : vector<8x8xbf16>, vector<8x128xbf16>, vector<8x128xf32> -> vector<8x128xf32>
      %224 = vector.extract_strided_slice %6 {offsets = [0, 3], sizes = [8, 1], strides = [1, 1]} : vector<8x4xf32> to vector<8x1xf32>
      %225 = vector.broadcast %224 : vector<8x1xf32> to vector<8x128xf32>
      %226 = arith.mulf %223, %225 : vector<8x128xf32>
      %227 = vector.extract_strided_slice %5 {offsets = [0, 3], sizes = [8, 1], strides = [1, 1]} : vector<8x4xf32> to vector<8x1xf32>
      %228 = vector.broadcast %227 : vector<8x1xf32> to vector<8x128xf32>
      %229 = arith.mulf %228, %141 : vector<8x128xf32>
      %cst_68 = arith.constant dense<0.000000e+00> : vector<128xf32>
      %230 = vector.multi_reduction <add>, %229, %cst_68 [0] : vector<8x128xf32> to vector<128xf32>
      %231 = vector.shape_cast %230 : vector<128xf32> to vector<1x128xf32>
      %232 = arith.mulf %226, %226 : vector<8x128xf32>
      %cst_69 = arith.constant dense<0.000000e+00> : vector<128xf32>
      %233 = vector.multi_reduction <add>, %232, %cst_69 [0] : vector<8x128xf32> to vector<128xf32>
      %234 = vector.shape_cast %233 : vector<128xf32> to vector<1x128xf32>
      %235 = math.sqrt %234 : vector<1x128xf32>
      %cst_70 = arith.constant 9.99999993E-9 : f32
      %236 = vector.broadcast %cst_70 : f32 to vector<1x128xf32>
      %237 = arith.addf %235, %236 : vector<1x128xf32>
      %238 = tpu.reciprocal %237 {approx = true} : vector<1x128xf32> -> vector<1x128xf32>
      %239 = math.sqrt %231 : vector<1x128xf32>
      %cst_71 = arith.constant 1.000000e-01 : f32
      %240 = vector.broadcast %cst_71 : f32 to vector<1x128xf32>
      %241 = arith.mulf %240, %239 : vector<1x128xf32>
      %242 = arith.mulf %241, %238 : vector<1x128xf32>
      %243 = vector.broadcast %242 : vector<1x128xf32> to vector<8x128xf32>
      %244 = arith.mulf %243, %226 : vector<8x128xf32>
      %245 = arith.addf %219, %244 : vector<8x128xf32>
      %c0_72 = arith.constant 0 : index
      %c0_73 = arith.constant 0 : index
      %246 = vector.load %arg9[%c0_72, %c0_73] : memref<8x128xf32, #tpu.memory_space<vmem>>, vector<8x128xf32>
      tpu.vector_store %arg9[%c0_72, %c0_73], %245 {strides = array<i32>} : memref<8x128xf32, #tpu.memory_space<vmem>>, vector<8x128xf32>,
    } else {
    }
    return
  }
  func.func @transform_0(%arg0: i32) -> (i32, i32) {
    %c0_i32 = arith.constant 0 : i32
    %c0_i32_0 = arith.constant 0 : i32
    %c0_i32_1 = arith.constant 0 : i32
    return %c0_i32, %c0_i32_0 : i32, i32
  }
  func.func @transform_1(%arg0: i32) -> (i32, i32) {
    %c0_i32 = arith.constant 0 : i32
    %c0_i32_0 = arith.constant 0 : i32
    %c0_i32_1 = arith.constant 0 : i32
    return %c0_i32, %c0_i32_0 : i32, i32
  }
  func.func @transform_2(%arg0: i32) -> (i32, i32) {
    %c0_i32 = arith.constant 0 : i32
    %c0_i32_0 = arith.constant 0 : i32
    %c0_i32_1 = arith.constant 0 : i32
    return %c0_i32, %c0_i32_0 : i32, i32
  }
  func.func @transform_3(%arg0: i32) -> (i32, i32) {
    %c0_i32 = arith.constant 0 : i32
    %c0_i32_0 = arith.constant 0 : i32
    %c0_i32_1 = arith.constant 0 : i32
    return %c0_i32, %c0_i32_0 : i32, i32
  }
  func.func @transform_4(%arg0: i32) -> (i32, i32, i32) {
    %c0_i32 = arith.constant 0 : i32
    %c0_i32_0 = arith.constant 0 : i32
    %c0_i32_1 = arith.constant 0 : i32
    return %arg0, %c0_i32, %c0_i32_0 : i32, i32, i32
  }
  func.func @transform_5(%arg0: i32) -> (i32, i32) {
    %c0_i32 = arith.constant 0 : i32
    %c0_i32_0 = arith.constant 0 : i32
    return %arg0, %c0_i32 : i32, i32
  }
  func.func @transform_6(%arg0: i32) -> (i32, i32) {
    %c0_i32 = arith.constant 0 : i32
    %c0_i32_0 = arith.constant 0 : i32
    return %arg0, %c0_i32 : i32, i32
  }
  func.func @transform_7(%arg0: i32) -> (i32, i32) {
    %c0_i32 = arith.constant 0 : i32
    %c0_i32_0 = arith.constant 0 : i32
    %c0_i32_1 = arith.constant 0 : i32
    return %c0_i32, %c0_i32_0 : i32, i32
  }
  func.func @transform_8(%arg0: i32) -> (i32, i32) {
    %c0_i32 = arith.constant 0 : i32
    %c0_i32_0 = arith.constant 0 : i32
    %c0_i32_1 = arith.constant 0 : i32
    return %c0_i32, %c0_i32_0 : i32, i32
  }
}

</mosaic_0001>

<llo_original>
// kernel: tpu_custom_call.1
$region0: #{tpu_custom_call.1}
  #allocation0 [shape = 'u32[]', space=smem, size = 0x4, offset = 0x4, fixed_abs, tag = 'smem constant byte address 0x4 - core index']
  #allocation1 [shape = 'u32[144,128]{1,0:T(1,128)}', space=vmem, size = 0x12000, scoped, tag = 'internal scratch']
  #allocation2 [shape = 'bf16[8,128]{1,0:T(8,128)(2,1)}', space=vmem, size = 0x800, scoped, tag = 'scratch operand']
  #allocation3 [shape = 'f32[8,64]{1,0:T(8,128)}', space=vmem, size = 0x1000, scoped, tag = 'scratch operand']
  #allocation4 [shape = 'f32[8,256]{1,0:T(8,128)}', space=vmem, size = 0x2000, scoped, tag = 'scratch operand']
  %s0 = inlined_call_operand.vmem [shape: f32[8,128], index: 0, kind: input, shape index: {}]
  %s1 = inlined_call_operand.vmem [shape: f32[8,4], index: 1, kind: input, shape index: {}]
  %s2 = inlined_call_operand.vmem [shape: f32[4,128], index: 2, kind: input, shape index: {}]
  %s3 = inlined_call_operand.vmem [shape: bf16[128,64], index: 3, kind: input, shape index: {}]
  %s4 = inlined_call_operand.hbm [shape: bf16[2,128,512], index: 4, kind: input, shape index: {}]
  %s5 = inlined_call_operand.hbm [shape: bf16[128,512], index: 5, kind: input, shape index: {}]
  %s6 = inlined_call_operand.hbm [shape: bf16[512,256], index: 6, kind: input, shape index: {}]
  %s7 = inlined_call_operand.vmem [shape: bf16[32,128], index: 7, kind: input, shape index: {}]
  %s8 = inlined_call_operand.hbm [shape: f32[8,128], index: 8, kind: output, shape index: {}]
  %s9 = sld [smem:[#allocation0]]
  $region85: #{tpu_custom_call.1} parent=0
    _
  %s11 = ssub.s32 1, %s9
  %s12 = scalar_select 0, %s11, %s9
  $region1: #{tpu_custom_call.1} parent=0
    #allocation5 [shape = 'u8[262144]{0}', space=vmem, size = 0x40000, scoped, tag = 'input window, operand 4']
    #allocation6 [shape = 's32[2]{0}', space=sflag, size = 0x8, scoped, tag = 'scoped memory for tpu_custom_call.1']
    #allocation7 [shape = 's32[2]{0}', space=sflag, size = 0x8, scoped, tag = 'scoped memory for tpu_custom_call.1']
    #allocation8 [shape = 'u8[131072]{0}', space=vmem, size = 0x20000, scoped, tag = 'input window, operand 5']
    #allocation9 [shape = 's32[2]{0}', space=sflag, size = 0x8, scoped, tag = 'scoped memory for tpu_custom_call.1']
    #allocation10 [shape = 'u8[262144]{0}', space=vmem, size = 0x40000, scoped, tag = 'input window, operand 6']
    #allocation11 [shape = 'u8[4096]{0}', space=vmem, size = 0x1000, scoped, tag = 'output window, operand 0, single buffered']
    %13 = vsyncpa [#allocation6], 0
    %s14 = scalar_lea.sflag [#allocation6], 1
    %15 = vsyncpa %s14, 0
    %16 = vsyncpa [#allocation9], 0
    %s17 = scalar_lea.sflag [#allocation9], 1
    %18 = vsyncpa %s17, 0
    %19 = vsyncpa [#allocation7], 0
    loop: start=0, step=1, limit=4
    $region2: #{tpu_custom_call.1} parent=1 // loop_pre_header
      _
    $region3: #{tpu_custom_call.1} parent=1 // loop_header
      %s21 = sphi 0, %s25
      %p22 = scmp.ge.s32.totalorder %s21, 4
      %s29 = sphi 0, %s29
      %s31 = sphi 0, %s29
      %s32 = sphi 0, %s31
      %s46 = sphi 0, %s32
      %s50 = sphi 0, %s50
      %s52 = sphi 0, %s50
      %s53 = sphi 0, %s52
      %s67 = sphi 0, %s53
      %s71 = sphi 0, %s71
      %s73 = sphi 0, %s71
      %s74 = sphi 0, %s73
      %s88 = sphi 0, %s74
      %s92 = sphi 0, %s92
      %s94 = sphi 0, %s92
      %s95 = sphi 0, %s94
      %s109 = sphi 0, %s95
      %s115 = sphi 0, %s117
      %s118 = sphi 0, %s115
      %s119 = sphi 0, %s118
      %s135 = sphi 0, %s119
      %s141 = sphi 0, %s143
      %s144 = sphi 0, %s141
      %s145 = sphi 0, %s144
      %s161 = sphi 0, %s145
      %s167 = sphi 0, %s169
      %s170 = sphi 0, %s167
      %s171 = sphi 0, %s170
      %s187 = sphi 0, %s171
      %s191 = sphi 0, %s191
      %s193 = sphi 0, %s191
      %s194 = sphi 0, %s193
      %s208 = sphi 0, %s194
      %s212 = sphi 0, %s212
      %s214 = sphi 0, %s212
      %s215 = sphi 0, %s214
      %s229 = sphi 0, %s215
    $region4: #{tpu_custom_call.1} parent=1 // loop_header_branch
      %24 = sbr.rel (%p22) target = $region8
    $region5: #{tpu_custom_call.1} parent=1 // loop_body
      %s26 = ssub.s32 %s21, 1
      %s27 = ssub.s32 %s21, 2
      %s28 = sadd.s32 %s21, 1
      %s30 = sadd.s32 %s29, 1
      %p33 = scmp.eq.s32.totalorder %s21, 1
      %p34 = scmp.ne.s32.totalorder %s29, %s31
      %p35 = scmp.eq.s32.totalorder %s21, 0
      %p36 = por %p34, %p35
      %p37 = scmp.ne.s32.totalorder %s29, %s31
      %p38 = scmp.eq.s32.totalorder %s26, 1
      %p39 = por %p37, %p38
      %p40 = scmp.ne.s32.totalorder %s31, %s32
      %p41 = scmp.eq.s32.totalorder %s26, 0
      %p42 = por %p40, %p41
      %p43 = scmp.ne.s32.totalorder %s31, %s32
      %p44 = scmp.eq.s32.totalorder %s27, 1
      %p45 = por %p43, %p44
      %p47 = scmp.ne.s32.totalorder %s32, %s46
      %p48 = scmp.eq.s32.totalorder %s27, 0
      %p49 = por %p47, %p48
      %s51 = sadd.s32 %s50, 1
      %p54 = scmp.eq.s32.totalorder %s21, 1
      %p55 = scmp.ne.s32.totalorder %s50, %s52
      %p56 = scmp.eq.s32.totalorder %s21, 0
      %p57 = por %p55, %p56
      %p58 = scmp.ne.s32.totalorder %s50, %s52
      %p59 = scmp.eq.s32.totalorder %s26, 1
      %p60 = por %p58, %p59
      %p61 = scmp.ne.s32.totalorder %s52, %s53
      %p62 = scmp.eq.s32.totalorder %s26, 0
      %p63 = por %p61, %p62
      %p64 = scmp.ne.s32.totalorder %s52, %s53
      %p65 = scmp.eq.s32.totalorder %s27, 1
      %p66 = por %p64, %p65
      %p68 = scmp.ne.s32.totalorder %s53, %s67
      %p69 = scmp.eq.s32.totalorder %s27, 0
      %p70 = por %p68, %p69
      %s72 = sadd.s32 %s71, 1
      %p75 = scmp.eq.s32.totalorder %s21, 1
      %p76 = scmp.ne.s32.totalorder %s71, %s73
      %p77 = scmp.eq.s32.totalorder %s21, 0
      %p78 = por %p76, %p77
      %p79 = scmp.ne.s32.totalorder %s71, %s73
      %p80 = scmp.eq.s32.totalorder %s26, 1
      %p81 = por %p79, %p80
      %p82 = scmp.ne.s32.totalorder %s73, %s74
      %p83 = scmp.eq.s32.totalorder %s26, 0
      %p84 = por %p82, %p83
      %p85 = scmp.ne.s32.totalorder %s73, %s74
      %p86 = scmp.eq.s32.totalorder %s27, 1
      %p87 = por %p85, %p86
      %p89 = scmp.ne.s32.totalorder %s74, %s88
      %p90 = scmp.eq.s32.totalorder %s27, 0
      %p91 = por %p89, %p90
      %s93 = sadd.s32 %s92, 1
      %p96 = scmp.eq.s32.totalorder %s21, 1
      %p97 = scmp.ne.s32.totalorder %s92, %s94
      %p98 = scmp.eq.s32.totalorder %s21, 0
      %p99 = por %p97, %p98
      %p100 = scmp.ne.s32.totalorder %s92, %s94
      %p101 = scmp.eq.s32.totalorder %s26, 1
      %p102 = por %p100, %p101
      %p103 = scmp.ne.s32.totalorder %s94, %s95
      %p104 = scmp.eq.s32.totalorder %s26, 0
      %p105 = por %p103, %p104
      %p106 = scmp.ne.s32.totalorder %s94, %s95
      %p107 = scmp.eq.s32.totalorder %s27, 1
      %p108 = por %p106, %p107
      %p110 = scmp.ne.s32.totalorder %s95, %s109
      %p111 = scmp.eq.s32.totalorder %s27, 0
      %p112 = por %p110, %p111
      %s113 = ssub.s32 %s21, %s28
      %p114 = scmp.eq.s32.totalorder %s113, 0
      %s116 = sadd.s32 %s115, 1
      %s117 = scalar_select %p114, %s115, %s116
      %p120 = pneg %p114
      %p121 = scmp.eq.s32.totalorder %s21, 1
      %p122 = por %p120, %p121
      %p123 = scmp.ne.s32.totalorder %s115, %s118
      %p124 = scmp.eq.s32.totalorder %s21, 0
      %p125 = por %p123, %p124
      %p126 = scmp.ne.s32.totalorder %s115, %s118
      %p127 = scmp.eq.s32.totalorder %s26, 1
      %p128 = por %p126, %p127
      %p129 = scmp.ne.s32.totalorder %s118, %s119
      %p130 = scmp.eq.s32.totalorder %s26, 0
      %p131 = por %p129, %p130
      %p132 = scmp.ne.s32.totalorder %s118, %s119
      %p133 = scmp.eq.s32.totalorder %s27, 1
      %p134 = por %p132, %p133
      %p136 = scmp.ne.s32.totalorder %s119, %s135
      %p137 = scmp.eq.s32.totalorder %s27, 0
      %p138 = por %p136, %p137
      %s139 = ssub.s32 %s21, %s28
      %p140 = scmp.eq.s32.totalorder %s139, 0
      %s142 = sadd.s32 %s141, 1
      %s143 = scalar_select %p140, %s141, %s142
      %p146 = pneg %p140
      %p147 = scmp.eq.s32.totalorder %s21, 1
      %p148 = por %p146, %p147
      %p149 = scmp.ne.s32.totalorder %s141, %s144
      %p150 = scmp.eq.s32.totalorder %s21, 0
      %p151 = por %p149, %p150
      %p152 = scmp.ne.s32.totalorder %s141, %s144
      %p153 = scmp.eq.s32.totalorder %s26, 1
      %p154 = por %p152, %p153
      %p155 = scmp.ne.s32.totalorder %s144, %s145
      %p156 = scmp.eq.s32.totalorder %s26, 0
      %p157 = por %p155, %p156
      %p158 = scmp.ne.s32.totalorder %s144, %s145
      %p159 = scmp.eq.s32.totalorder %s27, 1
      %p160 = por %p158, %p159
      %p162 = scmp.ne.s32.totalorder %s145, %s161
      %p163 = scmp.eq.s32.totalorder %s27, 0
      %p164 = por %p162, %p163
      %s165 = ssub.s32 %s21, %s28
      %p166 = scmp.eq.s32.totalorder %s165, 0
      %s168 = sadd.s32 %s167, 1
      %s169 = scalar_select %p166, %s167, %s168
      %p172 = pneg %p166
      %p173 = scmp.eq.s32.totalorder %s21, 1
      %p174 = por %p172, %p173
      %p175 = scmp.ne.s32.totalorder %s167, %s170
      %p176 = scmp.eq.s32.totalorder %s21, 0
      %p177 = por %p175, %p176
      %p178 = scmp.ne.s32.totalorder %s167, %s170
      %p179 = scmp.eq.s32.totalorder %s26, 1
      %p180 = por %p178, %p179
      %p181 = scmp.ne.s32.totalorder %s170, %s171
      %p182 = scmp.eq.s32.totalorder %s26, 0
      %p183 = por %p181, %p182
      %p184 = scmp.ne.s32.totalorder %s170, %s171
      %p185 = scmp.eq.s32.totalorder %s27, 1
      %p186 = por %p184, %p185
      %p188 = scmp.ne.s32.totalorder %s171, %s187
      %p189 = scmp.eq.s32.totalorder %s27, 0
      %p190 = por %p188, %p189
      %s192 = sadd.s32 %s191, 1
      %p195 = scmp.eq.s32.totalorder %s21, 1
      %p196 = scmp.ne.s32.totalorder %s191, %s193
      %p197 = scmp.eq.s32.totalorder %s21, 0
      %p198 = por %p196, %p197
      %p199 = scmp.ne.s32.totalorder %s191, %s193
      %p200 = scmp.eq.s32.totalorder %s26, 1
      %p201 = por %p199, %p200
      %p202 = scmp.ne.s32.totalorder %s193, %s194
      %p203 = scmp.eq.s32.totalorder %s26, 0
      %p204 = por %p202, %p203
      %p205 = scmp.ne.s32.totalorder %s193, %s194
      %p206 = scmp.eq.s32.totalorder %s27, 1
      %p207 = por %p205, %p206
      %p209 = scmp.ne.s32.totalorder %s194, %s208
      %p210 = scmp.eq.s32.totalorder %s27, 0
      %p211 = por %p209, %p210
      %s213 = sadd.s32 %s212, 1
      %p216 = scmp.eq.s32.totalorder %s21, 1
      %p217 = scmp.ne.s32.totalorder %s212, %s214
      %p218 = scmp.eq.s32.totalorder %s21, 0
      %p219 = por %p217, %p218
      %p220 = scmp.ne.s32.totalorder %s212, %s214
      %p221 = scmp.eq.s32.totalorder %s26, 1
      %p222 = por %p220, %p221
      %p223 = scmp.ne.s32.totalorder %s214, %s215
      %p224 = scmp.eq.s32.totalorder %s26, 0
      %p225 = por %p223, %p224
      %p226 = scmp.ne.s32.totalorder %s214, %s215
      %p227 = scmp.eq.s32.totalorder %s27, 1
      %p228 = por %p226, %p227
      %p230 = scmp.ne.s32.totalorder %s215, %s229
      %p231 = scmp.eq.s32.totalorder %s27, 0
      %p232 = por %p230, %p231
      %p233 = scmp.le.s32.totalorder 1, %s21
      %p234 = scmp.lt.s32.totalorder %s21, 3
      %p235 = pnand %p233, %p234
      %p236 = pneg %p235
      // Predicated region
      $region9: #{tpu_custom_call.1} parent=5 // pred_check
        _
      $region10: #{tpu_custom_call.1} parent=5 // pred_check_branch
        %238 = sbr.rel (%p235) target = $region12
      $region11: #{tpu_custom_call.1} parent=5 // pred_region
        %s239 = ssub.s32 %s21, 1
        // Predicated region
        $region13: #{tpu_custom_call.1} parent=11 // pred_check
          %p240 = pneg %p42
        $region14: #{tpu_custom_call.1} parent=11 // pred_check_branch
          %242 = sbr.rel (%p240) target = $region16
        $region15: #{tpu_custom_call.1} parent=11 // pred_region
          _
        $region16: #{tpu_custom_call.1} parent=11 // pred_fallthru
          _
        // Predicated region
        $region17: #{tpu_custom_call.1} parent=11 // pred_check
          %p243 = pneg %p63
        $region18: #{tpu_custom_call.1} parent=11 // pred_check_branch
          %245 = sbr.rel (%p243) target = $region20
        $region19: #{tpu_custom_call.1} parent=11 // pred_region
          _
        $region20: #{tpu_custom_call.1} parent=11 // pred_fallthru
          _
        // Predicated region
        $region21: #{tpu_custom_call.1} parent=11 // pred_check
          %p246 = pneg %p84
        $region22: #{tpu_custom_call.1} parent=11 // pred_check_branch
          %248 = sbr.rel (%p246) target = $region24
        $region23: #{tpu_custom_call.1} parent=11 // pred_region
          _
        $region24: #{tpu_custom_call.1} parent=11 // pred_fallthru
          _
        // Predicated region
        $region25: #{tpu_custom_call.1} parent=11 // pred_check
          %p249 = pneg %p105
        $region26: #{tpu_custom_call.1} parent=11 // pred_check_branch
          %251 = sbr.rel (%p249) target = $region28
        $region27: #{tpu_custom_call.1} parent=11 // pred_region
          _
        $region28: #{tpu_custom_call.1} parent=11 // pred_fallthru
          _
        // Predicated region
        $region29: #{tpu_custom_call.1} parent=11 // pred_check
          %p252 = pneg %p204
        $region30: #{tpu_custom_call.1} parent=11 // pred_check_branch
          %254 = sbr.rel (%p252) target = $region32
        $region31: #{tpu_custom_call.1} parent=11 // pred_region
          _
        $region32: #{tpu_custom_call.1} parent=11 // pred_fallthru
          _
      $region12: #{tpu_custom_call.1} parent=5 // pred_fallthru
        _
      %p255 = scmp.lt.s32.totalorder %s21, 2
      // Predicated region
      $region33: #{tpu_custom_call.1} parent=5 // pred_check
        %p256 = pneg %p255
      $region34: #{tpu_custom_call.1} parent=5 // pred_check_branch
        %258 = sbr.rel (%p256) target = $region36
      $region35: #{tpu_custom_call.1} parent=5 // pred_region
        // Predicated region
        $region37: #{tpu_custom_call.1} parent=35 // pred_check
          %p259 = pneg %p125
        $region38: #{tpu_custom_call.1} parent=35 // pred_check_branch
          %261 = sbr.rel (%p259) target = $region40
        $region39: #{tpu_custom_call.1} parent=35 // pred_region
          %s262 = sand.u32 %s115, 1
          %s263 = scalar_lea.sflag [#allocation6], %s262
          %s264 = sand.u32 %s115, 1
          %s265 = smul.addr %s264, 256
          %s266 = scalar_lea.vmem [#allocation5], %s265
          %s268 = ssub.s32 4096, 4096
          %269 = vsyncadd %s263, %s268
          %s270 = smul.addr %s21, 64
          %s271 = smul.addr %s270, 64
          %s272 = scalar_lea.hbm %s4, %s271
          %s273 = sshll.u32 %s266, 4
          %s274 = int_to_ptr.vmem [resolvable:$true] %s273
          %279 = dma.hbm_to_vmem [thread:$0]  %s272, 4096, %s274, %s263, 256, 256, 16
        $region40: #{tpu_custom_call.1} parent=35 // pred_fallthru
          _
        // Predicated region
        $region41: #{tpu_custom_call.1} parent=35 // pred_check
          %p280 = pneg %p151
        $region42: #{tpu_custom_call.1} parent=35 // pred_check_branch
          %282 = sbr.rel (%p280) target = $region44
        $region43: #{tpu_custom_call.1} parent=35 // pred_region
          %s283 = sand.u32 %s21, 1
          %s284 = scalar_lea.sflag [#allocation9], %s283
          %s285 = sand.u32 %s141, 1
          %s286 = smul.addr %s285, 128
          %s287 = scalar_lea.vmem [#allocation8], %s286
          %s288 = smul.u32 8, %s21
          %s290 = ssub.s32 2048, 2048
          %291 = vsyncadd %s284, %s290
          %s292 = smul.addr %s288, 4
          %s293 = smul.addr %s292, 64
          %s294 = scalar_lea.hbm %s5, %s293
          %s295 = sshll.u32 %s287, 4
          %s296 = int_to_ptr.vmem [resolvable:$true] %s295
          %301 = dma.hbm_to_vmem [thread:$0]  %s294, 2048, %s296, %s284, 256, 256, 16
        $region44: #{tpu_custom_call.1} parent=35 // pred_fallthru
          _
        // Predicated region
        $region45: #{tpu_custom_call.1} parent=35 // pred_check
          %p302 = pneg %p177
        $region46: #{tpu_custom_call.1} parent=35 // pred_check_branch
          %304 = sbr.rel (%p302) target = $region48
        $region47: #{tpu_custom_call.1} parent=35 // pred_region
          %s305 = sand.u32 %s21, 1
          %s306 = scalar_lea.sflag [#allocation9], %s305
          %s307 = sand.u32 %s167, 1
          %s308 = smul.addr %s307, 256
          %s309 = scalar_lea.vmem [#allocation10], %s308
          %s310 = smul.u32 32, %s21
          %s312 = ssub.s32 4096, 4096
          %313 = vsyncadd %s306, %s312
          %s314 = smul.addr %s310, 2
          %s315 = smul.addr %s314, 64
          %s316 = scalar_lea.hbm %s6, %s315
          %s317 = sshll.u32 %s309, 4
          %s318 = int_to_ptr.vmem [resolvable:$true] %s317
          %323 = dma.hbm_to_vmem [thread:$0]  %s316, 4096, %s318, %s306, 128, 128, 8
        $region48: #{tpu_custom_call.1} parent=35 // pred_fallthru
          _
      $region36: #{tpu_custom_call.1} parent=5 // pred_fallthru
        _
      %p324 = scmp.le.s32.totalorder 1, %s21
      %p325 = scmp.lt.s32.totalorder %s21, 3
      %p326 = pnand %p324, %p325
      %p327 = pneg %p326
      // Predicated region
      $region49: #{tpu_custom_call.1} parent=5 // pred_check
        _
      $region50: #{tpu_custom_call.1} parent=5 // pred_check_branch
        %329 = sbr.rel (%p326) target = $region52
      $region51: #{tpu_custom_call.1} parent=5 // pred_region
        %s330 = ssub.s32 %s21, 1
        %s331 = sand.u32 %s118, 1
        %s332 = scalar_lea.sflag [#allocation6], %s331
        %s333 = sand.u32 %s118, 1
        %s334 = smul.addr %s333, 256
        %s335 = scalar_lea.vmem [#allocation5], %s334
        // Predicated region
        $region53: #{tpu_custom_call.1} parent=51 // pred_check
          %p336 = pneg %p131
        $region54: #{tpu_custom_call.1} parent=51 // pred_check_branch
          %338 = sbr.rel (%p336) target = $region56
        $region55: #{tpu_custom_call.1} parent=51 // pred_region
          %339 = dma.done %s332, 4096
        $region56: #{tpu_custom_call.1} parent=51 // pred_fallthru
          _
        %s340 = sand.u32 %s26, 1
        %s341 = scalar_lea.sflag [#allocation9], %s340
        %s342 = sand.u32 %s144, 1
        %s343 = smul.addr %s342, 128
        %s344 = scalar_lea.vmem [#allocation8], %s343
        // Predicated region
        $region57: #{tpu_custom_call.1} parent=51 // pred_check
          %p345 = pneg %p157
        $region58: #{tpu_custom_call.1} parent=51 // pred_check_branch
          %347 = sbr.rel (%p345) target = $region60
        $region59: #{tpu_custom_call.1} parent=51 // pred_region
          %348 = dma.done %s341, 2048
        $region60: #{tpu_custom_call.1} parent=51 // pred_fallthru
          _
        %s349 = sand.u32 %s26, 1
        %s350 = scalar_lea.sflag [#allocation9], %s349
        %s351 = sand.u32 %s170, 1
        %s352 = smul.addr %s351, 256
        %s353 = scalar_lea.vmem [#allocation10], %s352
        // Predicated region
        $region61: #{tpu_custom_call.1} parent=51 // pred_check
          %p354 = pneg %p183
        $region62: #{tpu_custom_call.1} parent=51 // pred_check_branch
          %356 = sbr.rel (%p354) target = $region64
        $region63: #{tpu_custom_call.1} parent=51 // pred_region
          %357 = dma.done %s350, 4096
        $region64: #{tpu_custom_call.1} parent=51 // pred_fallthru
          _
        %p358 = pneg %p42
        %p359 = pneg %p39
        %p360 = pneg %p63
        %p361 = pneg %p60
        %p362 = pneg %p84
        %p363 = pneg %p81
        %p364 = pneg %p105
        %p365 = pneg %p102
        %s366 = sand.u32 %s118, 1
        %s367 = scalar_lea.sflag [#allocation6], %s366
        %s368 = sand.u32 %s118, 1
        %s369 = smul.addr %s368, 256
        %s370 = scalar_lea.vmem [#allocation5], %s369
        %p371 = pneg %p131
        %p372 = pneg %p128
        %s373 = sand.u32 %s26, 1
        %s374 = scalar_lea.sflag [#allocation9], %s373
        %s375 = sand.u32 %s144, 1
        %s376 = smul.addr %s375, 128
        %s377 = scalar_lea.vmem [#allocation8], %s376
        %p378 = pneg %p157
        %p379 = pneg %p154
        %s380 = sand.u32 %s26, 1
        %s381 = scalar_lea.sflag [#allocation9], %s380
        %s382 = sand.u32 %s170, 1
        %s383 = smul.addr %s382, 256
        %s384 = scalar_lea.vmem [#allocation10], %s383
        %p385 = pneg %p183
        %p386 = pneg %p180
        %p387 = pneg %p204
        %p388 = pneg %p201
        %p389 = pneg %p225
        %p390 = pneg %p222
        %s391 = smul.u32 8, %s26
        %s392 = smul.u32 32, %s26
        %v394 = vld [vmem:[%s1] sm:$0xff]
        %v395 = vand.u32 2147483647, %v394
        %vm396 = vcmp.gt.f32.partialorder %v395, 1e-06
        %v397 = vsel %vm396, 1, 0
        %v398 = vcvt.s32.f32 %v397
        %v399 = vmul.f32 %v394, %v398
        %p400 = scmp.eq.s32.totalorder %s26, 0
        // Predicated region
        $region65: #{tpu_custom_call.1} parent=51 // pred_check
          %p401 = pneg %p400
        $region66: #{tpu_custom_call.1} parent=51 // pred_check_branch
          %403 = sbr.rel (%p401) target = $region68
        $region67: #{tpu_custom_call.1} parent=51 // pred_region
          %v404 = vld [vmem:[%s0] sm:$0xff]
          %v405 = vld [vmem:[%s2] sm:$0xf]
          %407 = vset.pattern.permute.xlu0 0
          %408 = vperm.xlu0 %407, %v394
          %v409 = vpop.permute.xlu0 %408
          %v411 = vlaneseq
          %v412 = vshrl.u32 %v411, 7
          %v413 = vsub.s32 0, %v412
          %v414 = vrot.slane %v405, %v413
          %v415 = vmul.f32 %v409, %v414
          %v416 = vadd.f32 %v404, %v415
          %417 = vset.pattern.permute.xlu0 1
          %418 = vperm.xlu0 %417, %v394
          %v419 = vpop.permute.xlu0 %418
          %v421 = vlaneseq
          %v422 = vshrl.u32 %v421, 7
          %v423 = vsub.s32 1, %v422
          %v424 = vrot.slane %v405, %v423
          %v425 = vmul.f32 %v419, %v424
          %v426 = vadd.f32 %v416, %v425
          %427 = vset.pattern.permute.xlu0 2
          %428 = vperm.xlu0 %427, %v394
          %v429 = vpop.permute.xlu0 %428
          %v431 = vlaneseq
          %v432 = vshrl.u32 %v431, 7
          %v433 = vsub.s32 2, %v432
          %v434 = vrot.slane %v405, %v433
          %v435 = vmul.f32 %v429, %v434
          %v436 = vadd.f32 %v426, %v435
          %437 = vset.pattern.permute.xlu0 3
          %438 = vperm.xlu0 %437, %v394
          %v439 = vpop.permute.xlu0 %438
          %v441 = vlaneseq
          %v442 = vshrl.u32 %v441, 7
          %v443 = vsub.s32 3, %v442
          %v444 = vrot.slane %v405, %v443
          %v445 = vmul.f32 %v439, %v444
          %v446 = vadd.f32 %v436, %v445
          %v447 = vpack.c.bf16 %v446, %v446
          %448 = vst [vmem:[#allocation2] sm:$0xf] %v447
          %v449 = vld [vmem:[%s3] sm:$0xf]
          %v450 = vld [vmem:[%s3 + $0x4] sm:$0xf]
          %v451 = vld [vmem:[%s3 + $0x8] sm:$0xf]
          %v452 = vld [vmem:[%s3 + $0xc] sm:$0xf]
          %v453 = vld [vmem:[%s3 + $0x10] sm:$0xf]
          %v454 = vld [vmem:[%s3 + $0x14] sm:$0xf]
          %v455 = vld [vmem:[%s3 + $0x18] sm:$0xf]
          %v456 = vld [vmem:[%s3 + $0x1c] sm:$0xf]
          %v457 = vld [vmem:[%s3 + $0x20] sm:$0xf]
          %v458 = vld [vmem:[%s3 + $0x24] sm:$0xf]
          %v459 = vld [vmem:[%s3 + $0x28] sm:$0xf]
          %v460 = vld [vmem:[%s3 + $0x2c] sm:$0xf]
          %v461 = vld [vmem:[%s3 + $0x30] sm:$0xf]
          %v462 = vld [vmem:[%s3 + $0x34] sm:$0xf]
          %v463 = vld [vmem:[%s3 + $0x38] sm:$0xf]
          %v464 = vld [vmem:[%s3 + $0x3c] sm:$0xf]
          %v481 = vunpack.c.l.b16 %v449
          %v482 = vunpack.c.l.b16 %v450
          %v483 = vunpack.c.l.b16 %v451
          %v484 = vunpack.c.l.b16 %v452
          %v485 = vunpack.c.l.b16 %v453
          %v486 = vunpack.c.l.b16 %v454
          %v487 = vunpack.c.l.b16 %v455
          %v488 = vunpack.c.l.b16 %v456
          %v489 = vunpack.c.l.b16 %v457
          %v490 = vunpack.c.l.b16 %v458
          %v491 = vunpack.c.l.b16 %v459
          %v492 = vunpack.c.l.b16 %v460
          %v493 = vunpack.c.l.b16 %v461
          %v494 = vunpack.c.l.b16 %v462
          %v495 = vunpack.c.l.b16 %v463
          %v496 = vunpack.c.l.b16 %v464
          %v497 = vpack.c.b16 %v482, %v481
          %v498 = vpack.c.b16 %v484, %v483
          %v499 = vpack.c.b16 %v486, %v485
          %v500 = vpack.c.b16 %v488, %v487
          %v501 = vpack.c.b16 %v490, %v489
          %v502 = vpack.c.b16 %v492, %v491
          %v503 = vpack.c.b16 %v494, %v493
          %v504 = vpack.c.b16 %v496, %v495
          %513 = vmatprep.subr.bf16.mxu0 0
          %514 = vmatpush1.bf16.msra.mxu0 %v504
          %515 = vmatprep.subr.bf16.mxu0 0
          %516 = vmatpush1.bf16.msra.mxu0 %v503
          %517 = vmatprep.subr.bf16.mxu0 0
          %518 = vmatpush1.bf16.msra.mxu0 %v502
          %519 = vmatprep.subr.bf16.mxu0 0
          %520 = vmatpush1.bf16.msra.mxu0 %v501
          %521 = vmatprep.subr.bf16.mxu0 0
          %522 = vmatpush1.bf16.msra.mxu0 %v500
          %523 = vmatprep.subr.bf16.mxu0 0
          %524 = vmatpush1.bf16.msra.mxu0 %v499
          %525 = vmatprep.subr.bf16.mxu0 0
          %526 = vmatpush1.bf16.msra.mxu0 %v498
          %527 = vmatprep.subr.bf16.mxu0 0
          %528 = vmatpush1.bf16.msra.mxu0 %v497
          %529 = vmatprep.subr.bf16.mxu0 0
          %530 = vmatpush2.bf16.msra.mxu0 0
          %531 = vmatprep.subr.bf16.mxu0 0
          %532 = vmatpush2.bf16.msra.mxu0 0
          %533 = vmatprep.subr.bf16.mxu0 0
          %534 = vmatpush2.bf16.msra.mxu0 0
          %535 = vmatprep.subr.bf16.mxu0 0
          %536 = vmatpush2.bf16.msra.mxu0 0
          %537 = vmatprep.subr.bf16.mxu0 0
          %538 = vmatpush2.bf16.msra.mxu0 0
          %539 = vmatprep.subr.bf16.mxu0 0
          %540 = vmatpush2.bf16.msra.mxu0 0
          %541 = vmatprep.subr.bf16.mxu0 0
          %542 = vmatpush2.bf16.msra.mxu0 0
          %543 = vmatprep.subr.bf16.mxu0 0
          %544 = vmatpush2.bf16.msra.mxu0 0
          %545 = vmatprep.mubr.bf16.mxu0 0
          %546 = vmatmul.mubr.bf16.gmra.mxu0 %v447
          %v547 = vpop.f32.mrf.mxu0
          %v548 = vadd.f32 0.0, %v547
          %v549 = vpop.f32.mrf.mxu0
          %v550 = vpop.f32.mrf.mxu0
          %v551 = vpop.f32.mrf.mxu0
          %552 = vdwg.mxu0
          %vm553 = vcmask 523264
          %554 = vst.msk [vmem:[#allocation3] sm:$0xff] %vm553, %v548
          %555 = vst [vmem:[#allocation4] sm:$0xff] 0.0
          %556 = vst [vmem:[#allocation4 + $0x8] sm:$0xff] 0.0
        $region68: #{tpu_custom_call.1} parent=51 // pred_fallthru
          _
        %v557 = vld [vmem:[#allocation2] sm:$0xf]
        %v558 = vld [vmem:[%s335] sm:$0xff]
        %v559 = vld [vmem:[%s335 + $0x8] sm:$0xff]
        %v560 = vld [vmem:[%s335 + $0x10] sm:$0xff]
        %v561 = vld [vmem:[%s335 + $0x18] sm:$0xff]
        %v562 = vld [vmem:[%s335 + $0x20] sm:$0xff]
        %v563 = vld [vmem:[%s335 + $0x28] sm:$0xff]
        %v564 = vld [vmem:[%s335 + $0x30] sm:$0xff]
        %v565 = vld [vmem:[%s335 + $0x38] sm:$0xff]
        %v566 = vld [vmem:[%s335 + $0x40] sm:$0xff]
        %v567 = vld [vmem:[%s335 + $0x48] sm:$0xff]
        %v568 = vld [vmem:[%s335 + $0x50] sm:$0xff]
        %v569 = vld [vmem:[%s335 + $0x58] sm:$0xff]
        %v570 = vld [vmem:[%s335 + $0x60] sm:$0xff]
        %v571 = vld [vmem:[%s335 + $0x68] sm:$0xff]
        %v572 = vld [vmem:[%s335 + $0x70] sm:$0xff]
        %v573 = vld [vmem:[%s335 + $0x78] sm:$0xff]
        %v574 = vld [vmem:[%s335 + $0x80] sm:$0xff]
        %v575 = vld [vmem:[%s335 + $0x88] sm:$0xff]
        %v576 = vld [vmem:[%s335 + $0x90] sm:$0xff]
        %v577 = vld [vmem:[%s335 + $0x98] sm:$0xff]
        %v578 = vld [vmem:[%s335 + $0xa0] sm:$0xff]
        %v579 = vld [vmem:[%s335 + $0xa8] sm:$0xff]
        %v580 = vld [vmem:[%s335 + $0xb0] sm:$0xff]
        %v581 = vld [vmem:[%s335 + $0xb8] sm:$0xff]
        %v582 = vld [vmem:[%s335 + $0xc0] sm:$0xff]
        %v583 = vld [vmem:[%s335 + $0xc8] sm:$0xff]
        %v584 = vld [vmem:[%s335 + $0xd0] sm:$0xff]
        %v585 = vld [vmem:[%s335 + $0xd8] sm:$0xff]
        %v586 = vld [vmem:[%s335 + $0xe0] sm:$0xff]
        %v587 = vld [vmem:[%s335 + $0xe8] sm:$0xff]
        %v588 = vld [vmem:[%s335 + $0xf0] sm:$0xff]
        %v589 = vld [vmem:[%s335 + $0xf8] sm:$0xff]
        %v622 = vunpack.c.l.b16 %v558
        %v623 = vunpack.c.h.b16 %v558
        %v624 = vunpack.c.l.b16 %v559
        %v625 = vunpack.c.h.b16 %v559
        %v626 = vunpack.c.l.b16 %v560
        %v627 = vunpack.c.h.b16 %v560
        %v628 = vunpack.c.l.b16 %v561
        %v629 = vunpack.c.h.b16 %v561
        %v630 = vunpack.c.l.b16 %v562
        %v631 = vunpack.c.h.b16 %v562
        %v632 = vunpack.c.l.b16 %v563
        %v633 = vunpack.c.h.b16 %v563
        %v634 = vunpack.c.l.b16 %v564
        %v635 = vunpack.c.h.b16 %v564
        %v636 = vunpack.c.l.b16 %v565
        %v637 = vunpack.c.h.b16 %v565
        %v638 = vunpack.c.l.b16 %v566
        %v639 = vunpack.c.h.b16 %v566
        %v640 = vunpack.c.l.b16 %v567
        %v641 = vunpack.c.h.b16 %v567
        %v642 = vunpack.c.l.b16 %v568
        %v643 = vunpack.c.h.b16 %v568
        %v644 = vunpack.c.l.b16 %v569
        %v645 = vunpack.c.h.b16 %v569
        %v646 = vunpack.c.l.b16 %v570
        %v647 = vunpack.c.h.b16 %v570
        %v648 = vunpack.c.l.b16 %v571
        %v649 = vunpack.c.h.b16 %v571
        %v650 = vunpack.c.l.b16 %v572
        %v651 = vunpack.c.h.b16 %v572
        %v652 = vunpack.c.l.b16 %v573
        %v653 = vunpack.c.h.b16 %v573
        %v654 = vunpack.c.l.b16 %v574
        %v655 = vunpack.c.h.b16 %v574
        %v656 = vunpack.c.l.b16 %v575
        %v657 = vunpack.c.h.b16 %v575
        %v658 = vunpack.c.l.b16 %v576
        %v659 = vunpack.c.h.b16 %v576
        %v660 = vunpack.c.l.b16 %v577
        %v661 = vunpack.c.h.b16 %v577
        %v662 = vunpack.c.l.b16 %v578
        %v663 = vunpack.c.h.b16 %v578
        %v664 = vunpack.c.l.b16 %v579
        %v665 = vunpack.c.h.b16 %v579
        %v666 = vunpack.c.l.b16 %v580
        %v667 = vunpack.c.h.b16 %v580
        %v668 = vunpack.c.l.b16 %v581
        %v669 = vunpack.c.h.b16 %v581
        %v670 = vunpack.c.l.b16 %v582
        %v671 = vunpack.c.h.b16 %v582
        %v672 = vunpack.c.l.b16 %v583
        %v673 = vunpack.c.h.b16 %v583
        %v674 = vunpack.c.l.b16 %v584
        %v675 = vunpack.c.h.b16 %v584
        %v676 = vunpack.c.l.b16 %v585
        %v677 = vunpack.c.h.b16 %v585
        %v678 = vunpack.c.l.b16 %v586
        %v679 = vunpack.c.h.b16 %v586
        %v680 = vunpack.c.l.b16 %v587
        %v681 = vunpack.c.h.b16 %v587
        %v682 = vunpack.c.l.b16 %v588
        %v683 = vunpack.c.h.b16 %v588
        %v684 = vunpack.c.l.b16 %v589
        %v685 = vunpack.c.h.b16 %v589
        %v686 = vpack.c.b16 %v626, %v622
        %v687 = vpack.c.b16 %v627, %v623
        %v688 = vpack.c.b16 %v628, %v624
        %v689 = vpack.c.b16 %v629, %v625
        %v690 = vpack.c.b16 %v634, %v630
        %v691 = vpack.c.b16 %v635, %v631
        %v692 = vpack.c.b16 %v636, %v632
        %v693 = vpack.c.b16 %v637, %v633
        %v694 = vpack.c.b16 %v642, %v638
        %v695 = vpack.c.b16 %v643, %v639
        %v696 = vpack.c.b16 %v644, %v640
        %v697 = vpack.c.b16 %v645, %v641
        %v698 = vpack.c.b16 %v650, %v646
        %v699 = vpack.c.b16 %v651, %v647
        %v700 = vpack.c.b16 %v652, %v648
        %v701 = vpack.c.b16 %v653, %v649
        %v702 = vpack.c.b16 %v658, %v654
        %v703 = vpack.c.b16 %v659, %v655
        %v704 = vpack.c.b16 %v660, %v656
        %v705 = vpack.c.b16 %v661, %v657
        %v706 = vpack.c.b16 %v666, %v662
        %v707 = vpack.c.b16 %v667, %v663
        %v708 = vpack.c.b16 %v668, %v664
        %v709 = vpack.c.b16 %v669, %v665
        %v710 = vpack.c.b16 %v674, %v670
        %v711 = vpack.c.b16 %v675, %v671
        %v712 = vpack.c.b16 %v676, %v672
        %v713 = vpack.c.b16 %v677, %v673
        %v714 = vpack.c.b16 %v682, %v678
        %v715 = vpack.c.b16 %v683, %v679
        %v716 = vpack.c.b16 %v684, %v680
        %v717 = vpack.c.b16 %v685, %v681
        %750 = vmatprep.subr.bf16.mxu0 %v715
        %751 = vmatpush1.bf16.msra.mxu0 %v714
        %752 = vmatprep.subr.bf16.mxu0 %v711
        %753 = vmatpush1.bf16.msra.mxu0 %v710
        %754 = vmatprep.subr.bf16.mxu0 %v707
        %755 = vmatpush1.bf16.msra.mxu0 %v706
        %756 = vmatprep.subr.bf16.mxu0 %v703
        %757 = vmatpush1.bf16.msra.mxu0 %v702
        %758 = vmatprep.subr.bf16.mxu0 %v699
        %759 = vmatpush1.bf16.msra.mxu0 %v698
        %760 = vmatprep.subr.bf16.mxu0 %v695
        %761 = vmatpush1.bf16.msra.mxu0 %v694
        %762 = vmatprep.subr.bf16.mxu0 %v691
        %763 = vmatpush1.bf16.msra.mxu0 %v690
        %764 = vmatprep.subr.bf16.mxu0 %v687
        %765 = vmatpush1.bf16.msra.mxu0 %v686
        %766 = vmatprep.subr.bf16.mxu0 0
        %767 = vmatpush2.bf16.msra.mxu0 0
        %768 = vmatprep.subr.bf16.mxu0 0
        %769 = vmatpush2.bf16.msra.mxu0 0
        %770 = vmatprep.subr.bf16.mxu0 0
        %771 = vmatpush2.bf16.msra.mxu0 0
        %772 = vmatprep.subr.bf16.mxu0 0
        %773 = vmatpush2.bf16.msra.mxu0 0
        %774 = vmatprep.subr.bf16.mxu0 0
        %775 = vmatpush2.bf16.msra.mxu0 0
        %776 = vmatprep.subr.bf16.mxu0 0
        %777 = vmatpush2.bf16.msra.mxu0 0
        %778 = vmatprep.subr.bf16.mxu0 0
        %779 = vmatpush2.bf16.msra.mxu0 0
        %780 = vmatprep.subr.bf16.mxu0 0
        %781 = vmatpush2.bf16.msra.mxu0 0
        %782 = vmatprep.mubr.bf16.mxu0 0
        %783 = vmatmul.mubr.bf16.gmra.mxu0 %v557
        %v784 = vpop.f32.mrf.mxu0
        %v785 = vadd.f32 0.0, %v784
        %v786 = vpop.f32.mrf.mxu0
        %v787 = vadd.f32 0.0, %v786
        %v788 = vpop.f32.mrf.mxu0
        %v789 = vpop.f32.mrf.mxu0
        %790 = vdwg.mxu0
        %791 = vmatprep.subr.bf16.mxu0 %v717
        %792 = vmatpush1.bf16.msra.mxu0 %v716
        %793 = vmatprep.subr.bf16.mxu0 %v713
        %794 = vmatpush1.bf16.msra.mxu0 %v712
        %795 = vmatprep.subr.bf16.mxu0 %v709
        %796 = vmatpush1.bf16.msra.mxu0 %v708
        %797 = vmatprep.subr.bf16.mxu0 %v705
        %798 = vmatpush1.bf16.msra.mxu0 %v704
        %799 = vmatprep.subr.bf16.mxu0 %v701
        %800 = vmatpush1.bf16.msra.mxu0 %v700
        %801 = vmatprep.subr.bf16.mxu0 %v697
        %802 = vmatpush1.bf16.msra.mxu0 %v696
        %803 = vmatprep.subr.bf16.mxu0 %v693
        %804 = vmatpush1.bf16.msra.mxu0 %v692
        %805 = vmatprep.subr.bf16.mxu0 %v689
        %806 = vmatpush1.bf16.msra.mxu0 %v688
        %807 = vmatprep.subr.bf16.mxu0 0
        %808 = vmatpush2.bf16.msra.mxu0 0
        %809 = vmatprep.subr.bf16.mxu0 0
        %810 = vmatpush2.bf16.msra.mxu0 0
        %811 = vmatprep.subr.bf16.mxu0 0
        %812 = vmatpush2.bf16.msra.mxu0 0
        %813 = vmatprep.subr.bf16.mxu0 0
        %814 = vmatpush2.bf16.msra.mxu0 0
        %815 = vmatprep.subr.bf16.mxu0 0
        %816 = vmatpush2.bf16.msra.mxu0 0
        %817 = vmatprep.subr.bf16.mxu0 0
        %818 = vmatpush2.bf16.msra.mxu0 0
        %819 = vmatprep.subr.bf16.mxu0 0
        %820 = vmatpush2.bf16.msra.mxu0 0
        %821 = vmatprep.subr.bf16.mxu0 0
        %822 = vmatpush2.bf16.msra.mxu0 0
        %823 = vmatprep.mubr.bf16.mxu0 0
        %824 = vmatmul.mubr.bf16.gmra.mxu0 %v557
        %v825 = vpop.f32.mrf.mxu0
        %v826 = vadd.f32 0.0, %v825
        %v827 = vpop.f32.mrf.mxu0
        %v828 = vadd.f32 0.0, %v827
        %v829 = vpop.f32.mrf.mxu0
        %v830 = vpop.f32.mrf.mxu0
        %831 = vdwg.mxu0
        %v832 = vmul.f32 %v785, %v785
        %v833 = vmul.f32 %v787, %v787
        %v834 = vmul.f32 %v826, %v826
        %v835 = vmul.f32 %v828, %v828
        %v836 = vld [vmem:[#allocation3] sm:$0xff]
        %v837 = vpack.c.bf16 %v836, %v836
        %v838 = vld [vmem:[%s344] sm:$0xff]
        %v839 = vld [vmem:[%s344 + $0x8] sm:$0xff]
        %v840 = vld [vmem:[%s344 + $0x10] sm:$0xff]
        %v841 = vld [vmem:[%s344 + $0x18] sm:$0xff]
        %v846 = vunpack.c.l.b16 %v838
        %v847 = vunpack.c.h.b16 %v838
        %v848 = vunpack.c.l.b16 %v839
        %v849 = vunpack.c.h.b16 %v839
        %v850 = vunpack.c.l.b16 %v840
        %v851 = vunpack.c.h.b16 %v840
        %v852 = vunpack.c.l.b16 %v841
        %v853 = vunpack.c.h.b16 %v841
        %v854 = vpack.c.b16 %v850, %v846
        %v855 = vpack.c.b16 %v851, %v847
        %v856 = vpack.c.b16 %v852, %v848
        %v857 = vpack.c.b16 %v853, %v849
        %vm862 = vcmask 130048
        %v864 = vsel %vm862, %v837, 0
        %866 = vmatprep.subr.bf16.mxu0 0
        %867 = vmatpush1.bf16.msra.mxu0 0
        %868 = vmatprep.subr.bf16.mxu0 0
        %869 = vmatpush1.bf16.msra.mxu0 0
        %870 = vmatprep.subr.bf16.mxu0 0
        %871 = vmatpush1.bf16.msra.mxu0 0
        %872 = vmatprep.subr.bf16.mxu0 0
        %873 = vmatpush1.bf16.msra.mxu0 0
        %874 = vmatprep.subr.bf16.mxu0 0
        %875 = vmatpush1.bf16.msra.mxu0 0
        %876 = vmatprep.subr.bf16.mxu0 0
        %877 = vmatpush1.bf16.msra.mxu0 0
        %878 = vmatprep.subr.bf16.mxu0 0
        %879 = vmatpush1.bf16.msra.mxu0 0
        %880 = vmatprep.subr.bf16.mxu0 %v855
        %881 = vmatpush1.bf16.msra.mxu0 %v854
        %882 = vmatprep.subr.bf16.mxu0 0
        %883 = vmatpush2.bf16.msra.mxu0 0
        %884 = vmatprep.subr.bf16.mxu0 0
        %885 = vmatpush2.bf16.msra.mxu0 0
        %886 = vmatprep.subr.bf16.mxu0 0
        %887 = vmatpush2.bf16.msra.mxu0 0
        %888 = vmatprep.subr.bf16.mxu0 0
        %889 = vmatpush2.bf16.msra.mxu0 0
        %890 = vmatprep.subr.bf16.mxu0 0
        %891 = vmatpush2.bf16.msra.mxu0 0
        %892 = vmatprep.subr.bf16.mxu0 0
        %893 = vmatpush2.bf16.msra.mxu0 0
        %894 = vmatprep.subr.bf16.mxu0 0
        %895 = vmatpush2.bf16.msra.mxu0 0
        %896 = vmatprep.subr.bf16.mxu0 0
        %897 = vmatpush2.bf16.msra.mxu0 0
        %898 = vmatprep.mubr.bf16.mxu0 0
        %899 = vmatmul.mubr.bf16.gmra.mxu0 %v864
        %v900 = vpop.f32.mrf.mxu0
        %v901 = vadd.f32 0.0, %v900
        %v902 = vpop.f32.mrf.mxu0
        %v903 = vadd.f32 0.0, %v902
        %v904 = vpop.f32.mrf.mxu0
        %v905 = vpop.f32.mrf.mxu0
        %906 = vdwg.mxu0
        %907 = vmatprep.subr.bf16.mxu0 0
        %908 = vmatpush1.bf16.msra.mxu0 0
        %909 = vmatprep.subr.bf16.mxu0 0
        %910 = vmatpush1.bf16.msra.mxu0 0
        %911 = vmatprep.subr.bf16.mxu0 0
        %912 = vmatpush1.bf16.msra.mxu0 0
        %913 = vmatprep.subr.bf16.mxu0 0
        %914 = vmatpush1.bf16.msra.mxu0 0
        %915 = vmatprep.subr.bf16.mxu0 0
        %916 = vmatpush1.bf16.msra.mxu0 0
        %917 = vmatprep.subr.bf16.mxu0 0
        %918 = vmatpush1.bf16.msra.mxu0 0
        %919 = vmatprep.subr.bf16.mxu0 0
        %920 = vmatpush1.bf16.msra.mxu0 0
        %921 = vmatprep.subr.bf16.mxu0 %v857
        %922 = vmatpush1.bf16.msra.mxu0 %v856
        %923 = vmatprep.subr.bf16.mxu0 0
        %924 = vmatpush2.bf16.msra.mxu0 0
        %925 = vmatprep.subr.bf16.mxu0 0
        %926 = vmatpush2.bf16.msra.mxu0 0
        %927 = vmatprep.subr.bf16.mxu0 0
        %928 = vmatpush2.bf16.msra.mxu0 0
        %929 = vmatprep.subr.bf16.mxu0 0
        %930 = vmatpush2.bf16.msra.mxu0 0
        %931 = vmatprep.subr.bf16.mxu0 0
        %932 = vmatpush2.bf16.msra.mxu0 0
        %933 = vmatprep.subr.bf16.mxu0 0
        %934 = vmatpush2.bf16.msra.mxu0 0
        %935 = vmatprep.subr.bf16.mxu0 0
        %936 = vmatpush2.bf16.msra.mxu0 0
        %937 = vmatprep.subr.bf16.mxu0 0
        %938 = vmatpush2.bf16.msra.mxu0 0
        %939 = vmatprep.mubr.bf16.mxu0 0
        %940 = vmatmul.mubr.bf16.gmra.mxu0 %v864
        %v941 = vpop.f32.mrf.mxu0
        %v942 = vadd.f32 0.0, %v941
        %v943 = vpop.f32.mrf.mxu0
        %v944 = vadd.f32 0.0, %v943
        %v945 = vpop.f32.mrf.mxu0
        %v946 = vpop.f32.mrf.mxu0
        %947 = vdwg.mxu0
        %949 = vset.pattern.permute.xlu0 0
        %950 = vperm.xlu0 %949, %v399
        %v951 = vpop.permute.xlu0 %950
        %v953 = vmul.f32 %v901, %v951
        %v954 = vmul.f32 %v903, %v951
        %v955 = vmul.f32 %v942, %v951
        %v956 = vmul.f32 %v944, %v951
        %958 = vset.pattern.permute.xlu0 0
        %959 = vperm.xlu0 %958, %v398
        %v960 = vpop.permute.xlu0 %959
        %v962 = vmul.f32 %v960, %v832
        %v963 = vmul.f32 %v960, %v833
        %v964 = vmul.f32 %v960, %v834
        %v965 = vmul.f32 %v960, %v835
        %v966 = vrot.slane %v962, 4
        %v967 = vadd.f32 %v962, %v966
        %v968 = vrot.slane %v967, 2
        %v969 = vadd.f32 %v967, %v968
        %v970 = vrot.slane %v969, 1
        %v971 = vadd.f32 %v969, %v970
        %v972 = vrot.slane %v963, 4
        %v973 = vadd.f32 %v963, %v972
        %v974 = vrot.slane %v973, 2
        %v975 = vadd.f32 %v973, %v974
        %v976 = vrot.slane %v975, 1
        %v977 = vadd.f32 %v975, %v976
        %v978 = vrot.slane %v964, 4
        %v979 = vadd.f32 %v964, %v978
        %v980 = vrot.slane %v979, 2
        %v981 = vadd.f32 %v979, %v980
        %v982 = vrot.slane %v981, 1
        %v983 = vadd.f32 %v981, %v982
        %v984 = vrot.slane %v965, 4
        %v985 = vadd.f32 %v965, %v984
        %v986 = vrot.slane %v985, 2
        %v987 = vadd.f32 %v985, %v986
        %v988 = vrot.slane %v987, 1
        %v989 = vadd.f32 %v987, %v988
        %v990 = vmul.f32 %v953, %v953
        %v991 = vmul.f32 %v954, %v954
        %v992 = vmul.f32 %v955, %v955
        %v993 = vmul.f32 %v956, %v956
        %v994 = vrot.slane %v990, 4
        %v995 = vadd.f32 %v990, %v994
        %v996 = vrot.slane %v995, 2
        %v997 = vadd.f32 %v995, %v996
        %v998 = vrot.slane %v997, 1
        %v999 = vadd.f32 %v997, %v998
        %v1000 = vrot.slane %v991, 4
        %v1001 = vadd.f32 %v991, %v1000
        %v1002 = vrot.slane %v1001, 2
        %v1003 = vadd.f32 %v1001, %v1002
        %v1004 = vrot.slane %v1003, 1
        %v1005 = vadd.f32 %v1003, %v1004
        %v1006 = vrot.slane %v992, 4
        %v1007 = vadd.f32 %v992, %v1006
        %v1008 = vrot.slane %v1007, 2
        %v1009 = vadd.f32 %v1007, %v1008
        %v1010 = vrot.slane %v1009, 1
        %v1011 = vadd.f32 %v1009, %v1010
        %v1012 = vrot.slane %v993, 4
        %v1013 = vadd.f32 %v993, %v1012
        %v1014 = vrot.slane %v1013, 2
        %v1015 = vadd.f32 %v1013, %v1014
        %v1016 = vrot.slane %v1015, 1
        %v1017 = vadd.f32 %v1015, %v1016
        %v1018 = vrsqrt.pop %v999
        %v1019 = vmul.f32 %v999, %v1018
        %vm1020 = vcmp.eq.f32.partialorder %v999, inf
        %v1021 = vsel %vm1020, %v999, %v1019
        %vm1022 = vcmp.eq.f32.partialorder %v999, 0.0
        %v1023 = vand.u32 %v999, 2147483648
        %v1024 = vsel %vm1022, %v1023, %v1021
        %v1025 = vrsqrt.pop %v1005
        %v1026 = vmul.f32 %v1005, %v1025
        %vm1027 = vcmp.eq.f32.partialorder %v1005, inf
        %v1028 = vsel %vm1027, %v1005, %v1026
        %vm1029 = vcmp.eq.f32.partialorder %v1005, 0.0
        %v1030 = vand.u32 %v1005, 2147483648
        %v1031 = vsel %vm1029, %v1030, %v1028
        %v1032 = vrsqrt.pop %v1011
        %v1033 = vmul.f32 %v1011, %v1032
        %vm1034 = vcmp.eq.f32.partialorder %v1011, inf
        %v1035 = vsel %vm1034, %v1011, %v1033
        %vm1036 = vcmp.eq.f32.partialorder %v1011, 0.0
        %v1037 = vand.u32 %v1011, 2147483648
        %v1038 = vsel %vm1036, %v1037, %v1035
        %v1039 = vrsqrt.pop %v1017
        %v1040 = vmul.f32 %v1017, %v1039
        %vm1041 = vcmp.eq.f32.partialorder %v1017, inf
        %v1042 = vsel %vm1041, %v1017, %v1040
        %vm1043 = vcmp.eq.f32.partialorder %v1017, 0.0
        %v1044 = vand.u32 %v1017, 2147483648
        %v1045 = vsel %vm1043, %v1044, %v1042
        %v1046 = vadd.f32 %v1024, 1e-08
        %v1047 = vadd.f32 %v1031, 1e-08
        %v1048 = vadd.f32 %v1038, 1e-08
        %v1049 = vadd.f32 %v1045, 1e-08
        %v1050 = vrcp.pop %v1046
        %v1051 = vrcp.pop %v1047
        %v1052 = vrcp.pop %v1048
        %v1053 = vrcp.pop %v1049
        %v1054 = vrsqrt.pop %v971
        %v1055 = vmul.f32 %v971, %v1054
        %vm1056 = vcmp.eq.f32.partialorder %v971, inf
        %v1057 = vsel %vm1056, %v971, %v1055
        %vm1058 = vcmp.eq.f32.partialorder %v971, 0.0
        %v1059 = vand.u32 %v971, 2147483648
        %v1060 = vsel %vm1058, %v1059, %v1057
        %v1061 = vrsqrt.pop %v977
        %v1062 = vmul.f32 %v977, %v1061
        %vm1063 = vcmp.eq.f32.partialorder %v977, inf
        %v1064 = vsel %vm1063, %v977, %v1062
        %vm1065 = vcmp.eq.f32.partialorder %v977, 0.0
        %v1066 = vand.u32 %v977, 2147483648
        %v1067 = vsel %vm1065, %v1066, %v1064
        %v1068 = vrsqrt.pop %v983
        %v1069 = vmul.f32 %v983, %v1068
        %vm1070 = vcmp.eq.f32.partialorder %v983, inf
        %v1071 = vsel %vm1070, %v983, %v1069
        %vm1072 = vcmp.eq.f32.partialorder %v983, 0.0
        %v1073 = vand.u32 %v983, 2147483648
        %v1074 = vsel %vm1072, %v1073, %v1071
        %v1075 = vrsqrt.pop %v989
        %v1076 = vmul.f32 %v989, %v1075
        %vm1077 = vcmp.eq.f32.partialorder %v989, inf
        %v1078 = vsel %vm1077, %v989, %v1076
        %vm1079 = vcmp.eq.f32.partialorder %v989, 0.0
        %v1080 = vand.u32 %v989, 2147483648
        %v1081 = vsel %vm1079, %v1080, %v1078
        %v1082 = vmul.f32 %v1060, 0.1
        %v1083 = vmul.f32 %v1067, 0.1
        %v1084 = vmul.f32 %v1074, 0.1
        %v1085 = vmul.f32 %v1081, 0.1
        %v1086 = vmul.f32 %v1082, %v1050
        %v1087 = vmul.f32 %v1083, %v1051
        %v1088 = vmul.f32 %v1084, %v1052
        %v1089 = vmul.f32 %v1085, %v1053
        %v1090 = vmul.f32 %v1086, %v953
        %v1091 = vmul.f32 %v1087, %v954
        %v1092 = vmul.f32 %v1088, %v955
        %v1093 = vmul.f32 %v1089, %v956
        %v1094 = vadd.f32 %v785, %v1090
        %v1095 = vadd.f32 %v787, %v1091
        %v1096 = vadd.f32 %v826, %v1092
        %v1097 = vadd.f32 %v828, %v1093
        %v1098 = vld [vmem:[%s344 + $0x20] sm:$0xff]
        %v1099 = vld [vmem:[%s344 + $0x28] sm:$0xff]
        %v1100 = vld [vmem:[%s344 + $0x30] sm:$0xff]
        %v1101 = vld [vmem:[%s344 + $0x38] sm:$0xff]
        %1103 = vrot.lane.b32.xlu0 %v837, 112
        %v1104 = vpop.permute.xlu0 %1103
        %v1109 = vunpack.c.l.b16 %v1098
        %v1110 = vunpack.c.h.b16 %v1098
        %v1111 = vunpack.c.l.b16 %v1099
        %v1112 = vunpack.c.h.b16 %v1099
        %v1113 = vunpack.c.l.b16 %v1100
        %v1114 = vunpack.c.h.b16 %v1100
        %v1115 = vunpack.c.l.b16 %v1101
        %v1116 = vunpack.c.h.b16 %v1101
        %v1117 = vpack.c.b16 %v1113, %v1109
        %v1118 = vpack.c.b16 %v1114, %v1110
        %v1119 = vpack.c.b16 %v1115, %v1111
        %v1120 = vpack.c.b16 %v1116, %v1112
        %v1126 = vsel %vm862, %v1104, 0
        %1128 = vmatprep.subr.bf16.mxu0 0
        %1129 = vmatpush1.bf16.msra.mxu0 0
        %1130 = vmatprep.subr.bf16.mxu0 0
        %1131 = vmatpush1.bf16.msra.mxu0 0
        %1132 = vmatprep.subr.bf16.mxu0 0
        %1133 = vmatpush1.bf16.msra.mxu0 0
        %1134 = vmatprep.subr.bf16.mxu0 0
        %1135 = vmatpush1.bf16.msra.mxu0 0
        %1136 = vmatprep.subr.bf16.mxu0 0
        %1137 = vmatpush1.bf16.msra.mxu0 0
        %1138 = vmatprep.subr.bf16.mxu0 0
        %1139 = vmatpush1.bf16.msra.mxu0 0
        %1140 = vmatprep.subr.bf16.mxu0 0
        %1141 = vmatpush1.bf16.msra.mxu0 0
        %1142 = vmatprep.subr.bf16.mxu0 %v1118
        %1143 = vmatpush1.bf16.msra.mxu0 %v1117
        %1144 = vmatprep.subr.bf16.mxu0 0
        %1145 = vmatpush2.bf16.msra.mxu0 0
        %1146 = vmatprep.subr.bf16.mxu0 0
        %1147 = vmatpush2.bf16.msra.mxu0 0
        %1148 = vmatprep.subr.bf16.mxu0 0
        %1149 = vmatpush2.bf16.msra.mxu0 0
        %1150 = vmatprep.subr.bf16.mxu0 0
        %1151 = vmatpush2.bf16.msra.mxu0 0
        %1152 = vmatprep.subr.bf16.mxu0 0
        %1153 = vmatpush2.bf16.msra.mxu0 0
        %1154 = vmatprep.subr.bf16.mxu0 0
        %1155 = vmatpush2.bf16.msra.mxu0 0
        %1156 = vmatprep.subr.bf16.mxu0 0
        %1157 = vmatpush2.bf16.msra.mxu0 0
        %1158 = vmatprep.subr.bf16.mxu0 0
        %1159 = vmatpush2.bf16.msra.mxu0 0
        %1160 = vmatprep.mubr.bf16.mxu0 0
        %1161 = vmatmul.mubr.bf16.gmra.mxu0 %v1126
        %v1162 = vpop.f32.mrf.mxu0
        %v1163 = vadd.f32 0.0, %v1162
        %v1164 = vpop.f32.mrf.mxu0
        %v1165 = vadd.f32 0.0, %v1164
        %v1166 = vpop.f32.mrf.mxu0
        %v1167 = vpop.f32.mrf.mxu0
        %1168 = vdwg.mxu0
        %1169 = vmatprep.subr.bf16.mxu0 0
        %1170 = vmatpush1.bf16.msra.mxu0 0
        %1171 = vmatprep.subr.bf16.mxu0 0
        %1172 = vmatpush1.bf16.msra.mxu0 0
        %1173 = vmatprep.subr.bf16.mxu0 0
        %1174 = vmatpush1.bf16.msra.mxu0 0
        %1175 = vmatprep.subr.bf16.mxu0 0
        %1176 = vmatpush1.bf16.msra.mxu0 0
        %1177 = vmatprep.subr.bf16.mxu0 0
        %1178 = vmatpush1.bf16.msra.mxu0 0
        %1179 = vmatprep.subr.bf16.mxu0 0
        %1180 = vmatpush1.bf16.msra.mxu0 0
        %1181 = vmatprep.subr.bf16.mxu0 0
        %1182 = vmatpush1.bf16.msra.mxu0 0
        %1183 = vmatprep.subr.bf16.mxu0 %v1120
        %1184 = vmatpush1.bf16.msra.mxu0 %v1119
        %1185 = vmatprep.subr.bf16.mxu0 0
        %1186 = vmatpush2.bf16.msra.mxu0 0
        %1187 = vmatprep.subr.bf16.mxu0 0
        %1188 = vmatpush2.bf16.msra.mxu0 0
        %1189 = vmatprep.subr.bf16.mxu0 0
        %1190 = vmatpush2.bf16.msra.mxu0 0
        %1191 = vmatprep.subr.bf16.mxu0 0
        %1192 = vmatpush2.bf16.msra.mxu0 0
        %1193 = vmatprep.subr.bf16.mxu0 0
        %1194 = vmatpush2.bf16.msra.mxu0 0
        %1195 = vmatprep.subr.bf16.mxu0 0
        %1196 = vmatpush2.bf16.msra.mxu0 0
        %1197 = vmatprep.subr.bf16.mxu0 0
        %1198 = vmatpush2.bf16.msra.mxu0 0
        %1199 = vmatprep.subr.bf16.mxu0 0
        %1200 = vmatpush2.bf16.msra.mxu0 0
        %1201 = vmatprep.mubr.bf16.mxu0 0
        %1202 = vmatmul.mubr.bf16.gmra.mxu0 %v1126
        %v1203 = vpop.f32.mrf.mxu0
        %v1204 = vadd.f32 0.0, %v1203
        %v1205 = vpop.f32.mrf.mxu0
        %v1206 = vadd.f32 0.0, %v1205
        %v1207 = vpop.f32.mrf.mxu0
        %v1208 = vpop.f32.mrf.mxu0
        %1209 = vdwg.mxu0
        %1210 = vset.pattern.permute.xlu0 1
        %1211 = vperm.xlu0 %1210, %v399
        %v1212 = vpop.permute.xlu0 %1211
        %v1214 = vmul.f32 %v1163, %v1212
        %v1215 = vmul.f32 %v1165, %v1212
        %v1216 = vmul.f32 %v1204, %v1212
        %v1217 = vmul.f32 %v1206, %v1212
        %1218 = vset.pattern.permute.xlu0 1
        %1219 = vperm.xlu0 %1218, %v398
        %v1220 = vpop.permute.xlu0 %1219
        %v1222 = vmul.f32 %v1220, %v832
        %v1223 = vmul.f32 %v1220, %v833
        %v1224 = vmul.f32 %v1220, %v834
        %v1225 = vmul.f32 %v1220, %v835
        %v1226 = vrot.slane %v1222, 4
        %v1227 = vadd.f32 %v1222, %v1226
        %v1228 = vrot.slane %v1227, 2
        %v1229 = vadd.f32 %v1227, %v1228
        %v1230 = vrot.slane %v1229, 1
        %v1231 = vadd.f32 %v1229, %v1230
        %v1232 = vrot.slane %v1223, 4
        %v1233 = vadd.f32 %v1223, %v1232
        %v1234 = vrot.slane %v1233, 2
        %v1235 = vadd.f32 %v1233, %v1234
        %v1236 = vrot.slane %v1235, 1
        %v1237 = vadd.f32 %v1235, %v1236
        %v1238 = vrot.slane %v1224, 4
        %v1239 = vadd.f32 %v1224, %v1238
        %v1240 = vrot.slane %v1239, 2
        %v1241 = vadd.f32 %v1239, %v1240
        %v1242 = vrot.slane %v1241, 1
        %v1243 = vadd.f32 %v1241, %v1242
        %v1244 = vrot.slane %v1225, 4
        %v1245 = vadd.f32 %v1225, %v1244
        %v1246 = vrot.slane %v1245, 2
        %v1247 = vadd.f32 %v1245, %v1246
        %v1248 = vrot.slane %v1247, 1
        %v1249 = vadd.f32 %v1247, %v1248
        %v1250 = vmul.f32 %v1214, %v1214
        %v1251 = vmul.f32 %v1215, %v1215
        %v1252 = vmul.f32 %v1216, %v1216
        %v1253 = vmul.f32 %v1217, %v1217
        %v1254 = vrot.slane %v1250, 4
        %v1255 = vadd.f32 %v1250, %v1254
        %v1256 = vrot.slane %v1255, 2
        %v1257 = vadd.f32 %v1255, %v1256
        %v1258 = vrot.slane %v1257, 1
        %v1259 = vadd.f32 %v1257, %v1258
        %v1260 = vrot.slane %v1251, 4
        %v1261 = vadd.f32 %v1251, %v1260
        %v1262 = vrot.slane %v1261, 2
        %v1263 = vadd.f32 %v1261, %v1262
        %v1264 = vrot.slane %v1263, 1
        %v1265 = vadd.f32 %v1263, %v1264
        %v1266 = vrot.slane %v1252, 4
        %v1267 = vadd.f32 %v1252, %v1266
        %v1268 = vrot.slane %v1267, 2
        %v1269 = vadd.f32 %v1267, %v1268
        %v1270 = vrot.slane %v1269, 1
        %v1271 = vadd.f32 %v1269, %v1270
        %v1272 = vrot.slane %v1253, 4
        %v1273 = vadd.f32 %v1253, %v1272
        %v1274 = vrot.slane %v1273, 2
        %v1275 = vadd.f32 %v1273, %v1274
        %v1276 = vrot.slane %v1275, 1
        %v1277 = vadd.f32 %v1275, %v1276
        %v1278 = vrsqrt.pop %v1259
        %v1279 = vmul.f32 %v1259, %v1278
        %vm1280 = vcmp.eq.f32.partialorder %v1259, inf
        %v1281 = vsel %vm1280, %v1259, %v1279
        %vm1282 = vcmp.eq.f32.partialorder %v1259, 0.0
        %v1283 = vand.u32 %v1259, 2147483648
        %v1284 = vsel %vm1282, %v1283, %v1281
        %v1285 = vrsqrt.pop %v1265
        %v1286 = vmul.f32 %v1265, %v1285
        %vm1287 = vcmp.eq.f32.partialorder %v1265, inf
        %v1288 = vsel %vm1287, %v1265, %v1286
        %vm1289 = vcmp.eq.f32.partialorder %v1265, 0.0
        %v1290 = vand.u32 %v1265, 2147483648
        %v1291 = vsel %vm1289, %v1290, %v1288
        %v1292 = vrsqrt.pop %v1271
        %v1293 = vmul.f32 %v1271, %v1292
        %vm1294 = vcmp.eq.f32.partialorder %v1271, inf
        %v1295 = vsel %vm1294, %v1271, %v1293
        %vm1296 = vcmp.eq.f32.partialorder %v1271, 0.0
        %v1297 = vand.u32 %v1271, 2147483648
        %v1298 = vsel %vm1296, %v1297, %v1295
        %v1299 = vrsqrt.pop %v1277
        %v1300 = vmul.f32 %v1277, %v1299
        %vm1301 = vcmp.eq.f32.partialorder %v1277, inf
        %v1302 = vsel %vm1301, %v1277, %v1300
        %vm1303 = vcmp.eq.f32.partialorder %v1277, 0.0
        %v1304 = vand.u32 %v1277, 2147483648
        %v1305 = vsel %vm1303, %v1304, %v1302
        %v1306 = vadd.f32 %v1284, 1e-08
        %v1307 = vadd.f32 %v1291, 1e-08
        %v1308 = vadd.f32 %v1298, 1e-08
        %v1309 = vadd.f32 %v1305, 1e-08
        %v1310 = vrcp.pop %v1306
        %v1311 = vrcp.pop %v1307
        %v1312 = vrcp.pop %v1308
        %v1313 = vrcp.pop %v1309
        %v1314 = vrsqrt.pop %v1231
        %v1315 = vmul.f32 %v1231, %v1314
        %vm1316 = vcmp.eq.f32.partialorder %v1231, inf
        %v1317 = vsel %vm1316, %v1231, %v1315
        %vm1318 = vcmp.eq.f32.partialorder %v1231, 0.0
        %v1319 = vand.u32 %v1231, 2147483648
        %v1320 = vsel %vm1318, %v1319, %v1317
        %v1321 = vrsqrt.pop %v1237
        %v1322 = vmul.f32 %v1237, %v1321
        %vm1323 = vcmp.eq.f32.partialorder %v1237, inf
        %v1324 = vsel %vm1323, %v1237, %v1322
        %vm1325 = vcmp.eq.f32.partialorder %v1237, 0.0
        %v1326 = vand.u32 %v1237, 2147483648
        %v1327 = vsel %vm1325, %v1326, %v1324
        %v1328 = vrsqrt.pop %v1243
        %v1329 = vmul.f32 %v1243, %v1328
        %vm1330 = vcmp.eq.f32.partialorder %v1243, inf
        %v1331 = vsel %vm1330, %v1243, %v1329
        %vm1332 = vcmp.eq.f32.partialorder %v1243, 0.0
        %v1333 = vand.u32 %v1243, 2147483648
        %v1334 = vsel %vm1332, %v1333, %v1331
        %v1335 = vrsqrt.pop %v1249
        %v1336 = vmul.f32 %v1249, %v1335
        %vm1337 = vcmp.eq.f32.partialorder %v1249, inf
        %v1338 = vsel %vm1337, %v1249, %v1336
        %vm1339 = vcmp.eq.f32.partialorder %v1249, 0.0
        %v1340 = vand.u32 %v1249, 2147483648
        %v1341 = vsel %vm1339, %v1340, %v1338
        %v1342 = vmul.f32 %v1320, 0.1
        %v1343 = vmul.f32 %v1327, 0.1
        %v1344 = vmul.f32 %v1334, 0.1
        %v1345 = vmul.f32 %v1341, 0.1
        %v1346 = vmul.f32 %v1342, %v1310
        %v1347 = vmul.f32 %v1343, %v1311
        %v1348 = vmul.f32 %v1344, %v1312
        %v1349 = vmul.f32 %v1345, %v1313
        %v1350 = vmul.f32 %v1346, %v1214
        %v1351 = vmul.f32 %v1347, %v1215
        %v1352 = vmul.f32 %v1348, %v1216
        %v1353 = vmul.f32 %v1349, %v1217
        %v1354 = vadd.f32 %v1094, %v1350
        %v1355 = vadd.f32 %v1095, %v1351
        %v1356 = vadd.f32 %v1096, %v1352
        %v1357 = vadd.f32 %v1097, %v1353
        %v1358 = vld [vmem:[%s344 + $0x40] sm:$0xff]
        %v1359 = vld [vmem:[%s344 + $0x48] sm:$0xff]
        %v1360 = vld [vmem:[%s344 + $0x50] sm:$0xff]
        %v1361 = vld [vmem:[%s344 + $0x58] sm:$0xff]
        %1362 = vrot.lane.b32.xlu0 %v837, 96
        %v1363 = vpop.permute.xlu0 %1362
        %v1368 = vunpack.c.l.b16 %v1358
        %v1369 = vunpack.c.h.b16 %v1358
        %v1370 = vunpack.c.l.b16 %v1359
        %v1371 = vunpack.c.h.b16 %v1359
        %v1372 = vunpack.c.l.b16 %v1360
        %v1373 = vunpack.c.h.b16 %v1360
        %v1374 = vunpack.c.l.b16 %v1361
        %v1375 = vunpack.c.h.b16 %v1361
        %v1376 = vpack.c.b16 %v1372, %v1368
        %v1377 = vpack.c.b16 %v1373, %v1369
        %v1378 = vpack.c.b16 %v1374, %v1370
        %v1379 = vpack.c.b16 %v1375, %v1371
        %v1385 = vsel %vm862, %v1363, 0
        %1387 = vmatprep.subr.bf16.mxu0 0
        %1388 = vmatpush1.bf16.msra.mxu0 0
        %1389 = vmatprep.subr.bf16.mxu0 0
        %1390 = vmatpush1.bf16.msra.mxu0 0
        %1391 = vmatprep.subr.bf16.mxu0 0
        %1392 = vmatpush1.bf16.msra.mxu0 0
        %1393 = vmatprep.subr.bf16.mxu0 0
        %1394 = vmatpush1.bf16.msra.mxu0 0
        %1395 = vmatprep.subr.bf16.mxu0 0
        %1396 = vmatpush1.bf16.msra.mxu0 0
        %1397 = vmatprep.subr.bf16.mxu0 0
        %1398 = vmatpush1.bf16.msra.mxu0 0
        %1399 = vmatprep.subr.bf16.mxu0 0
        %1400 = vmatpush1.bf16.msra.mxu0 0
        %1401 = vmatprep.subr.bf16.mxu0 %v1377
        %1402 = vmatpush1.bf16.msra.mxu0 %v1376
        %1403 = vmatprep.subr.bf16.mxu0 0
        %1404 = vmatpush2.bf16.msra.mxu0 0
        %1405 = vmatprep.subr.bf16.mxu0 0
        %1406 = vmatpush2.bf16.msra.mxu0 0
        %1407 = vmatprep.subr.bf16.mxu0 0
        %1408 = vmatpush2.bf16.msra.mxu0 0
        %1409 = vmatprep.subr.bf16.mxu0 0
        %1410 = vmatpush2.bf16.msra.mxu0 0
        %1411 = vmatprep.subr.bf16.mxu0 0
        %1412 = vmatpush2.bf16.msra.mxu0 0
        %1413 = vmatprep.subr.bf16.mxu0 0
        %1414 = vmatpush2.bf16.msra.mxu0 0
        %1415 = vmatprep.subr.bf16.mxu0 0
        %1416 = vmatpush2.bf16.msra.mxu0 0
        %1417 = vmatprep.subr.bf16.mxu0 0
        %1418 = vmatpush2.bf16.msra.mxu0 0
        %1419 = vmatprep.mubr.bf16.mxu0 0
        %1420 = vmatmul.mubr.bf16.gmra.mxu0 %v1385
        %v1421 = vpop.f32.mrf.mxu0
        %v1422 = vadd.f32 0.0, %v1421
        %v1423 = vpop.f32.mrf.mxu0
        %v1424 = vadd.f32 0.0, %v1423
        %v1425 = vpop.f32.mrf.mxu0
        %v1426 = vpop.f32.mrf.mxu0
        %1427 = vdwg.mxu0
        %1428 = vmatprep.subr.bf16.mxu0 0
        %1429 = vmatpush1.bf16.msra.mxu0 0
        %1430 = vmatprep.subr.bf16.mxu0 0
        %1431 = vmatpush1.bf16.msra.mxu0 0
        %1432 = vmatprep.subr.bf16.mxu0 0
        %1433 = vmatpush1.bf16.msra.mxu0 0
        %1434 = vmatprep.subr.bf16.mxu0 0
        %1435 = vmatpush1.bf16.msra.mxu0 0
        %1436 = vmatprep.subr.bf16.mxu0 0
        %1437 = vmatpush1.bf16.msra.mxu0 0
        %1438 = vmatprep.subr.bf16.mxu0 0
        %1439 = vmatpush1.bf16.msra.mxu0 0
        %1440 = vmatprep.subr.bf16.mxu0 0
        %1441 = vmatpush1.bf16.msra.mxu0 0
        %1442 = vmatprep.subr.bf16.mxu0 %v1379
        %1443 = vmatpush1.bf16.msra.mxu0 %v1378
        %1444 = vmatprep.subr.bf16.mxu0 0
        %1445 = vmatpush2.bf16.msra.mxu0 0
        %1446 = vmatprep.subr.bf16.mxu0 0
        %1447 = vmatpush2.bf16.msra.mxu0 0
        %1448 = vmatprep.subr.bf16.mxu0 0
        %1449 = vmatpush2.bf16.msra.mxu0 0
        %1450 = vmatprep.subr.bf16.mxu0 0
        %1451 = vmatpush2.bf16.msra.mxu0 0
        %1452 = vmatprep.subr.bf16.mxu0 0
        %1453 = vmatpush2.bf16.msra.mxu0 0
        %1454 = vmatprep.subr.bf16.mxu0 0
        %1455 = vmatpush2.bf16.msra.mxu0 0
        %1456 = vmatprep.subr.bf16.mxu0 0
        %1457 = vmatpush2.bf16.msra.mxu0 0
        %1458 = vmatprep.subr.bf16.mxu0 0
        %1459 = vmatpush2.bf16.msra.mxu0 0
        %1460 = vmatprep.mubr.bf16.mxu0 0
        %1461 = vmatmul.mubr.bf16.gmra.mxu0 %v1385
        %v1462 = vpop.f32.mrf.mxu0
        %v1463 = vadd.f32 0.0, %v1462
        %v1464 = vpop.f32.mrf.mxu0
        %v1465 = vadd.f32 0.0, %v1464
        %v1466 = vpop.f32.mrf.mxu0
        %v1467 = vpop.f32.mrf.mxu0
        %1468 = vdwg.mxu0
        %1469 = vset.pattern.permute.xlu0 2
        %1470 = vperm.xlu0 %1469, %v399
        %v1471 = vpop.permute.xlu0 %1470
        %v1473 = vmul.f32 %v1422, %v1471
        %v1474 = vmul.f32 %v1424, %v1471
        %v1475 = vmul.f32 %v1463, %v1471
        %v1476 = vmul.f32 %v1465, %v1471
        %1477 = vset.pattern.permute.xlu0 2
        %1478 = vperm.xlu0 %1477, %v398
        %v1479 = vpop.permute.xlu0 %1478
        %v1481 = vmul.f32 %v1479, %v832
        %v1482 = vmul.f32 %v1479, %v833
        %v1483 = vmul.f32 %v1479, %v834
        %v1484 = vmul.f32 %v1479, %v835
        %v1485 = vrot.slane %v1481, 4
        %v1486 = vadd.f32 %v1481, %v1485
        %v1487 = vrot.slane %v1486, 2
        %v1488 = vadd.f32 %v1486, %v1487
        %v1489 = vrot.slane %v1488, 1
        %v1490 = vadd.f32 %v1488, %v1489
        %v1491 = vrot.slane %v1482, 4
        %v1492 = vadd.f32 %v1482, %v1491
        %v1493 = vrot.slane %v1492, 2
        %v1494 = vadd.f32 %v1492, %v1493
        %v1495 = vrot.slane %v1494, 1
        %v1496 = vadd.f32 %v1494, %v1495
        %v1497 = vrot.slane %v1483, 4
        %v1498 = vadd.f32 %v1483, %v1497
        %v1499 = vrot.slane %v1498, 2
        %v1500 = vadd.f32 %v1498, %v1499
        %v1501 = vrot.slane %v1500, 1
        %v1502 = vadd.f32 %v1500, %v1501
        %v1503 = vrot.slane %v1484, 4
        %v1504 = vadd.f32 %v1484, %v1503
        %v1505 = vrot.slane %v1504, 2
        %v1506 = vadd.f32 %v1504, %v1505
        %v1507 = vrot.slane %v1506, 1
        %v1508 = vadd.f32 %v1506, %v1507
        %v1509 = vmul.f32 %v1473, %v1473
        %v1510 = vmul.f32 %v1474, %v1474
        %v1511 = vmul.f32 %v1475, %v1475
        %v1512 = vmul.f32 %v1476, %v1476
        %v1513 = vrot.slane %v1509, 4
        %v1514 = vadd.f32 %v1509, %v1513
        %v1515 = vrot.slane %v1514, 2
        %v1516 = vadd.f32 %v1514, %v1515
        %v1517 = vrot.slane %v1516, 1
        %v1518 = vadd.f32 %v1516, %v1517
        %v1519 = vrot.slane %v1510, 4
        %v1520 = vadd.f32 %v1510, %v1519
        %v1521 = vrot.slane %v1520, 2
        %v1522 = vadd.f32 %v1520, %v1521
        %v1523 = vrot.slane %v1522, 1
        %v1524 = vadd.f32 %v1522, %v1523
        %v1525 = vrot.slane %v1511, 4
        %v1526 = vadd.f32 %v1511, %v1525
        %v1527 = vrot.slane %v1526, 2
        %v1528 = vadd.f32 %v1526, %v1527
        %v1529 = vrot.slane %v1528, 1
        %v1530 = vadd.f32 %v1528, %v1529
        %v1531 = vrot.slane %v1512, 4
        %v1532 = vadd.f32 %v1512, %v1531
        %v1533 = vrot.slane %v1532, 2
        %v1534 = vadd.f32 %v1532, %v1533
        %v1535 = vrot.slane %v1534, 1
        %v1536 = vadd.f32 %v1534, %v1535
        %v1537 = vrsqrt.pop %v1518
        %v1538 = vmul.f32 %v1518, %v1537
        %vm1539 = vcmp.eq.f32.partialorder %v1518, inf
        %v1540 = vsel %vm1539, %v1518, %v1538
        %vm1541 = vcmp.eq.f32.partialorder %v1518, 0.0
        %v1542 = vand.u32 %v1518, 2147483648
        %v1543 = vsel %vm1541, %v1542, %v1540
        %v1544 = vrsqrt.pop %v1524
        %v1545 = vmul.f32 %v1524, %v1544
        %vm1546 = vcmp.eq.f32.partialorder %v1524, inf
        %v1547 = vsel %vm1546, %v1524, %v1545
        %vm1548 = vcmp.eq.f32.partialorder %v1524, 0.0
        %v1549 = vand.u32 %v1524, 2147483648
        %v1550 = vsel %vm1548, %v1549, %v1547
        %v1551 = vrsqrt.pop %v1530
        %v1552 = vmul.f32 %v1530, %v1551
        %vm1553 = vcmp.eq.f32.partialorder %v1530, inf
        %v1554 = vsel %vm1553, %v1530, %v1552
        %vm1555 = vcmp.eq.f32.partialorder %v1530, 0.0
        %v1556 = vand.u32 %v1530, 2147483648
        %v1557 = vsel %vm1555, %v1556, %v1554
        %v1558 = vrsqrt.pop %v1536
        %v1559 = vmul.f32 %v1536, %v1558
        %vm1560 = vcmp.eq.f32.partialorder %v1536, inf
        %v1561 = vsel %vm1560, %v1536, %v1559
        %vm1562 = vcmp.eq.f32.partialorder %v1536, 0.0
        %v1563 = vand.u32 %v1536, 2147483648
        %v1564 = vsel %vm1562, %v1563, %v1561
        %v1565 = vadd.f32 %v1543, 1e-08
        %v1566 = vadd.f32 %v1550, 1e-08
        %v1567 = vadd.f32 %v1557, 1e-08
        %v1568 = vadd.f32 %v1564, 1e-08
        %v1569 = vrcp.pop %v1565
        %v1570 = vrcp.pop %v1566
        %v1571 = vrcp.pop %v1567
        %v1572 = vrcp.pop %v1568
        %v1573 = vrsqrt.pop %v1490
        %v1574 = vmul.f32 %v1490, %v1573
        %vm1575 = vcmp.eq.f32.partialorder %v1490, inf
        %v1576 = vsel %vm1575, %v1490, %v1574
        %vm1577 = vcmp.eq.f32.partialorder %v1490, 0.0
        %v1578 = vand.u32 %v1490, 2147483648
        %v1579 = vsel %vm1577, %v1578, %v1576
        %v1580 = vrsqrt.pop %v1496
        %v1581 = vmul.f32 %v1496, %v1580
        %vm1582 = vcmp.eq.f32.partialorder %v1496, inf
        %v1583 = vsel %vm1582, %v1496, %v1581
        %vm1584 = vcmp.eq.f32.partialorder %v1496, 0.0
        %v1585 = vand.u32 %v1496, 2147483648
        %v1586 = vsel %vm1584, %v1585, %v1583
        %v1587 = vrsqrt.pop %v1502
        %v1588 = vmul.f32 %v1502, %v1587
        %vm1589 = vcmp.eq.f32.partialorder %v1502, inf
        %v1590 = vsel %vm1589, %v1502, %v1588
        %vm1591 = vcmp.eq.f32.partialorder %v1502, 0.0
        %v1592 = vand.u32 %v1502, 2147483648
        %v1593 = vsel %vm1591, %v1592, %v1590
        %v1594 = vrsqrt.pop %v1508
        %v1595 = vmul.f32 %v1508, %v1594
        %vm1596 = vcmp.eq.f32.partialorder %v1508, inf
        %v1597 = vsel %vm1596, %v1508, %v1595
        %vm1598 = vcmp.eq.f32.partialorder %v1508, 0.0
        %v1599 = vand.u32 %v1508, 2147483648
        %v1600 = vsel %vm1598, %v1599, %v1597
        %v1601 = vmul.f32 %v1579, 0.1
        %v1602 = vmul.f32 %v1586, 0.1
        %v1603 = vmul.f32 %v1593, 0.1
        %v1604 = vmul.f32 %v1600, 0.1
        %v1605 = vmul.f32 %v1601, %v1569
        %v1606 = vmul.f32 %v1602, %v1570
        %v1607 = vmul.f32 %v1603, %v1571
        %v1608 = vmul.f32 %v1604, %v1572
        %v1609 = vmul.f32 %v1605, %v1473
        %v1610 = vmul.f32 %v1606, %v1474
        %v1611 = vmul.f32 %v1607, %v1475
        %v1612 = vmul.f32 %v1608, %v1476
        %v1613 = vadd.f32 %v1354, %v1609
        %v1614 = vadd.f32 %v1355, %v1610
        %v1615 = vadd.f32 %v1356, %v1611
        %v1616 = vadd.f32 %v1357, %v1612
        %v1617 = vld [vmem:[%s344 + $0x60] sm:$0xff]
        %v1618 = vld [vmem:[%s344 + $0x68] sm:$0xff]
        %v1619 = vld [vmem:[%s344 + $0x70] sm:$0xff]
        %v1620 = vld [vmem:[%s344 + $0x78] sm:$0xff]
        %1621 = vrot.lane.b32.xlu0 %v837, 80
        %v1622 = vpop.permute.xlu0 %1621
        %v1627 = vunpack.c.l.b16 %v1617
        %v1628 = vunpack.c.h.b16 %v1617
        %v1629 = vunpack.c.l.b16 %v1618
        %v1630 = vunpack.c.h.b16 %v1618
        %v1631 = vunpack.c.l.b16 %v1619
        %v1632 = vunpack.c.h.b16 %v1619
        %v1633 = vunpack.c.l.b16 %v1620
        %v1634 = vunpack.c.h.b16 %v1620
        %v1635 = vpack.c.b16 %v1631, %v1627
        %v1636 = vpack.c.b16 %v1632, %v1628
        %v1637 = vpack.c.b16 %v1633, %v1629
        %v1638 = vpack.c.b16 %v1634, %v1630
        %v1644 = vsel %vm862, %v1622, 0
        %1646 = vmatprep.subr.bf16.mxu0 0
        %1647 = vmatpush1.bf16.msra.mxu0 0
        %1648 = vmatprep.subr.bf16.mxu0 0
        %1649 = vmatpush1.bf16.msra.mxu0 0
        %1650 = vmatprep.subr.bf16.mxu0 0
        %1651 = vmatpush1.bf16.msra.mxu0 0
        %1652 = vmatprep.subr.bf16.mxu0 0
        %1653 = vmatpush1.bf16.msra.mxu0 0
        %1654 = vmatprep.subr.bf16.mxu0 0
        %1655 = vmatpush1.bf16.msra.mxu0 0
        %1656 = vmatprep.subr.bf16.mxu0 0
        %1657 = vmatpush1.bf16.msra.mxu0 0
        %1658 = vmatprep.subr.bf16.mxu0 0
        %1659 = vmatpush1.bf16.msra.mxu0 0
        %1660 = vmatprep.subr.bf16.mxu0 %v1636
        %1661 = vmatpush1.bf16.msra.mxu0 %v1635
        %1662 = vmatprep.subr.bf16.mxu0 0
        %1663 = vmatpush2.bf16.msra.mxu0 0
        %1664 = vmatprep.subr.bf16.mxu0 0
        %1665 = vmatpush2.bf16.msra.mxu0 0
        %1666 = vmatprep.subr.bf16.mxu0 0
        %1667 = vmatpush2.bf16.msra.mxu0 0
        %1668 = vmatprep.subr.bf16.mxu0 0
        %1669 = vmatpush2.bf16.msra.mxu0 0
        %1670 = vmatprep.subr.bf16.mxu0 0
        %1671 = vmatpush2.bf16.msra.mxu0 0
        %1672 = vmatprep.subr.bf16.mxu0 0
        %1673 = vmatpush2.bf16.msra.mxu0 0
        %1674 = vmatprep.subr.bf16.mxu0 0
        %1675 = vmatpush2.bf16.msra.mxu0 0
        %1676 = vmatprep.subr.bf16.mxu0 0
        %1677 = vmatpush2.bf16.msra.mxu0 0
        %1678 = vmatprep.mubr.bf16.mxu0 0
        %1679 = vmatmul.mubr.bf16.gmra.mxu0 %v1644
        %v1680 = vpop.f32.mrf.mxu0
        %v1681 = vadd.f32 0.0, %v1680
        %v1682 = vpop.f32.mrf.mxu0
        %v1683 = vadd.f32 0.0, %v1682
        %v1684 = vpop.f32.mrf.mxu0
        %v1685 = vpop.f32.mrf.mxu0
        %1686 = vdwg.mxu0
        %1687 = vmatprep.subr.bf16.mxu0 0
        %1688 = vmatpush1.bf16.msra.mxu0 0
        %1689 = vmatprep.subr.bf16.mxu0 0
        %1690 = vmatpush1.bf16.msra.mxu0 0
        %1691 = vmatprep.subr.bf16.mxu0 0
        %1692 = vmatpush1.bf16.msra.mxu0 0
        %1693 = vmatprep.subr.bf16.mxu0 0
        %1694 = vmatpush1.bf16.msra.mxu0 0
        %1695 = vmatprep.subr.bf16.mxu0 0
        %1696 = vmatpush1.bf16.msra.mxu0 0
        %1697 = vmatprep.subr.bf16.mxu0 0
        %1698 = vmatpush1.bf16.msra.mxu0 0
        %1699 = vmatprep.subr.bf16.mxu0 0
        %1700 = vmatpush1.bf16.msra.mxu0 0
        %1701 = vmatprep.subr.bf16.mxu0 %v1638
        %1702 = vmatpush1.bf16.msra.mxu0 %v1637
        %1703 = vmatprep.subr.bf16.mxu0 0
        %1704 = vmatpush2.bf16.msra.mxu0 0
        %1705 = vmatprep.subr.bf16.mxu0 0
        %1706 = vmatpush2.bf16.msra.mxu0 0
        %1707 = vmatprep.subr.bf16.mxu0 0
        %1708 = vmatpush2.bf16.msra.mxu0 0
        %1709 = vmatprep.subr.bf16.mxu0 0
        %1710 = vmatpush2.bf16.msra.mxu0 0
        %1711 = vmatprep.subr.bf16.mxu0 0
        %1712 = vmatpush2.bf16.msra.mxu0 0
        %1713 = vmatprep.subr.bf16.mxu0 0
        %1714 = vmatpush2.bf16.msra.mxu0 0
        %1715 = vmatprep.subr.bf16.mxu0 0
        %1716 = vmatpush2.bf16.msra.mxu0 0
        %1717 = vmatprep.subr.bf16.mxu0 0
        %1718 = vmatpush2.bf16.msra.mxu0 0
        %1719 = vmatprep.mubr.bf16.mxu0 0
        %1720 = vmatmul.mubr.bf16.gmra.mxu0 %v1644
        %v1721 = vpop.f32.mrf.mxu0
        %v1722 = vadd.f32 0.0, %v1721
        %v1723 = vpop.f32.mrf.mxu0
        %v1724 = vadd.f32 0.0, %v1723
        %v1725 = vpop.f32.mrf.mxu0
        %v1726 = vpop.f32.mrf.mxu0
        %1727 = vdwg.mxu0
        %1728 = vset.pattern.permute.xlu0 3
        %1729 = vperm.xlu0 %1728, %v399
        %v1730 = vpop.permute.xlu0 %1729
        %v1732 = vmul.f32 %v1681, %v1730
        %v1733 = vmul.f32 %v1683, %v1730
        %v1734 = vmul.f32 %v1722, %v1730
        %v1735 = vmul.f32 %v1724, %v1730
        %1736 = vset.pattern.permute.xlu0 3
        %1737 = vperm.xlu0 %1736, %v398
        %v1738 = vpop.permute.xlu0 %1737
        %v1740 = vmul.f32 %v1738, %v832
        %v1741 = vmul.f32 %v1738, %v833
        %v1742 = vmul.f32 %v1738, %v834
        %v1743 = vmul.f32 %v1738, %v835
        %v1744 = vrot.slane %v1740, 4
        %v1745 = vadd.f32 %v1740, %v1744
        %v1746 = vrot.slane %v1745, 2
        %v1747 = vadd.f32 %v1745, %v1746
        %v1748 = vrot.slane %v1747, 1
        %v1749 = vadd.f32 %v1747, %v1748
        %v1750 = vrot.slane %v1741, 4
        %v1751 = vadd.f32 %v1741, %v1750
        %v1752 = vrot.slane %v1751, 2
        %v1753 = vadd.f32 %v1751, %v1752
        %v1754 = vrot.slane %v1753, 1
        %v1755 = vadd.f32 %v1753, %v1754
        %v1756 = vrot.slane %v1742, 4
        %v1757 = vadd.f32 %v1742, %v1756
        %v1758 = vrot.slane %v1757, 2
        %v1759 = vadd.f32 %v1757, %v1758
        %v1760 = vrot.slane %v1759, 1
        %v1761 = vadd.f32 %v1759, %v1760
        %v1762 = vrot.slane %v1743, 4
        %v1763 = vadd.f32 %v1743, %v1762
        %v1764 = vrot.slane %v1763, 2
        %v1765 = vadd.f32 %v1763, %v1764
        %v1766 = vrot.slane %v1765, 1
        %v1767 = vadd.f32 %v1765, %v1766
        %v1768 = vmul.f32 %v1732, %v1732
        %v1769 = vmul.f32 %v1733, %v1733
        %v1770 = vmul.f32 %v1734, %v1734
        %v1771 = vmul.f32 %v1735, %v1735
        %v1772 = vrot.slane %v1768, 4
        %v1773 = vadd.f32 %v1768, %v1772
        %v1774 = vrot.slane %v1773, 2
        %v1775 = vadd.f32 %v1773, %v1774
        %v1776 = vrot.slane %v1775, 1
        %v1777 = vadd.f32 %v1775, %v1776
        %v1778 = vrot.slane %v1769, 4
        %v1779 = vadd.f32 %v1769, %v1778
        %v1780 = vrot.slane %v1779, 2
        %v1781 = vadd.f32 %v1779, %v1780
        %v1782 = vrot.slane %v1781, 1
        %v1783 = vadd.f32 %v1781, %v1782
        %v1784 = vrot.slane %v1770, 4
        %v1785 = vadd.f32 %v1770, %v1784
        %v1786 = vrot.slane %v1785, 2
        %v1787 = vadd.f32 %v1785, %v1786
        %v1788 = vrot.slane %v1787, 1
        %v1789 = vadd.f32 %v1787, %v1788
        %v1790 = vrot.slane %v1771, 4
        %v1791 = vadd.f32 %v1771, %v1790
        %v1792 = vrot.slane %v1791, 2
        %v1793 = vadd.f32 %v1791, %v1792
        %v1794 = vrot.slane %v1793, 1
        %v1795 = vadd.f32 %v1793, %v1794
        %v1796 = vrsqrt.pop %v1777
        %v1797 = vmul.f32 %v1777, %v1796
        %vm1798 = vcmp.eq.f32.partialorder %v1777, inf
        %v1799 = vsel %vm1798, %v1777, %v1797
        %vm1800 = vcmp.eq.f32.partialorder %v1777, 0.0
        %v1801 = vand.u32 %v1777, 2147483648
        %v1802 = vsel %vm1800, %v1801, %v1799
        %v1803 = vrsqrt.pop %v1783
        %v1804 = vmul.f32 %v1783, %v1803
        %vm1805 = vcmp.eq.f32.partialorder %v1783, inf
        %v1806 = vsel %vm1805, %v1783, %v1804
        %vm1807 = vcmp.eq.f32.partialorder %v1783, 0.0
        %v1808 = vand.u32 %v1783, 2147483648
        %v1809 = vsel %vm1807, %v1808, %v1806
        %v1810 = vrsqrt.pop %v1789
        %v1811 = vmul.f32 %v1789, %v1810
        %vm1812 = vcmp.eq.f32.partialorder %v1789, inf
        %v1813 = vsel %vm1812, %v1789, %v1811
        %vm1814 = vcmp.eq.f32.partialorder %v1789, 0.0
        %v1815 = vand.u32 %v1789, 2147483648
        %v1816 = vsel %vm1814, %v1815, %v1813
        %v1817 = vrsqrt.pop %v1795
        %v1818 = vmul.f32 %v1795, %v1817
        %vm1819 = vcmp.eq.f32.partialorder %v1795, inf
        %v1820 = vsel %vm1819, %v1795, %v1818
        %vm1821 = vcmp.eq.f32.partialorder %v1795, 0.0
        %v1822 = vand.u32 %v1795, 2147483648
        %v1823 = vsel %vm1821, %v1822, %v1820
        %v1824 = vadd.f32 %v1802, 1e-08
        %v1825 = vadd.f32 %v1809, 1e-08
        %v1826 = vadd.f32 %v1816, 1e-08
        %v1827 = vadd.f32 %v1823, 1e-08
        %v1828 = vrcp.pop %v1824
        %v1829 = vrcp.pop %v1825
        %v1830 = vrcp.pop %v1826
        %v1831 = vrcp.pop %v1827
        %v1832 = vrsqrt.pop %v1749
        %v1833 = vmul.f32 %v1749, %v1832
        %vm1834 = vcmp.eq.f32.partialorder %v1749, inf
        %v1835 = vsel %vm1834, %v1749, %v1833
        %vm1836 = vcmp.eq.f32.partialorder %v1749, 0.0
        %v1837 = vand.u32 %v1749, 2147483648
        %v1838 = vsel %vm1836, %v1837, %v1835
        %v1839 = vrsqrt.pop %v1755
        %v1840 = vmul.f32 %v1755, %v1839
        %vm1841 = vcmp.eq.f32.partialorder %v1755, inf
        %v1842 = vsel %vm1841, %v1755, %v1840
        %vm1843 = vcmp.eq.f32.partialorder %v1755, 0.0
        %v1844 = vand.u32 %v1755, 2147483648
        %v1845 = vsel %vm1843, %v1844, %v1842
        %v1846 = vrsqrt.pop %v1761
        %v1847 = vmul.f32 %v1761, %v1846
        %vm1848 = vcmp.eq.f32.partialorder %v1761, inf
        %v1849 = vsel %vm1848, %v1761, %v1847
        %vm1850 = vcmp.eq.f32.partialorder %v1761, 0.0
        %v1851 = vand.u32 %v1761, 2147483648
        %v1852 = vsel %vm1850, %v1851, %v1849
        %v1853 = vrsqrt.pop %v1767
        %v1854 = vmul.f32 %v1767, %v1853
        %vm1855 = vcmp.eq.f32.partialorder %v1767, inf
        %v1856 = vsel %vm1855, %v1767, %v1854
        %vm1857 = vcmp.eq.f32.partialorder %v1767, 0.0
        %v1858 = vand.u32 %v1767, 2147483648
        %v1859 = vsel %vm1857, %v1858, %v1856
        %v1860 = vmul.f32 %v1838, 0.1
        %v1861 = vmul.f32 %v1845, 0.1
        %v1862 = vmul.f32 %v1852, 0.1
        %v1863 = vmul.f32 %v1859, 0.1
        %v1864 = vmul.f32 %v1860, %v1828
        %v1865 = vmul.f32 %v1861, %v1829
        %v1866 = vmul.f32 %v1862, %v1830
        %v1867 = vmul.f32 %v1863, %v1831
        %v1868 = vmul.f32 %v1864, %v1732
        %v1869 = vmul.f32 %v1865, %v1733
        %v1870 = vmul.f32 %v1866, %v1734
        %v1871 = vmul.f32 %v1867, %v1735
        %v1872 = vadd.f32 %v1613, %v1868
        %v1873 = vadd.f32 %v1614, %v1869
        %v1874 = vadd.f32 %v1615, %v1870
        %v1875 = vadd.f32 %v1616, %v1871
        %v1876 = vxor.u32 %v1872, 2147483648
        %v1877 = vxor.u32 %v1873, 2147483648
        %v1878 = vmul.f32 %v1876, 1.442695
        %v1879 = vpow.pop %v1878
        %v1880 = vmul.f32 %v1877, 1.442695
        %v1881 = vpow.pop %v1880
        %v1882 = vadd.f32 %v1879, 1.0
        %v1883 = vadd.f32 %v1881, 1.0
        %v1884 = vrcp.pop %v1882
        %v1885 = vmul.f32 1.0, %v1884
        %v1886 = vrcp.pop %v1883
        %v1887 = vmul.f32 1.0, %v1886
        %v1888 = vmul.f32 %v1872, %v1885
        %v1889 = vmul.f32 %v1873, %v1887
        %v1890 = vmul.f32 %v1888, %v1874
        %v1891 = vmul.f32 %v1889, %v1875
        %v1892 = vpack.c.bf16 %v1890, %v1890
        %v1893 = vpack.c.bf16 %v1891, %v1891
        %v1894 = vld [vmem:[#allocation4] sm:$0xff]
        %v1895 = vld [vmem:[#allocation4 + $0x8] sm:$0xff]
        %v1896 = vld [vmem:[%s353] sm:$0xff]
        %v1897 = vld [vmem:[%s353 + $0x8] sm:$0xff]
        %v1898 = vld [vmem:[%s353 + $0x10] sm:$0xff]
        %v1899 = vld [vmem:[%s353 + $0x18] sm:$0xff]
        %v1900 = vld [vmem:[%s353 + $0x20] sm:$0xff]
        %v1901 = vld [vmem:[%s353 + $0x28] sm:$0xff]
        %v1902 = vld [vmem:[%s353 + $0x30] sm:$0xff]
        %v1903 = vld [vmem:[%s353 + $0x38] sm:$0xff]
        %v1904 = vld [vmem:[%s353 + $0x40] sm:$0xff]
        %v1905 = vld [vmem:[%s353 + $0x48] sm:$0xff]
        %v1906 = vld [vmem:[%s353 + $0x50] sm:$0xff]
        %v1907 = vld [vmem:[%s353 + $0x58] sm:$0xff]
        %v1908 = vld [vmem:[%s353 + $0x60] sm:$0xff]
        %v1909 = vld [vmem:[%s353 + $0x68] sm:$0xff]
        %v1910 = vld [vmem:[%s353 + $0x70] sm:$0xff]
        %v1911 = vld [vmem:[%s353 + $0x78] sm:$0xff]
        %v1912 = vld [vmem:[%s353 + $0x80] sm:$0xff]
        %v1913 = vld [vmem:[%s353 + $0x88] sm:$0xff]
        %v1914 = vld [vmem:[%s353 + $0x90] sm:$0xff]
        %v1915 = vld [vmem:[%s353 + $0x98] sm:$0xff]
        %v1916 = vld [vmem:[%s353 + $0xa0] sm:$0xff]
        %v1917 = vld [vmem:[%s353 + $0xa8] sm:$0xff]
        %v1918 = vld [vmem:[%s353 + $0xb0] sm:$0xff]
        %v1919 = vld [vmem:[%s353 + $0xb8] sm:$0xff]
        %v1920 = vld [vmem:[%s353 + $0xc0] sm:$0xff]
        %v1921 = vld [vmem:[%s353 + $0xc8] sm:$0xff]
        %v1922 = vld [vmem:[%s353 + $0xd0] sm:$0xff]
        %v1923 = vld [vmem:[%s353 + $0xd8] sm:$0xff]
        %v1924 = vld [vmem:[%s353 + $0xe0] sm:$0xff]
        %v1925 = vld [vmem:[%s353 + $0xe8] sm:$0xff]
        %v1926 = vld [vmem:[%s353 + $0xf0] sm:$0xff]
        %v1927 = vld [vmem:[%s353 + $0xf8] sm:$0xff]
        %v1960 = vunpack.c.l.b16 %v1896
        %v1961 = vunpack.c.h.b16 %v1896
        %v1962 = vunpack.c.l.b16 %v1897
        %v1963 = vunpack.c.h.b16 %v1897
        %v1964 = vunpack.c.l.b16 %v1898
        %v1965 = vunpack.c.h.b16 %v1898
        %v1966 = vunpack.c.l.b16 %v1899
        %v1967 = vunpack.c.h.b16 %v1899
        %v1968 = vunpack.c.l.b16 %v1900
        %v1969 = vunpack.c.h.b16 %v1900
        %v1970 = vunpack.c.l.b16 %v1901
        %v1971 = vunpack.c.h.b16 %v1901
        %v1972 = vunpack.c.l.b16 %v1902
        %v1973 = vunpack.c.h.b16 %v1902
        %v1974 = vunpack.c.l.b16 %v1903
        %v1975 = vunpack.c.h.b16 %v1903
        %v1976 = vunpack.c.l.b16 %v1904
        %v1977 = vunpack.c.h.b16 %v1904
        %v1978 = vunpack.c.l.b16 %v1905
        %v1979 = vunpack.c.h.b16 %v1905
        %v1980 = vunpack.c.l.b16 %v1906
        %v1981 = vunpack.c.h.b16 %v1906
        %v1982 = vunpack.c.l.b16 %v1907
        %v1983 = vunpack.c.h.b16 %v1907
        %v1984 = vunpack.c.l.b16 %v1908
        %v1985 = vunpack.c.h.b16 %v1908
        %v1986 = vunpack.c.l.b16 %v1909
        %v1987 = vunpack.c.h.b16 %v1909
        %v1988 = vunpack.c.l.b16 %v1910
        %v1989 = vunpack.c.h.b16 %v1910
        %v1990 = vunpack.c.l.b16 %v1911
        %v1991 = vunpack.c.h.b16 %v1911
        %v1992 = vunpack.c.l.b16 %v1912
        %v1993 = vunpack.c.h.b16 %v1912
        %v1994 = vunpack.c.l.b16 %v1913
        %v1995 = vunpack.c.h.b16 %v1913
        %v1996 = vunpack.c.l.b16 %v1914
        %v1997 = vunpack.c.h.b16 %v1914
        %v1998 = vunpack.c.l.b16 %v1915
        %v1999 = vunpack.c.h.b16 %v1915
        %v2000 = vunpack.c.l.b16 %v1916
        %v2001 = vunpack.c.h.b16 %v1916
        %v2002 = vunpack.c.l.b16 %v1917
        %v2003 = vunpack.c.h.b16 %v1917
        %v2004 = vunpack.c.l.b16 %v1918
        %v2005 = vunpack.c.h.b16 %v1918
        %v2006 = vunpack.c.l.b16 %v1919
        %v2007 = vunpack.c.h.b16 %v1919
        %v2008 = vunpack.c.l.b16 %v1920
        %v2009 = vunpack.c.h.b16 %v1920
        %v2010 = vunpack.c.l.b16 %v1921
        %v2011 = vunpack.c.h.b16 %v1921
        %v2012 = vunpack.c.l.b16 %v1922
        %v2013 = vunpack.c.h.b16 %v1922
        %v2014 = vunpack.c.l.b16 %v1923
        %v2015 = vunpack.c.h.b16 %v1923
        %v2016 = vunpack.c.l.b16 %v1924
        %v2017 = vunpack.c.h.b16 %v1924
        %v2018 = vunpack.c.l.b16 %v1925
        %v2019 = vunpack.c.h.b16 %v1925
        %v2020 = vunpack.c.l.b16 %v1926
        %v2021 = vunpack.c.h.b16 %v1926
        %v2022 = vunpack.c.l.b16 %v1927
        %v2023 = vunpack.c.h.b16 %v1927
        %v2024 = vpack.c.b16 %v1962, %v1960
        %v2025 = vpack.c.b16 %v1963, %v1961
        %v2026 = vpack.c.b16 %v1966, %v1964
        %v2027 = vpack.c.b16 %v1967, %v1965
        %v2028 = vpack.c.b16 %v1970, %v1968
        %v2029 = vpack.c.b16 %v1971, %v1969
        %v2030 = vpack.c.b16 %v1974, %v1972
        %v2031 = vpack.c.b16 %v1975, %v1973
        %v2032 = vpack.c.b16 %v1978, %v1976
        %v2033 = vpack.c.b16 %v1979, %v1977
        %v2034 = vpack.c.b16 %v1982, %v1980
        %v2035 = vpack.c.b16 %v1983, %v1981
        %v2036 = vpack.c.b16 %v1986, %v1984
        %v2037 = vpack.c.b16 %v1987, %v1985
        %v2038 = vpack.c.b16 %v1990, %v1988
        %v2039 = vpack.c.b16 %v1991, %v1989
        %v2040 = vpack.c.b16 %v1994, %v1992
        %v2041 = vpack.c.b16 %v1995, %v1993
        %v2042 = vpack.c.b16 %v1998, %v1996
        %v2043 = vpack.c.b16 %v1999, %v1997
        %v2044 = vpack.c.b16 %v2002, %v2000
        %v2045 = vpack.c.b16 %v2003, %v2001
        %v2046 = vpack.c.b16 %v2006, %v2004
        %v2047 = vpack.c.b16 %v2007, %v2005
        %v2048 = vpack.c.b16 %v2010, %v2008
        %v2049 = vpack.c.b16 %v2011, %v2009
        %v2050 = vpack.c.b16 %v2014, %v2012
        %v2051 = vpack.c.b16 %v2015, %v2013
        %v2052 = vpack.c.b16 %v2018, %v2016
        %v2053 = vpack.c.b16 %v2019, %v2017
        %v2054 = vpack.c.b16 %v2022, %v2020
        %v2055 = vpack.c.b16 %v2023, %v2021
        %2088 = vmatprep.subr.bf16.mxu0 %v2039
        %2089 = vmatpush1.bf16.msra.mxu0 %v2038
        %2090 = vmatprep.subr.bf16.mxu0 %v2037
        %2091 = vmatpush1.bf16.msra.mxu0 %v2036
        %2092 = vmatprep.subr.bf16.mxu0 %v2035
        %2093 = vmatpush1.bf16.msra.mxu0 %v2034
        %2094 = vmatprep.subr.bf16.mxu0 %v2033
        %2095 = vmatpush1.bf16.msra.mxu0 %v2032
        %2096 = vmatprep.subr.bf16.mxu0 %v2031
        %2097 = vmatpush1.bf16.msra.mxu0 %v2030
        %2098 = vmatprep.subr.bf16.mxu0 %v2029
        %2099 = vmatpush1.bf16.msra.mxu0 %v2028
        %2100 = vmatprep.subr.bf16.mxu0 %v2027
        %2101 = vmatpush1.bf16.msra.mxu0 %v2026
        %2102 = vmatprep.subr.bf16.mxu0 %v2025
        %2103 = vmatpush1.bf16.msra.mxu0 %v2024
        %2104 = vmatprep.subr.bf16.mxu0 %v2055
        %2105 = vmatpush2.bf16.msra.mxu0 %v2054
        %2106 = vmatprep.subr.bf16.mxu0 %v2053
        %2107 = vmatpush2.bf16.msra.mxu0 %v2052
        %2108 = vmatprep.subr.bf16.mxu0 %v2051
        %2109 = vmatpush2.bf16.msra.mxu0 %v2050
        %2110 = vmatprep.subr.bf16.mxu0 %v2049
        %2111 = vmatpush2.bf16.msra.mxu0 %v2048
        %2112 = vmatprep.subr.bf16.mxu0 %v2047
        %2113 = vmatpush2.bf16.msra.mxu0 %v2046
        %2114 = vmatprep.subr.bf16.mxu0 %v2045
        %2115 = vmatpush2.bf16.msra.mxu0 %v2044
        %2116 = vmatprep.subr.bf16.mxu0 %v2043
        %2117 = vmatpush2.bf16.msra.mxu0 %v2042
        %2118 = vmatprep.subr.bf16.mxu0 %v2041
        %2119 = vmatpush2.bf16.msra.mxu0 %v2040
        %2120 = vmatprep.mubr.bf16.mxu0 %v1893
        %2121 = vmatmul.mubr.bf16.gmra.mxu0 %v1892
        %v2122 = vpop.f32.mrf.mxu0
        %v2123 = vadd.f32 0.0, %v2122
        %v2124 = vpop.f32.mrf.mxu0
        %v2125 = vadd.f32 0.0, %v2124
        %v2126 = vpop.f32.mrf.mxu0
        %v2127 = vpop.f32.mrf.mxu0
        %2128 = vdwg.mxu0
        %v2129 = vadd.f32 %v1894, %v2123
        %v2130 = vadd.f32 %v1895, %v2125
        %2131 = vst [vmem:[#allocation4] sm:$0xff] %v2129
        %2132 = vst [vmem:[#allocation4 + $0x8] sm:$0xff] %v2130
        %p2133 = scmp.eq.s32.totalorder %s26, 1
        // Predicated region
        $region69: #{tpu_custom_call.1} parent=51 // pred_check
          %p2134 = pneg %p2133
        $region70: #{tpu_custom_call.1} parent=51 // pred_check_branch
          %2136 = sbr.rel (%p2134) target = $region72
        $region71: #{tpu_custom_call.1} parent=51 // pred_region
          %v2137 = vld [vmem:[#allocation4] sm:$0xff]
          %v2138 = vld [vmem:[#allocation4 + $0x8] sm:$0xff]
          %v2139 = vmul.f32 %v2137, %v2137
          %v2140 = vpack.c.bf16 %v2138, %v2138
          %v2141 = vld [vmem:[%s7] sm:$0xf]
          %vm2142 = vcmask 64512
          %v2144 = vsel %vm2142, %v2140, 0
          %vm2146 = vcmask 1043456
          %v2148 = vsel %vm2146, %v2141, 0
          %2150 = vmatprep.subr.bf16.mxu0 0
          %2151 = vmatpush1.bf16.msra.mxu0 0
          %2152 = vmatprep.subr.bf16.mxu0 0
          %2153 = vmatpush1.bf16.msra.mxu0 0
          %2154 = vmatprep.subr.bf16.mxu0 0
          %2155 = vmatpush1.bf16.msra.mxu0 0
          %2156 = vmatprep.subr.bf16.mxu0 0
          %2157 = vmatpush1.bf16.msra.mxu0 0
          %2158 = vmatprep.subr.bf16.mxu0 0
          %2159 = vmatpush1.bf16.msra.mxu0 0
          %2160 = vmatprep.subr.bf16.mxu0 0
          %2161 = vmatpush1.bf16.msra.mxu0 0
          %2162 = vmatprep.subr.bf16.mxu0 0
          %2163 = vmatpush1.bf16.msra.mxu0 0
          %2164 = vmatprep.subr.bf16.mxu0 0
          %2165 = vmatpush1.bf16.msra.mxu0 %v2148
          %2166 = vmatprep.subr.bf16.mxu0 0
          %2167 = vmatpush2.bf16.msra.mxu0 0
          %2168 = vmatprep.subr.bf16.mxu0 0
          %2169 = vmatpush2.bf16.msra.mxu0 0
          %2170 = vmatprep.subr.bf16.mxu0 0
          %2171 = vmatpush2.bf16.msra.mxu0 0
          %2172 = vmatprep.subr.bf16.mxu0 0
          %2173 = vmatpush2.bf16.msra.mxu0 0
          %2174 = vmatprep.subr.bf16.mxu0 0
          %2175 = vmatpush2.bf16.msra.mxu0 0
          %2176 = vmatprep.subr.bf16.mxu0 0
          %2177 = vmatpush2.bf16.msra.mxu0 0
          %2178 = vmatprep.subr.bf16.mxu0 0
          %2179 = vmatpush2.bf16.msra.mxu0 0
          %2180 = vmatprep.subr.bf16.mxu0 0
          %2181 = vmatpush2.bf16.msra.mxu0 0
          %2182 = vmatprep.mubr.bf16.mxu0 0
          %2183 = vmatmul.mubr.bf16.gmra.mxu0 %v2144
          %v2184 = vpop.f32.mrf.mxu0
          %v2185 = vadd.f32 0.0, %v2184
          %v2186 = vpop.f32.mrf.mxu0
          %v2187 = vpop.f32.mrf.mxu0
          %v2188 = vpop.f32.mrf.mxu0
          %2189 = vdwg.mxu0
          %v2190 = vmul.f32 %v2185, %v951
          %v2191 = vmul.f32 %v960, %v2139
          %v2192 = vrot.slane %v2191, 4
          %v2193 = vadd.f32 %v2191, %v2192
          %v2194 = vrot.slane %v2193, 2
          %v2195 = vadd.f32 %v2193, %v2194
          %v2196 = vrot.slane %v2195, 1
          %v2197 = vadd.f32 %v2195, %v2196
          %v2198 = vmul.f32 %v2190, %v2190
          %v2199 = vrot.slane %v2198, 4
          %v2200 = vadd.f32 %v2198, %v2199
          %v2201 = vrot.slane %v2200, 2
          %v2202 = vadd.f32 %v2200, %v2201
          %v2203 = vrot.slane %v2202, 1
          %v2204 = vadd.f32 %v2202, %v2203
          %v2205 = vrsqrt.pop %v2204
          %v2206 = vmul.f32 %v2204, %v2205
          %vm2207 = vcmp.eq.f32.partialorder %v2204, inf
          %v2208 = vsel %vm2207, %v2204, %v2206
          %vm2209 = vcmp.eq.f32.partialorder %v2204, 0.0
          %v2210 = vand.u32 %v2204, 2147483648
          %v2211 = vsel %vm2209, %v2210, %v2208
          %v2212 = vadd.f32 %v2211, 1e-08
          %v2213 = vrcp.pop %v2212
          %v2214 = vrsqrt.pop %v2197
          %v2215 = vmul.f32 %v2197, %v2214
          %vm2216 = vcmp.eq.f32.partialorder %v2197, inf
          %v2217 = vsel %vm2216, %v2197, %v2215
          %vm2218 = vcmp.eq.f32.partialorder %v2197, 0.0
          %v2219 = vand.u32 %v2197, 2147483648
          %v2220 = vsel %vm2218, %v2219, %v2217
          %v2221 = vmul.f32 %v2220, 0.1
          %v2222 = vmul.f32 %v2221, %v2213
          %v2223 = vmul.f32 %v2222, %v2190
          %v2224 = vadd.f32 %v2137, %v2223
          %v2225 = vld [vmem:[%s7 + $0x4] sm:$0xf]
          %2227 = vrot.lane.b32.xlu0 %v2140, 120
          %v2228 = vpop.permute.xlu0 %2227
          %v2230 = vsel %vm2142, %v2228, 0
          %v2233 = vsel %vm2146, %v2225, 0
          %2235 = vmatprep.subr.bf16.mxu0 0
          %2236 = vmatpush1.bf16.msra.mxu0 0
          %2237 = vmatprep.subr.bf16.mxu0 0
          %2238 = vmatpush1.bf16.msra.mxu0 0
          %2239 = vmatprep.subr.bf16.mxu0 0
          %2240 = vmatpush1.bf16.msra.mxu0 0
          %2241 = vmatprep.subr.bf16.mxu0 0
          %2242 = vmatpush1.bf16.msra.mxu0 0
          %2243 = vmatprep.subr.bf16.mxu0 0
          %2244 = vmatpush1.bf16.msra.mxu0 0
          %2245 = vmatprep.subr.bf16.mxu0 0
          %2246 = vmatpush1.bf16.msra.mxu0 0
          %2247 = vmatprep.subr.bf16.mxu0 0
          %2248 = vmatpush1.bf16.msra.mxu0 0
          %2249 = vmatprep.subr.bf16.mxu0 0
          %2250 = vmatpush1.bf16.msra.mxu0 %v2233
          %2251 = vmatprep.subr.bf16.mxu0 0
          %2252 = vmatpush2.bf16.msra.mxu0 0
          %2253 = vmatprep.subr.bf16.mxu0 0
          %2254 = vmatpush2.bf16.msra.mxu0 0
          %2255 = vmatprep.subr.bf16.mxu0 0
          %2256 = vmatpush2.bf16.msra.mxu0 0
          %2257 = vmatprep.subr.bf16.mxu0 0
          %2258 = vmatpush2.bf16.msra.mxu0 0
          %2259 = vmatprep.subr.bf16.mxu0 0
          %2260 = vmatpush2.bf16.msra.mxu0 0
          %2261 = vmatprep.subr.bf16.mxu0 0
          %2262 = vmatpush2.bf16.msra.mxu0 0
          %2263 = vmatprep.subr.bf16.mxu0 0
          %2264 = vmatpush2.bf16.msra.mxu0 0
          %2265 = vmatprep.subr.bf16.mxu0 0
          %2266 = vmatpush2.bf16.msra.mxu0 0
          %2267 = vmatprep.mubr.bf16.mxu0 0
          %2268 = vmatmul.mubr.bf16.gmra.mxu0 %v2230
          %v2269 = vpop.f32.mrf.mxu0
          %v2270 = vadd.f32 0.0, %v2269
          %v2271 = vpop.f32.mrf.mxu0
          %v2272 = vpop.f32.mrf.mxu0
          %v2273 = vpop.f32.mrf.mxu0
          %2274 = vdwg.mxu0
          %v2275 = vmul.f32 %v2270, %v1212
          %v2276 = vmul.f32 %v1220, %v2139
          %v2277 = vrot.slane %v2276, 4
          %v2278 = vadd.f32 %v2276, %v2277
          %v2279 = vrot.slane %v2278, 2
          %v2280 = vadd.f32 %v2278, %v2279
          %v2281 = vrot.slane %v2280, 1
          %v2282 = vadd.f32 %v2280, %v2281
          %v2283 = vmul.f32 %v2275, %v2275
          %v2284 = vrot.slane %v2283, 4
          %v2285 = vadd.f32 %v2283, %v2284
          %v2286 = vrot.slane %v2285, 2
          %v2287 = vadd.f32 %v2285, %v2286
          %v2288 = vrot.slane %v2287, 1
          %v2289 = vadd.f32 %v2287, %v2288
          %v2290 = vrsqrt.pop %v2289
          %v2291 = vmul.f32 %v2289, %v2290
          %vm2292 = vcmp.eq.f32.partialorder %v2289, inf
          %v2293 = vsel %vm2292, %v2289, %v2291
          %vm2294 = vcmp.eq.f32.partialorder %v2289, 0.0
          %v2295 = vand.u32 %v2289, 2147483648
          %v2296 = vsel %vm2294, %v2295, %v2293
          %v2297 = vadd.f32 %v2296, 1e-08
          %v2298 = vrcp.pop %v2297
          %v2299 = vrsqrt.pop %v2282
          %v2300 = vmul.f32 %v2282, %v2299
          %vm2301 = vcmp.eq.f32.partialorder %v2282, inf
          %v2302 = vsel %vm2301, %v2282, %v2300
          %vm2303 = vcmp.eq.f32.partialorder %v2282, 0.0
          %v2304 = vand.u32 %v2282, 2147483648
          %v2305 = vsel %vm2303, %v2304, %v2302
          %v2306 = vmul.f32 %v2305, 0.1
          %v2307 = vmul.f32 %v2306, %v2298
          %v2308 = vmul.f32 %v2307, %v2275
          %v2309 = vadd.f32 %v2224, %v2308
          %v2310 = vld [vmem:[%s7 + $0x8] sm:$0xf]
          %2311 = vrot.lane.b32.xlu0 %v2140, 112
          %v2312 = vpop.permute.xlu0 %2311
          %v2314 = vsel %vm2142, %v2312, 0
          %v2317 = vsel %vm2146, %v2310, 0
          %2319 = vmatprep.subr.bf16.mxu0 0
          %2320 = vmatpush1.bf16.msra.mxu0 0
          %2321 = vmatprep.subr.bf16.mxu0 0
          %2322 = vmatpush1.bf16.msra.mxu0 0
          %2323 = vmatprep.subr.bf16.mxu0 0
          %2324 = vmatpush1.bf16.msra.mxu0 0
          %2325 = vmatprep.subr.bf16.mxu0 0
          %2326 = vmatpush1.bf16.msra.mxu0 0
          %2327 = vmatprep.subr.bf16.mxu0 0
          %2328 = vmatpush1.bf16.msra.mxu0 0
          %2329 = vmatprep.subr.bf16.mxu0 0
          %2330 = vmatpush1.bf16.msra.mxu0 0
          %2331 = vmatprep.subr.bf16.mxu0 0
          %2332 = vmatpush1.bf16.msra.mxu0 0
          %2333 = vmatprep.subr.bf16.mxu0 0
          %2334 = vmatpush1.bf16.msra.mxu0 %v2317
          %2335 = vmatprep.subr.bf16.mxu0 0
          %2336 = vmatpush2.bf16.msra.mxu0 0
          %2337 = vmatprep.subr.bf16.mxu0 0
          %2338 = vmatpush2.bf16.msra.mxu0 0
          %2339 = vmatprep.subr.bf16.mxu0 0
          %2340 = vmatpush2.bf16.msra.mxu0 0
          %2341 = vmatprep.subr.bf16.mxu0 0
          %2342 = vmatpush2.bf16.msra.mxu0 0
          %2343 = vmatprep.subr.bf16.mxu0 0
          %2344 = vmatpush2.bf16.msra.mxu0 0
          %2345 = vmatprep.subr.bf16.mxu0 0
          %2346 = vmatpush2.bf16.msra.mxu0 0
          %2347 = vmatprep.subr.bf16.mxu0 0
          %2348 = vmatpush2.bf16.msra.mxu0 0
          %2349 = vmatprep.subr.bf16.mxu0 0
          %2350 = vmatpush2.bf16.msra.mxu0 0
          %2351 = vmatprep.mubr.bf16.mxu0 0
          %2352 = vmatmul.mubr.bf16.gmra.mxu0 %v2314
          %v2353 = vpop.f32.mrf.mxu0
          %v2354 = vadd.f32 0.0, %v2353
          %v2355 = vpop.f32.mrf.mxu0
          %v2356 = vpop.f32.mrf.mxu0
          %v2357 = vpop.f32.mrf.mxu0
          %2358 = vdwg.mxu0
          %v2359 = vmul.f32 %v2354, %v1471
          %v2360 = vmul.f32 %v1479, %v2139
          %v2361 = vrot.slane %v2360, 4
          %v2362 = vadd.f32 %v2360, %v2361
          %v2363 = vrot.slane %v2362, 2
          %v2364 = vadd.f32 %v2362, %v2363
          %v2365 = vrot.slane %v2364, 1
          %v2366 = vadd.f32 %v2364, %v2365
          %v2367 = vmul.f32 %v2359, %v2359
          %v2368 = vrot.slane %v2367, 4
          %v2369 = vadd.f32 %v2367, %v2368
          %v2370 = vrot.slane %v2369, 2
          %v2371 = vadd.f32 %v2369, %v2370
          %v2372 = vrot.slane %v2371, 1
          %v2373 = vadd.f32 %v2371, %v2372
          %v2374 = vrsqrt.pop %v2373
          %v2375 = vmul.f32 %v2373, %v2374
          %vm2376 = vcmp.eq.f32.partialorder %v2373, inf
          %v2377 = vsel %vm2376, %v2373, %v2375
          %vm2378 = vcmp.eq.f32.partialorder %v2373, 0.0
          %v2379 = vand.u32 %v2373, 2147483648
          %v2380 = vsel %vm2378, %v2379, %v2377
          %v2381 = vadd.f32 %v2380, 1e-08
          %v2382 = vrcp.pop %v2381
          %v2383 = vrsqrt.pop %v2366
          %v2384 = vmul.f32 %v2366, %v2383
          %vm2385 = vcmp.eq.f32.partialorder %v2366, inf
          %v2386 = vsel %vm2385, %v2366, %v2384
          %vm2387 = vcmp.eq.f32.partialorder %v2366, 0.0
          %v2388 = vand.u32 %v2366, 2147483648
          %v2389 = vsel %vm2387, %v2388, %v2386
          %v2390 = vmul.f32 %v2389, 0.1
          %v2391 = vmul.f32 %v2390, %v2382
          %v2392 = vmul.f32 %v2391, %v2359
          %v2393 = vadd.f32 %v2309, %v2392
          %v2394 = vld [vmem:[%s7 + $0xc] sm:$0xf]
          %2395 = vrot.lane.b32.xlu0 %v2140, 104
          %v2396 = vpop.permute.xlu0 %2395
          %v2398 = vsel %vm2142, %v2396, 0
          %v2401 = vsel %vm2146, %v2394, 0
          %2403 = vmatprep.subr.bf16.mxu0 0
          %2404 = vmatpush1.bf16.msra.mxu0 0
          %2405 = vmatprep.subr.bf16.mxu0 0
          %2406 = vmatpush1.bf16.msra.mxu0 0
          %2407 = vmatprep.subr.bf16.mxu0 0
          %2408 = vmatpush1.bf16.msra.mxu0 0
          %2409 = vmatprep.subr.bf16.mxu0 0
          %2410 = vmatpush1.bf16.msra.mxu0 0
          %2411 = vmatprep.subr.bf16.mxu0 0
          %2412 = vmatpush1.bf16.msra.mxu0 0
          %2413 = vmatprep.subr.bf16.mxu0 0
          %2414 = vmatpush1.bf16.msra.mxu0 0
          %2415 = vmatprep.subr.bf16.mxu0 0
          %2416 = vmatpush1.bf16.msra.mxu0 0
          %2417 = vmatprep.subr.bf16.mxu0 0
          %2418 = vmatpush1.bf16.msra.mxu0 %v2401
          %2419 = vmatprep.subr.bf16.mxu0 0
          %2420 = vmatpush2.bf16.msra.mxu0 0
          %2421 = vmatprep.subr.bf16.mxu0 0
          %2422 = vmatpush2.bf16.msra.mxu0 0
          %2423 = vmatprep.subr.bf16.mxu0 0
          %2424 = vmatpush2.bf16.msra.mxu0 0
          %2425 = vmatprep.subr.bf16.mxu0 0
          %2426 = vmatpush2.bf16.msra.mxu0 0
          %2427 = vmatprep.subr.bf16.mxu0 0
          %2428 = vmatpush2.bf16.msra.mxu0 0
          %2429 = vmatprep.subr.bf16.mxu0 0
          %2430 = vmatpush2.bf16.msra.mxu0 0
          %2431 = vmatprep.subr.bf16.mxu0 0
          %2432 = vmatpush2.bf16.msra.mxu0 0
          %2433 = vmatprep.subr.bf16.mxu0 0
          %2434 = vmatpush2.bf16.msra.mxu0 0
          %2435 = vmatprep.mubr.bf16.mxu0 0
          %2436 = vmatmul.mubr.bf16.gmra.mxu0 %v2398
          %v2437 = vpop.f32.mrf.mxu0
          %v2438 = vadd.f32 0.0, %v2437
          %v2439 = vpop.f32.mrf.mxu0
          %v2440 = vpop.f32.mrf.mxu0
          %v2441 = vpop.f32.mrf.mxu0
          %2442 = vdwg.mxu0
          %v2443 = vmul.f32 %v2438, %v1730
          %v2444 = vmul.f32 %v1738, %v2139
          %v2445 = vrot.slane %v2444, 4
          %v2446 = vadd.f32 %v2444, %v2445
          %v2447 = vrot.slane %v2446, 2
          %v2448 = vadd.f32 %v2446, %v2447
          %v2449 = vrot.slane %v2448, 1
          %v2450 = vadd.f32 %v2448, %v2449
          %v2451 = vmul.f32 %v2443, %v2443
          %v2452 = vrot.slane %v2451, 4
          %v2453 = vadd.f32 %v2451, %v2452
          %v2454 = vrot.slane %v2453, 2
          %v2455 = vadd.f32 %v2453, %v2454
          %v2456 = vrot.slane %v2455, 1
          %v2457 = vadd.f32 %v2455, %v2456
          %v2458 = vrsqrt.pop %v2457
          %v2459 = vmul.f32 %v2457, %v2458
          %vm2460 = vcmp.eq.f32.partialorder %v2457, inf
          %v2461 = vsel %vm2460, %v2457, %v2459
          %vm2462 = vcmp.eq.f32.partialorder %v2457, 0.0
          %v2463 = vand.u32 %v2457, 2147483648
          %v2464 = vsel %vm2462, %v2463, %v2461
          %v2465 = vadd.f32 %v2464, 1e-08
          %v2466 = vrcp.pop %v2465
          %v2467 = vrsqrt.pop %v2450
          %v2468 = vmul.f32 %v2450, %v2467
          %vm2469 = vcmp.eq.f32.partialorder %v2450, inf
          %v2470 = vsel %vm2469, %v2450, %v2468
          %vm2471 = vcmp.eq.f32.partialorder %v2450, 0.0
          %v2472 = vand.u32 %v2450, 2147483648
          %v2473 = vsel %vm2471, %v2472, %v2470
          %v2474 = vmul.f32 %v2473, 0.1
          %v2475 = vmul.f32 %v2474, %v2466
          %v2476 = vmul.f32 %v2475, %v2443
          %v2477 = vadd.f32 %v2393, %v2476
          %2478 = vst [vmem:[#allocation11] sm:$0xff] %v2477
        $region72: #{tpu_custom_call.1} parent=51 // pred_fallthru
          _
        // Predicated region
        $region73: #{tpu_custom_call.1} parent=51 // pred_check
          %p2479 = pneg %p222
        $region74: #{tpu_custom_call.1} parent=51 // pred_check_branch
          %2481 = sbr.rel (%p2479) target = $region76
        $region75: #{tpu_custom_call.1} parent=51 // pred_region
          %s2483 = ssub.s32 128, 128
          %2484 = vsyncadd [#allocation7], %s2483
          %s2486 = sshll.u32 [#allocation11], 4
          %s2487 = int_to_ptr.vmem [resolvable:$true] %s2486
          %2489 = dma.vmem_to_hbm [thread:$0]  %s2487, 128, %s8, [#allocation7]
        $region76: #{tpu_custom_call.1} parent=51 // pred_fallthru
          _
        // Predicated region
        $region77: #{tpu_custom_call.1} parent=51 // pred_check
          %p2490 = pneg %p222
        $region78: #{tpu_custom_call.1} parent=51 // pred_check_branch
          %2492 = sbr.rel (%p2490) target = $region80
        $region79: #{tpu_custom_call.1} parent=51 // pred_region
          %2493 = dma.done [#allocation7], 128
        $region80: #{tpu_custom_call.1} parent=51 // pred_fallthru
          _
      $region52: #{tpu_custom_call.1} parent=5 // pred_fallthru
        _
      %p2494 = scmp.le.s32.totalorder 2, %s21
      // Predicated region
      $region81: #{tpu_custom_call.1} parent=5 // pred_check
        %p2495 = pneg %p2494
      $region82: #{tpu_custom_call.1} parent=5 // pred_check_branch
        %2497 = sbr.rel (%p2495) target = $region84
      $region83: #{tpu_custom_call.1} parent=5 // pred_region
        %s2498 = ssub.s32 %s21, 2
      $region84: #{tpu_custom_call.1} parent=5 // pred_fallthru
        _
    $region6: #{tpu_custom_call.1} parent=1 // loop_footer
      %s25 = sadd.s32 1, %s21
    $region7: #{tpu_custom_call.1} parent=1 // loop_footer_branch
      %20 = sbr.rel target = $region3
    $region8: #{tpu_custom_call.1} parent=1 // loop_exit
      _
    %2499 = vsyncpa [#allocation6], 1
    %s2500 = scalar_lea.sflag [#allocation6], 1
    %2501 = vsyncpa %s2500, 1
    %2502 = vsyncpa [#allocation9], 1
    %s2503 = scalar_lea.sflag [#allocation9], 1
    %2504 = vsyncpa %s2503, 1
    %2505 = vsyncpa [#allocation7], 1
    %s2506 = scalar_lea.sflag [#allocation7], 1
    %2507 = vsyncpa %s2506, 1

// kernel: tpu_custom_call.1
$region0: #{tpu_custom_call.1}
  #allocation0 [shape = 'u32[]', space=smem, size = 0x4, offset = 0x4, fixed_abs, tag = 'smem constant byte address 0x4 - core index']
  #allocation1 [shape = 'u32[144,128]{1,0:T(1,128)}', space=vmem, size = 0x12000, scoped, tag = 'internal scratch']
  #allocation2 [shape = 'bf16[8,128]{1,0:T(8,128)(2,1)}', space=vmem, size = 0x800, scoped, tag = 'scratch operand']
  #allocation3 [shape = 'f32[8,64]{1,0:T(8,128)}', space=vmem, size = 0x1000, scoped, tag = 'scratch operand']
  #allocation4 [shape = 'f32[8,256]{1,0:T(8,128)}', space=vmem, size = 0x2000, scoped, tag = 'scratch operand']
  %s0 = inlined_call_operand.vmem [shape: f32[8,128], index: 0, kind: input, shape index: {}]
  %s1 = inlined_call_operand.vmem [shape: f32[8,4], index: 1, kind: input, shape index: {}]
  %s2 = inlined_call_operand.vmem [shape: f32[4,128], index: 2, kind: input, shape index: {}]
  %s3 = inlined_call_operand.vmem [shape: bf16[128,64], index: 3, kind: input, shape index: {}]
  %s4 = inlined_call_operand.hbm [shape: bf16[2,128,512], index: 4, kind: input, shape index: {}]
  %s5 = inlined_call_operand.hbm [shape: bf16[128,512], index: 5, kind: input, shape index: {}]
  %s6 = inlined_call_operand.hbm [shape: bf16[512,256], index: 6, kind: input, shape index: {}]
  %s7 = inlined_call_operand.vmem [shape: bf16[32,128], index: 7, kind: input, shape index: {}]
  %s8 = inlined_call_operand.hbm [shape: f32[8,128], index: 8, kind: output, shape index: {}]
  %s9 = sld [smem:[#allocation0]]
  $region85: #{tpu_custom_call.1} parent=0
    _
  %s11 = ssub.s32 1, %s9
  %s12 = scalar_select 0, %s11, %s9
  $region1: #{tpu_custom_call.1} parent=0
    #allocation5 [shape = 'u8[262144]{0}', space=vmem, size = 0x40000, scoped, tag = 'input window, operand 4']
    #allocation6 [shape = 's32[2]{0}', space=sflag, size = 0x8, scoped, tag = 'scoped memory for tpu_custom_call.1']
    #allocation7 [shape = 's32[2]{0}', space=sflag, size = 0x8, scoped, tag = 'scoped memory for tpu_custom_call.1']
    #allocation8 [shape = 'u8[131072]{0}', space=vmem, size = 0x20000, scoped, tag = 'input window, operand 5']
    #allocation9 [shape = 's32[2]{0}', space=sflag, size = 0x8, scoped, tag = 'scoped memory for tpu_custom_call.1']
    #allocation10 [shape = 'u8[262144]{0}', space=vmem, size = 0x40000, scoped, tag = 'input window, operand 6']
    #allocation11 [shape = 'u8[4096]{0}', space=vmem, size = 0x1000, scoped, tag = 'output window, operand 0, single buffered']
    %13 = vsyncpa [#allocation6], 0
    %s14 = scalar_lea.sflag [#allocation6], 1
    %15 = vsyncpa %s14, 0
    %16 = vsyncpa [#allocation9], 0
    %s17 = scalar_lea.sflag [#allocation9], 1
    %18 = vsyncpa %s17, 0
    %19 = vsyncpa [#allocation7], 0
    loop: start=0, step=1, limit=4
    $region2: #{tpu_custom_call.1} parent=1 // loop_pre_header
      _
    $region3: #{tpu_custom_call.1} parent=1 // loop_header
      %s21 = sphi 0, %s25
      %p22 = scmp.ge.s32.totalorder %s21, 4
      %s29 = sphi 0, %s29
      %s31 = sphi 0, %s29
      %s32 = sphi 0, %s31
      %s46 = sphi 0, %s32
      %s50 = sphi 0, %s50
      %s52 = sphi 0, %s50
      %s53 = sphi 0, %s52
      %s67 = sphi 0, %s53
      %s71 = sphi 0, %s71
      %s73 = sphi 0, %s71
      %s74 = sphi 0, %s73
      %s88 = sphi 0, %s74
      %s92 = sphi 0, %s92
      %s94 = sphi 0, %s92
      %s95 = sphi 0, %s94
      %s109 = sphi 0, %s95
      %s115 = sphi 0, %s117
      %s118 = sphi 0, %s115
      %s119 = sphi 0, %s118
      %s135 = sphi 0, %s119
      %s141 = sphi 0, %s143
      %s144 = sphi 0, %s141
      %s145 = sphi 0, %s144
      %s161 = sphi 0, %s145
      %s167 = sphi 0, %s169
      %s170 = sphi 0, %s167
      %s171 = sphi 0, %s170
      %s187 = sphi 0, %s171
      %s191 = sphi 0, %s191
      %s193 = sphi 0, %s191
      %s194 = sphi 0, %s193
      %s208 = sphi 0, %s194
      %s212 = sphi 0, %s212
      %s214 = sphi 0, %s212
      %s215 = sphi 0, %s214
      %s229 = sphi 0, %s215
    $region4: #{tpu_custom_call.1} parent=1 // loop_header_branch
      %24 = sbr.rel (%p22) target = $region8
    $region5: #{tpu_custom_call.1} parent=1 // loop_body
      %s26 = ssub.s32 %s21, 1
      %s27 = ssub.s32 %s21, 2
      %s28 = sadd.s32 %s21, 1
      %s30 = sadd.s32 %s29, 1
      %p33 = scmp.eq.s32.totalorder %s21, 1
      %p34 = scmp.ne.s32.totalorder %s29, %s31
      %p35 = scmp.eq.s32.totalorder %s21, 0
      %p36 = por %p34, %p35
      %p37 = scmp.ne.s32.totalorder %s29, %s31
      %p38 = scmp.eq.s32.totalorder %s26, 1
      %p39 = por %p37, %p38
      %p40 = scmp.ne.s32.totalorder %s31, %s32
      %p41 = scmp.eq.s32.totalorder %s26, 0
      %p42 = por %p40, %p41
      %p43 = scmp.ne.s32.totalorder %s31, %s32
      %p44 = scmp.eq.s32.totalorder %s27, 1
      %p45 = por %p43, %p44
      %p47 = scmp.ne.s32.totalorder %s32, %s46
      %p48 = scmp.eq.s32.totalorder %s27, 0
      %p49 = por %p47, %p48
      %s51 = sadd.s32 %s50, 1
      %p54 = scmp.eq.s32.totalorder %s21, 1
      %p55 = scmp.ne.s32.totalorder %s50, %s52
      %p56 = scmp.eq.s32.totalorder %s21, 0
      %p57 = por %p55, %p56
      %p58 = scmp.ne.s32.totalorder %s50, %s52
      %p59 = scmp.eq.s32.totalorder %s26, 1
      %p60 = por %p58, %p59
      %p61 = scmp.ne.s32.totalorder %s52, %s53
      %p62 = scmp.eq.s32.totalorder %s26, 0
      %p63 = por %p61, %p62
      %p64 = scmp.ne.s32.totalorder %s52, %s53
      %p65 = scmp.eq.s32.totalorder %s27, 1
      %p66 = por %p64, %p65
      %p68 = scmp.ne.s32.totalorder %s53, %s67
      %p69 = scmp.eq.s32.totalorder %s27, 0
      %p70 = por %p68, %p69
      %s72 = sadd.s32 %s71, 1
      %p75 = scmp.eq.s32.totalorder %s21, 1
      %p76 = scmp.ne.s32.totalorder %s71, %s73
      %p77 = scmp.eq.s32.totalorder %s21, 0
      %p78 = por %p76, %p77
      %p79 = scmp.ne.s32.totalorder %s71, %s73
      %p80 = scmp.eq.s32.totalorder %s26, 1
      %p81 = por %p79, %p80
      %p82 = scmp.ne.s32.totalorder %s73, %s74
      %p83 = scmp.eq.s32.totalorder %s26, 0
      %p84 = por %p82, %p83
      %p85 = scmp.ne.s32.totalorder %s73, %s74
      %p86 = scmp.eq.s32.totalorder %s27, 1
      %p87 = por %p85, %p86
      %p89 = scmp.ne.s32.totalorder %s74, %s88
      %p90 = scmp.eq.s32.totalorder %s27, 0
      %p91 = por %p89, %p90
      %s93 = sadd.s32 %s92, 1
      %p96 = scmp.eq.s32.totalorder %s21, 1
      %p97 = scmp.ne.s32.totalorder %s92, %s94
      %p98 = scmp.eq.s32.totalorder %s21, 0
      %p99 = por %p97, %p98
      %p100 = scmp.ne.s32.totalorder %s92, %s94
      %p101 = scmp.eq.s32.totalorder %s26, 1
      %p102 = por %p100, %p101
      %p103 = scmp.ne.s32.totalorder %s94, %s95
      %p104 = scmp.eq.s32.totalorder %s26, 0
      %p105 = por %p103, %p104
      %p106 = scmp.ne.s32.totalorder %s94, %s95
      %p107 = scmp.eq.s32.totalorder %s27, 1
      %p108 = por %p106, %p107
      %p110 = scmp.ne.s32.totalorder %s95, %s109
      %p111 = scmp.eq.s32.totalorder %s27, 0
      %p112 = por %p110, %p111
      %s113 = ssub.s32 %s21, %s28
      %p114 = scmp.eq.s32.totalorder %s113, 0
      %s116 = sadd.s32 %s115, 1
      %s117 = scalar_select %p114, %s115, %s116
      %p120 = pneg %p114
      %p121 = scmp.eq.s32.totalorder %s21, 1
      %p122 = por %p120, %p121
      %p123 = scmp.ne.s32.totalorder %s115, %s118
      %p124 = scmp.eq.s32.totalorder %s21, 0
      %p125 = por %p123, %p124
      %p126 = scmp.ne.s32.totalorder %s115, %s118
      %p127 = scmp.eq.s32.totalorder %s26, 1
      %p128 = por %p126, %p127
      %p129 = scmp.ne.s32.totalorder %s118, %s119
      %p130 = scmp.eq.s32.totalorder %s26, 0
      %p131 = por %p129, %p130
      %p132 = scmp.ne.s32.totalorder %s118, %s119
      %p133 = scmp.eq.s32.totalorder %s27, 1
      %p134 = por %p132, %p133
      %p136 = scmp.ne.s32.totalorder %s119, %s135
      %p137 = scmp.eq.s32.totalorder %s27, 0
      %p138 = por %p136, %p137
      %s139 = ssub.s32 %s21, %s28
      %p140 = scmp.eq.s32.totalorder %s139, 0
      %s142 = sadd.s32 %s141, 1
      %s143 = scalar_select %p140, %s141, %s142
      %p146 = pneg %p140
      %p147 = scmp.eq.s32.totalorder %s21, 1
      %p148 = por %p146, %p147
      %p149 = scmp.ne.s32.totalorder %s141, %s144
      %p150 = scmp.eq.s32.totalorder %s21, 0
      %p151 = por %p149, %p150
      %p152 = scmp.ne.s32.totalorder %s141, %s144
      %p153 = scmp.eq.s32.totalorder %s26, 1
      %p154 = por %p152, %p153
      %p155 = scmp.ne.s32.totalorder %s144, %s145
      %p156 = scmp.eq.s32.totalorder %s26, 0
      %p157 = por %p155, %p156
      %p158 = scmp.ne.s32.totalorder %s144, %s145
      %p159 = scmp.eq.s32.totalorder %s27, 1
      %p160 = por %p158, %p159
      %p162 = scmp.ne.s32.totalorder %s145, %s161
      %p163 = scmp.eq.s32.totalorder %s27, 0
      %p164 = por %p162, %p163
      %s165 = ssub.s32 %s21, %s28
      %p166 = scmp.eq.s32.totalorder %s165, 0
      %s168 = sadd.s32 %s167, 1
      %s169 = scalar_select %p166, %s167, %s168
      %p172 = pneg %p166
      %p173 = scmp.eq.s32.totalorder %s21, 1
      %p174 = por %p172, %p173
      %p175 = scmp.ne.s32.totalorder %s167, %s170
      %p176 = scmp.eq.s32.totalorder %s21, 0
      %p177 = por %p175, %p176
      %p178 = scmp.ne.s32.totalorder %s167, %s170
      %p179 = scmp.eq.s32.totalorder %s26, 1
      %p180 = por %p178, %p179
      %p181 = scmp.ne.s32.totalorder %s170, %s171
      %p182 = scmp.eq.s32.totalorder %s26, 0
      %p183 = por %p181, %p182
      %p184 = scmp.ne.s32.totalorder %s170, %s171
      %p185 = scmp.eq.s32.totalorder %s27, 1
      %p186 = por %p184, %p185
      %p188 = scmp.ne.s32.totalorder %s171, %s187
      %p189 = scmp.eq.s32.totalorder %s27, 0
      %p190 = por %p188, %p189
      %s192 = sadd.s32 %s191, 1
      %p195 = scmp.eq.s32.totalorder %s21, 1
      %p196 = scmp.ne.s32.totalorder %s191, %s193
      %p197 = scmp.eq.s32.totalorder %s21, 0
      %p198 = por %p196, %p197
      %p199 = scmp.ne.s32.totalorder %s191, %s193
      %p200 = scmp.eq.s32.totalorder %s26, 1
      %p201 = por %p199, %p200
      %p202 = scmp.ne.s32.totalorder %s193, %s194
      %p203 = scmp.eq.s32.totalorder %s26, 0
      %p204 = por %p202, %p203
      %p205 = scmp.ne.s32.totalorder %s193, %s194
      %p206 = scmp.eq.s32.totalorder %s27, 1
      %p207 = por %p205, %p206
      %p209 = scmp.ne.s32.totalorder %s194, %s208
      %p210 = scmp.eq.s32.totalorder %s27, 0
      %p211 = por %p209, %p210
      %s213 = sadd.s32 %s212, 1
      %p216 = scmp.eq.s32.totalorder %s21, 1
      %p217 = scmp.ne.s32.totalorder %s212, %s214
      %p218 = scmp.eq.s32.totalorder %s21, 0
      %p219 = por %p217, %p218
      %p220 = scmp.ne.s32.totalorder %s212, %s214
      %p221 = scmp.eq.s32.totalorder %s26, 1
      %p222 = por %p220, %p221
      %p223 = scmp.ne.s32.totalorder %s214, %s215
      %p224 = scmp.eq.s32.totalorder %s26, 0
      %p225 = por %p223, %p224
      %p226 = scmp.ne.s32.totalorder %s214, %s215
      %p227 = scmp.eq.s32.totalorder %s27, 1
      %p228 = por %p226, %p227
      %p230 = scmp.ne.s32.totalorder %s215, %s229
      %p231 = scmp.eq.s32.totalorder %s27, 0
      %p232 = por %p230, %p231
      %p233 = scmp.le.s32.totalorder 1, %s21
      %p234 = scmp.lt.s32.totalorder %s21, 3
      %p235 = pnand %p233, %p234
      %p236 = pneg %p235
      // Predicated region
      $region9: #{tpu_custom_call.1} parent=5 // pred_check
        _
      $region10: #{tpu_custom_call.1} parent=5 // pred_check_branch
        %238 = sbr.rel (%p235) target = $region12
      $region11: #{tpu_custom_call.1} parent=5 // pred_region
        %s239 = ssub.s32 %s21, 1
        // Predicated region
        $region13: #{tpu_custom_call.1} parent=11 // pred_check
          %p240 = pneg %p42
        $region14: #{tpu_custom_call.1} parent=11 // pred_check_branch
          %242 = sbr.rel (%p240) target = $region16
        $region15: #{tpu_custom_call.1} parent=11 // pred_region
          _
        $region16: #{tpu_custom_call.1} parent=11 // pred_fallthru
          _
        // Predicated region
        $region17: #{tpu_custom_call.1} parent=11 // pred_check
          %p243 = pneg %p63
        $region18: #{tpu_custom_call.1} parent=11 // pred_check_branch
          %245 = sbr.rel (%p243) target = $region20
        $region19: #{tpu_custom_call.1} parent=11 // pred_region
          _
        $region20: #{tpu_custom_call.1} parent=11 // pred_fallthru
          _
        // Predicated region
        $region21: #{tpu_custom_call.1} parent=11 // pred_check
          %p246 = pneg %p84
        $region22: #{tpu_custom_call.1} parent=11 // pred_check_branch
          %248 = sbr.rel (%p246) target = $region24
        $region23: #{tpu_custom_call.1} parent=11 // pred_region
          _
        $region24: #{tpu_custom_call.1} parent=11 // pred_fallthru
          _
        // Predicated region
        $region25: #{tpu_custom_call.1} parent=11 // pred_check
          %p249 = pneg %p105
        $region26: #{tpu_custom_call.1} parent=11 // pred_check_branch
          %251 = sbr.rel (%p249) target = $region28
        $region27: #{tpu_custom_call.1} parent=11 // pred_region
          _
        $region28: #{tpu_custom_call.1} parent=11 // pred_fallthru
          _
        // Predicated region
        $region29: #{tpu_custom_call.1} parent=11 // pred_check
          %p252 = pneg %p204
        $region30: #{tpu_custom_call.1} parent=11 // pred_check_branch
          %254 = sbr.rel (%p252) target = $region32
        $region31: #{tpu_custom_call.1} parent=11 // pred_region
          _
        $region32: #{tpu_custom_call.1} parent=11 // pred_fallthru
          _
      $region12: #{tpu_custom_call.1} parent=5 // pred_fallthru
        _
      %p255 = scmp.lt.s32.totalorder %s21, 2
      // Predicated region
      $region33: #{tpu_custom_call.1} parent=5 // pred_check
        %p256 = pneg %p255
      $region34: #{tpu_custom_call.1} parent=5 // pred_check_branch
        %258 = sbr.rel (%p256) target = $region36
      $region35: #{tpu_custom_call.1} parent=5 // pred_region
        // Predicated region
        $region37: #{tpu_custom_call.1} parent=35 // pred_check
          %p259 = pneg %p125
        $region38: #{tpu_custom_call.1} parent=35 // pred_check_branch
          %261 = sbr.rel (%p259) target = $region40
        $region39: #{tpu_custom_call.1} parent=35 // pred_region
          %s262 = sand.u32 %s115, 1
          %s263 = scalar_lea.sflag [#allocation6], %s262
          %s264 = sand.u32 %s115, 1
          %s265 = smul.addr %s264, 256
          %s266 = scalar_lea.vmem [#allocation5], %s265
          %s268 = ssub.s32 4096, 4096
          %269 = vsyncadd %s263, %s268
          %s270 = smul.addr %s21, 64
          %s271 = smul.addr %s270, 64
          %s272 = scalar_lea.hbm %s4, %s271
          %s273 = sshll.u32 %s266, 4
          %s274 = int_to_ptr.vmem [resolvable:$true] %s273
          %279 = dma.hbm_to_vmem [thread:$0]  %s272, 4096, %s274, %s263, 256, 256, 16
        $region40: #{tpu_custom_call.1} parent=35 // pred_fallthru
          _
        // Predicated region
        $region41: #{tpu_custom_call.1} parent=35 // pred_check
          %p280 = pneg %p151
        $region42: #{tpu_custom_call.1} parent=35 // pred_check_branch
          %282 = sbr.rel (%p280) target = $region44
        $region43: #{tpu_custom_call.1} parent=35 // pred_region
          %s283 = sand.u32 %s21, 1
          %s284 = scalar_lea.sflag [#allocation9], %s283
          %s285 = sand.u32 %s141, 1
          %s286 = smul.addr %s285, 128
          %s287 = scalar_lea.vmem [#allocation8], %s286
          %s288 = smul.u32 8, %s21
          %s290 = ssub.s32 2048, 2048
          %291 = vsyncadd %s284, %s290
          %s292 = smul.addr %s288, 4
          %s293 = smul.addr %s292, 64
          %s294 = scalar_lea.hbm %s5, %s293
          %s295 = sshll.u32 %s287, 4
          %s296 = int_to_ptr.vmem [resolvable:$true] %s295
          %301 = dma.hbm_to_vmem [thread:$0]  %s294, 2048, %s296, %s284, 256, 256, 16
        $region44: #{tpu_custom_call.1} parent=35 // pred_fallthru
          _
        // Predicated region
        $region45: #{tpu_custom_call.1} parent=35 // pred_check
          %p302 = pneg %p177
        $region46: #{tpu_custom_call.1} parent=35 // pred_check_branch
          %304 = sbr.rel (%p302) target = $region48
        $region47: #{tpu_custom_call.1} parent=35 // pred_region
          %s305 = sand.u32 %s21, 1
          %s306 = scalar_lea.sflag [#allocation9], %s305
          %s307 = sand.u32 %s167, 1
          %s308 = smul.addr %s307, 256
          %s309 = scalar_lea.vmem [#allocation10], %s308
          %s310 = smul.u32 32, %s21
          %s312 = ssub.s32 4096, 4096
          %313 = vsyncadd %s306, %s312
          %s314 = smul.addr %s310, 2
          %s315 = smul.addr %s314, 64
          %s316 = scalar_lea.hbm %s6, %s315
          %s317 = sshll.u32 %s309, 4
          %s318 = int_to_ptr.vmem [resolvable:$true] %s317
          %323 = dma.hbm_to_vmem [thread:$0]  %s316, 4096, %s318, %s306, 128, 128, 8
        $region48: #{tpu_custom_call.1} parent=35 // pred_fallthru
          _
      $region36: #{tpu_custom_call.1} parent=5 // pred_fallthru
        _
      %p324 = scmp.le.s32.totalorder 1, %s21
      %p325 = scmp.lt.s32.totalorder %s21, 3
      %p326 = pnand %p324, %p325
      %p327 = pneg %p326
      // Predicated region
      $region49: #{tpu_custom_call.1} parent=5 // pred_check
        _
      $region50: #{tpu_custom_call.1} parent=5 // pred_check_branch
        %329 = sbr.rel (%p326) target = $region52
      $region51: #{tpu_custom_call.1} parent=5 // pred_region
        %s330 = ssub.s32 %s21, 1
        %s331 = sand.u32 %s118, 1
        %s332 = scalar_lea.sflag [#allocation6], %s331
        %s333 = sand.u32 %s118, 1
        %s334 = smul.addr %s333, 256
        %s335 = scalar_lea.vmem [#allocation5], %s334
        // Predicated region
        $region53: #{tpu_custom_call.1} parent=51 // pred_check
          %p336 = pneg %p131
        $region54: #{tpu_custom_call.1} parent=51 // pred_check_branch
          %338 = sbr.rel (%p336) target = $region56
        $region55: #{tpu_custom_call.1} parent=51 // pred_region
          %339 = dma.done %s332, 4096
        $region56: #{tpu_custom_call.1} parent=51 // pred_fallthru
          _
        %s340 = sand.u32 %s26, 1
        %s341 = scalar_lea.sflag [#allocation9], %s340
        %s342 = sand.u32 %s144, 1
        %s343 = smul.addr %s342, 128
        %s344 = scalar_lea.vmem [#allocation8], %s343
        // Predicated region
        $region57: #{tpu_custom_call.1} parent=51 // pred_check
          %p345 = pneg %p157
        $region58: #{tpu_custom_call.1} parent=51 // pred_check_branch
          %347 = sbr.rel (%p345) target = $region60
        $region59: #{tpu_custom_call.1} parent=51 // pred_region
          %348 = dma.done %s341, 2048
        $region60: #{tpu_custom_call.1} parent=51 // pred_fallthru
          _
        %s349 = sand.u32 %s26, 1
        %s350 = scalar_lea.sflag [#allocation9], %s349
        %s351 = sand.u32 %s170, 1
        %s352 = smul.addr %s351, 256
        %s353 = scalar_lea.vmem [#allocation10], %s352
        // Predicated region
        $region61: #{tpu_custom_call.1} parent=51 // pred_check
          %p354 = pneg %p183
        $region62: #{tpu_custom_call.1} parent=51 // pred_check_branch
          %356 = sbr.rel (%p354) target = $region64
        $region63: #{tpu_custom_call.1} parent=51 // pred_region
          %357 = dma.done %s350, 4096
        $region64: #{tpu_custom_call.1} parent=51 // pred_fallthru
          _
        %p358 = pneg %p42
        %p359 = pneg %p39
        %p360 = pneg %p63
        %p361 = pneg %p60
        %p362 = pneg %p84
        %p363 = pneg %p81
        %p364 = pneg %p105
        %p365 = pneg %p102
        %s366 = sand.u32 %s118, 1
        %s367 = scalar_lea.sflag [#allocation6], %s366
        %s368 = sand.u32 %s118, 1
        %s369 = smul.addr %s368, 256
        %s370 = scalar_lea.vmem [#allocation5], %s369
        %p371 = pneg %p131
        %p372 = pneg %p128
        %s373 = sand.u32 %s26, 1
        %s374 = scalar_lea.sflag [#allocation9], %s373
        %s375 = sand.u32 %s144, 1
        %s376 = smul.addr %s375, 128
        %s377 = scalar_lea.vmem [#allocation8], %s376
        %p378 = pneg %p157
        %p379 = pneg %p154
        %s380 = sand.u32 %s26, 1
        %s381 = scalar_lea.sflag [#allocation9], %s380
        %s382 = sand.u32 %s170, 1
        %s383 = smul.addr %s382, 256
        %s384 = scalar_lea.vmem [#allocation10], %s383
        %p385 = pneg %p183
        %p386 = pneg %p180
        %p387 = pneg %p204
        %p388 = pneg %p201
        %p389 = pneg %p225
        %p390 = pneg %p222
        %s391 = smul.u32 8, %s26
        %s392 = smul.u32 32, %s26
        %v394 = vld [vmem:[%s1] sm:$0xff]
        %v395 = vand.u32 2147483647, %v394
        %vm396 = vcmp.gt.f32.partialorder %v395, 1e-06
        %v397 = vsel %vm396, 1, 0
        %v398 = vcvt.s32.f32 %v397
        %v399 = vmul.f32 %v394, %v398
        %p400 = scmp.eq.s32.totalorder %s26, 0
        // Predicated region
        $region65: #{tpu_custom_call.1} parent=51 // pred_check
          %p401 = pneg %p400
        $region66: #{tpu_custom_call.1} parent=51 // pred_check_branch
          %403 = sbr.rel (%p401) target = $region68
        $region67: #{tpu_custom_call.1} parent=51 // pred_region
          %v404 = vld [vmem:[%s0] sm:$0xff]
          %v405 = vld [vmem:[%s2] sm:$0xf]
          %407 = vset.pattern.permute.xlu0 0
          %408 = vperm.xlu0 %407, %v394
          %v409 = vpop.permute.xlu0 %408
          %v411 = vlaneseq
          %v412 = vshrl.u32 %v411, 7
          %v413 = vsub.s32 0, %v412
          %v414 = vrot.slane %v405, %v413
          %v415 = vmul.f32 %v409, %v414
          %v416 = vadd.f32 %v404, %v415
          %417 = vset.pattern.permute.xlu0 1
          %418 = vperm.xlu0 %417, %v394
          %v419 = vpop.permute.xlu0 %418
          %v421 = vlaneseq
          %v422 = vshrl.u32 %v421, 7
          %v423 = vsub.s32 1, %v422
          %v424 = vrot.slane %v405, %v423
          %v425 = vmul.f32 %v419, %v424
          %v426 = vadd.f32 %v416, %v425
          %427 = vset.pattern.permute.xlu0 2
          %428 = vperm.xlu0 %427, %v394
          %v429 = vpop.permute.xlu0 %428
          %v431 = vlaneseq
          %v432 = vshrl.u32 %v431, 7
          %v433 = vsub.s32 2, %v432
          %v434 = vrot.slane %v405, %v433
          %v435 = vmul.f32 %v429, %v434
          %v436 = vadd.f32 %v426, %v435
          %437 = vset.pattern.permute.xlu0 3
          %438 = vperm.xlu0 %437, %v394
          %v439 = vpop.permute.xlu0 %438
          %v441 = vlaneseq
          %v442 = vshrl.u32 %v441, 7
          %v443 = vsub.s32 3, %v442
          %v444 = vrot.slane %v405, %v443
          %v445 = vmul.f32 %v439, %v444
          %v446 = vadd.f32 %v436, %v445
          %v447 = vpack.c.bf16 %v446, %v446
          %448 = vst [vmem:[#allocation2] sm:$0xf] %v447
          %v449 = vld [vmem:[%s3] sm:$0xf]
          %v450 = vld [vmem:[%s3 + $0x4] sm:$0xf]
          %v451 = vld [vmem:[%s3 + $0x8] sm:$0xf]
          %v452 = vld [vmem:[%s3 + $0xc] sm:$0xf]
          %v453 = vld [vmem:[%s3 + $0x10] sm:$0xf]
          %v454 = vld [vmem:[%s3 + $0x14] sm:$0xf]
          %v455 = vld [vmem:[%s3 + $0x18] sm:$0xf]
          %v456 = vld [vmem:[%s3 + $0x1c] sm:$0xf]
          %v457 = vld [vmem:[%s3 + $0x20] sm:$0xf]
          %v458 = vld [vmem:[%s3 + $0x24] sm:$0xf]
          %v459 = vld [vmem:[%s3 + $0x28] sm:$0xf]
          %v460 = vld [vmem:[%s3 + $0x2c] sm:$0xf]
          %v461 = vld [vmem:[%s3 + $0x30] sm:$0xf]
          %v462 = vld [vmem:[%s3 + $0x34] sm:$0xf]
          %v463 = vld [vmem:[%s3 + $0x38] sm:$0xf]
          %v464 = vld [vmem:[%s3 + $0x3c] sm:$0xf]
          %v481 = vunpack.c.l.b16 %v449
          %v482 = vunpack.c.l.b16 %v450
          %v483 = vunpack.c.l.b16 %v451
          %v484 = vunpack.c.l.b16 %v452
          %v485 = vunpack.c.l.b16 %v453
          %v486 = vunpack.c.l.b16 %v454
          %v487 = vunpack.c.l.b16 %v455
          %v488 = vunpack.c.l.b16 %v456
          %v489 = vunpack.c.l.b16 %v457
          %v490 = vunpack.c.l.b16 %v458
          %v491 = vunpack.c.l.b16 %v459
          %v492 = vunpack.c.l.b16 %v460
          %v493 = vunpack.c.l.b16 %v461
          %v494 = vunpack.c.l.b16 %v462
          %v495 = vunpack.c.l.b16 %v463
          %v496 = vunpack.c.l.b16 %v464
          %v497 = vpack.c.b16 %v482, %v481
          %v498 = vpack.c.b16 %v484, %v483
          %v499 = vpack.c.b16 %v486, %v485
          %v500 = vpack.c.b16 %v488, %v487
          %v501 = vpack.c.b16 %v490, %v489
          %v502 = vpack.c.b16 %v492, %v491
          %v503 = vpack.c.b16 %v494, %v493
          %v504 = vpack.c.b16 %v496, %v495
          %513 = vmatprep.subr.bf16.mxu0 0
          %514 = vmatpush1.bf16.msra.mxu0 %v504
          %515 = vmatprep.subr.bf16.mxu0 0
          %516 = vmatpush1.bf16.msra.mxu0 %v503
          %517 = vmatprep.subr.bf16.mxu0 0
          %518 = vmatpush1.bf16.msra.mxu0 %v502
          %519 = vmatprep.subr.bf16.mxu0 0
          %520 = vmatpush1.bf16.msra.mxu0 %v501
          %521 = vmatprep.subr.bf16.mxu0 0
          %522 = vmatpush1.bf16.msra.mxu0 %v500
          %523 = vmatprep.subr.bf16.mxu0 0
          %524 = vmatpush1.bf16.msra.mxu0 %v499
          %525 = vmatprep.subr.bf16.mxu0 0
          %526 = vmatpush1.bf16.msra.mxu0 %v498
          %527 = vmatprep.subr.bf16.mxu0 0
          %528 = vmatpush1.bf16.msra.mxu0 %v497
          %529 = vmatprep.subr.bf16.mxu0 0
          %530 = vmatpush2.bf16.msra.mxu0 0
          %531 = vmatprep.subr.bf16.mxu0 0
          %532 = vmatpush2.bf16.msra.mxu0 0
          %533 = vmatprep.subr.bf16.mxu0 0
          %534 = vmatpush2.bf16.msra.mxu0 0
          %535 = vmatprep.subr.bf16.mxu0 0
          %536 = vmatpush2.bf16.msra.mxu0 0
          %537 = vmatprep.subr.bf16.mxu0 0
          %538 = vmatpush2.bf16.msra.mxu0 0
          %539 = vmatprep.subr.bf16.mxu0 0
          %540 = vmatpush2.bf16.msra.mxu0 0
          %541 = vmatprep.subr.bf16.mxu0 0
          %542 = vmatpush2.bf16.msra.mxu0 0
          %543 = vmatprep.subr.bf16.mxu0 0
          %544 = vmatpush2.bf16.msra.mxu0 0
          %545 = vmatprep.mubr.bf16.mxu0 0
          %546 = vmatmul.mubr.bf16.gmra.mxu0 %v447
          %v547 = vpop.f32.mrf.mxu0
          %v548 = vadd.f32 0.0, %v547
          %v549 = vpop.f32.mrf.mxu0
          %v550 = vpop.f32.mrf.mxu0
          %v551 = vpop.f32.mrf.mxu0
          %552 = vdwg.mxu0
          %vm553 = vcmask 523264
          %554 = vst.msk [vmem:[#allocation3] sm:$0xff] %vm553, %v548
          %555 = vst [vmem:[#allocation4] sm:$0xff] 0.0
          %556 = vst [vmem:[#allocation4 + $0x8] sm:$0xff] 0.0
        $region68: #{tpu_custom_call.1} parent=51 // pred_fallthru
          _
        %v557 = vld [vmem:[#allocation2] sm:$0xf]
        %v558 = vld [vmem:[%s335] sm:$0xff]
        %v559 = vld [vmem:[%s335 + $0x8] sm:$0xff]
        %v560 = vld [vmem:[%s335 + $0x10] sm:$0xff]
        %v561 = vld [vmem:[%s335 + $0x18] sm:$0xff]
        %v562 = vld [vmem:[%s335 + $0x20] sm:$0xff]
        %v563 = vld [vmem:[%s335 + $0x28] sm:$0xff]
        %v564 = vld [vmem:[%s335 + $0x30] sm:$0xff]
        %v565 = vld [vmem:[%s335 + $0x38] sm:$0xff]
        %v566 = vld [vmem:[%s335 + $0x40] sm:$0xff]
        %v567 = vld [vmem:[%s335 + $0x48] sm:$0xff]
        %v568 = vld [vmem:[%s335 + $0x50] sm:$0xff]
        %v569 = vld [vmem:[%s335 + $0x58] sm:$0xff]
        %v570 = vld [vmem:[%s335 + $0x60] sm:$0xff]
        %v571 = vld [vmem:[%s335 + $0x68] sm:$0xff]
        %v572 = vld [vmem:[%s335 + $0x70] sm:$0xff]
        %v573 = vld [vmem:[%s335 + $0x78] sm:$0xff]
        %v574 = vld [vmem:[%s335 + $0x80] sm:$0xff]
        %v575 = vld [vmem:[%s335 + $0x88] sm:$0xff]
        %v576 = vld [vmem:[%s335 + $0x90] sm:$0xff]
        %v577 = vld [vmem:[%s335 + $0x98] sm:$0xff]
        %v578 = vld [vmem:[%s335 + $0xa0] sm:$0xff]
        %v579 = vld [vmem:[%s335 + $0xa8] sm:$0xff]
        %v580 = vld [vmem:[%s335 + $0xb0] sm:$0xff]
        %v581 = vld [vmem:[%s335 + $0xb8] sm:$0xff]
        %v582 = vld [vmem:[%s335 + $0xc0] sm:$0xff]
        %v583 = vld [vmem:[%s335 + $0xc8] sm:$0xff]
        %v584 = vld [vmem:[%s335 + $0xd0] sm:$0xff]
        %v585 = vld [vmem:[%s335 + $0xd8] sm:$0xff]
        %v586 = vld [vmem:[%s335 + $0xe0] sm:$0xff]
        %v587 = vld [vmem:[%s335 + $0xe8] sm:$0xff]
        %v588 = vld [vmem:[%s335 + $0xf0] sm:$0xff]
        %v589 = vld [vmem:[%s335 + $0xf8] sm:$0xff]
        %v622 = vunpack.c.l.b16 %v558
        %v623 = vunpack.c.h.b16 %v558
        %v624 = vunpack.c.l.b16 %v559
        %v625 = vunpack.c.h.b16 %v559
        %v626 = vunpack.c.l.b16 %v560
        %v627 = vunpack.c.h.b16 %v560
        %v628 = vunpack.c.l.b16 %v561
        %v629 = vunpack.c.h.b16 %v561
        %v630 = vunpack.c.l.b16 %v562
        %v631 = vunpack.c.h.b16 %v562
        %v632 = vunpack.c.l.b16 %v563
        %v633 = vunpack.c.h.b16 %v563
        %v634 = vunpack.c.l.b16 %v564
        %v635 = vunpack.c.h.b16 %v564
        %v636 = vunpack.c.l.b16 %v565
        %v637 = vunpack.c.h.b16 %v565
        %v638 = vunpack.c.l.b16 %v566
        %v639 = vunpack.c.h.b16 %v566
        %v640 = vunpack.c.l.b16 %v567
        %v641 = vunpack.c.h.b16 %v567
        %v642 = vunpack.c.l.b16 %v568
        %v643 = vunpack.c.h.b16 %v568
        %v644 = vunpack.c.l.b16 %v569
        %v645 = vunpack.c.h.b16 %v569
        %v646 = vunpack.c.l.b16 %v570
        %v647 = vunpack.c.h.b16 %v570
        %v648 = vunpack.c.l.b16 %v571
        %v649 = vunpack.c.h.b16 %v571
        %v650 = vunpack.c.l.b16 %v572
        %v651 = vunpack.c.h.b16 %v572
        %v652 = vunpack.c.l.b16 %v573
        %v653 = vunpack.c.h.b16 %v573
        %v654 = vunpack.c.l.b16 %v574
        %v655 = vunpack.c.h.b16 %v574
        %v656 = vunpack.c.l.b16 %v575
        %v657 = vunpack.c.h.b16 %v575
        %v658 = vunpack.c.l.b16 %v576
        %v659 = vunpack.c.h.b16 %v576
        %v660 = vunpack.c.l.b16 %v577
        %v661 = vunpack.c.h.b16 %v577
        %v662 = vunpack.c.l.b16 %v578
        %v663 = vunpack.c.h.b16 %v578
        %v664 = vunpack.c.l.b16 %v579
        %v665 = vunpack.c.h.b16 %v579
        %v666 = vunpack.c.l.b16 %v580
        %v667 = vunpack.c.h.b16 %v580
        %v668 = vunpack.c.l.b16 %v581
        %v669 = vunpack.c.h.b16 %v581
        %v670 = vunpack.c.l.b16 %v582
        %v671 = vunpack.c.h.b16 %v582
        %v672 = vunpack.c.l.b16 %v583
        %v673 = vunpack.c.h.b16 %v583
        %v674 = vunpack.c.l.b16 %v584
        %v675 = vunpack.c.h.b16 %v584
        %v676 = vunpack.c.l.b16 %v585
        %v677 = vunpack.c.h.b16 %v585
        %v678 = vunpack.c.l.b16 %v586
        %v679 = vunpack.c.h.b16 %v586
        %v680 = vunpack.c.l.b16 %v587
        %v681 = vunpack.c.h.b16 %v587
        %v682 = vunpack.c.l.b16 %v588
        %v683 = vunpack.c.h.b16 %v588
        %v684 = vunpack.c.l.b16 %v589
        %v685 = vunpack.c.h.b16 %v589
        %v686 = vpack.c.b16 %v626, %v622
        %v687 = vpack.c.b16 %v627, %v623
        %v688 = vpack.c.b16 %v628, %v624
        %v689 = vpack.c.b16 %v629, %v625
        %v690 = vpack.c.b16 %v634, %v630
        %v691 = vpack.c.b16 %v635, %v631
        %v692 = vpack.c.b16 %v636, %v632
        %v693 = vpack.c.b16 %v637, %v633
        %v694 = vpack.c.b16 %v642, %v638
        %v695 = vpack.c.b16 %v643, %v639
        %v696 = vpack.c.b16 %v644, %v640
        %v697 = vpack.c.b16 %v645, %v641
        %v698 = vpack.c.b16 %v650, %v646
        %v699 = vpack.c.b16 %v651, %v647
        %v700 = vpack.c.b16 %v652, %v648
        %v701 = vpack.c.b16 %v653, %v649
        %v702 = vpack.c.b16 %v658, %v654
        %v703 = vpack.c.b16 %v659, %v655
        %v704 = vpack.c.b16 %v660, %v656
        %v705 = vpack.c.b16 %v661, %v657
        %v706 = vpack.c.b16 %v666, %v662
        %v707 = vpack.c.b16 %v667, %v663
        %v708 = vpack.c.b16 %v668, %v664
        %v709 = vpack.c.b16 %v669, %v665
        %v710 = vpack.c.b16 %v674, %v670
        %v711 = vpack.c.b16 %v675, %v671
        %v712 = vpack.c.b16 %v676, %v672
        %v713 = vpack.c.b16 %v677, %v673
        %v714 = vpack.c.b16 %v682, %v678
        %v715 = vpack.c.b16 %v683, %v679
        %v716 = vpack.c.b16 %v684, %v680
        %v717 = vpack.c.b16 %v685, %v681
        %750 = vmatprep.subr.bf16.mxu0 %v715
        %751 = vmatpush1.bf16.msra.mxu0 %v714
        %752 = vmatprep.subr.bf16.mxu0 %v711
        %753 = vmatpush1.bf16.msra.mxu0 %v710
        %754 = vmatprep.subr.bf16.mxu0 %v707
        %755 = vmatpush1.bf16.msra.mxu0 %v706
        %756 = vmatprep.subr.bf16.mxu0 %v703
        %757 = vmatpush1.bf16.msra.mxu0 %v702
        %758 = vmatprep.subr.bf16.mxu0 %v699
        %759 = vmatpush1.bf16.msra.mxu0 %v698
        %760 = vmatprep.subr.bf16.mxu0 %v695
        %761 = vmatpush1.bf16.msra.mxu0 %v694
        %762 = vmatprep.subr.bf16.mxu0 %v691
        %763 = vmatpush1.bf16.msra.mxu0 %v690
        %764 = vmatprep.subr.bf16.mxu0 %v687
        %765 = vmatpush1.bf16.msra.mxu0 %v686
        %766 = vmatprep.subr.bf16.mxu0 0
        %767 = vmatpush2.bf16.msra.mxu0 0
        %768 = vmatprep.subr.bf16.mxu0 0
        %769 = vmatpush2.bf16.msra.mxu0 0
        %770 = vmatprep.subr.bf16.mxu0 0
        %771 = vmatpush2.bf16.msra.mxu0 0
        %772 = vmatprep.subr.bf16.mxu0 0
        %773 = vmatpush2.bf16.msra.mxu0 0
        %774 = vmatprep.subr.bf16.mxu0 0
        %775 = vmatpush2.bf16.msra.mxu0 0
        %776 = vmatprep.subr.bf16.mxu0 0
        %777 = vmatpush2.bf16.msra.mxu0 0
        %778 = vmatprep.subr.bf16.mxu0 0
        %779 = vmatpush2.bf16.msra.mxu0 0
        %780 = vmatprep.subr.bf16.mxu0 0
        %781 = vmatpush2.bf16.msra.mxu0 0
        %782 = vmatprep.mubr.bf16.mxu0 0
        %783 = vmatmul.mubr.bf16.gmra.mxu0 %v557
        %v784 = vpop.f32.mrf.mxu0
        %v785 = vadd.f32 0.0, %v784
        %v786 = vpop.f32.mrf.mxu0
        %v787 = vadd.f32 0.0, %v786
        %v788 = vpop.f32.mrf.mxu0
        %v789 = vpop.f32.mrf.mxu0
        %790 = vdwg.mxu0
        %791 = vmatprep.subr.bf16.mxu0 %v717
        %792 = vmatpush1.bf16.msra.mxu0 %v716
        %793 = vmatprep.subr.bf16.mxu0 %v713
        %794 = vmatpush1.bf16.msra.mxu0 %v712
        %795 = vmatprep.subr.bf16.mxu0 %v709
        %796 = vmatpush1.bf16.msra.mxu0 %v708
        %797 = vmatprep.subr.bf16.mxu0 %v705
        %798 = vmatpush1.bf16.msra.mxu0 %v704
        %799 = vmatprep.subr.bf16.mxu0 %v701
        %800 = vmatpush1.bf16.msra.mxu0 %v700
        %801 = vmatprep.subr.bf16.mxu0 %v697
        %802 = vmatpush1.bf16.msra.mxu0 %v696
        %803 = vmatprep.subr.bf16.mxu0 %v693
        %804 = vmatpush1.bf16.msra.mxu0 %v692
        %805 = vmatprep.subr.bf16.mxu0 %v689
        %806 = vmatpush1.bf16.msra.mxu0 %v688
        %807 = vmatprep.subr.bf16.mxu0 0
        %808 = vmatpush2.bf16.msra.mxu0 0
        %809 = vmatprep.subr.bf16.mxu0 0
        %810 = vmatpush2.bf16.msra.mxu0 0
        %811 = vmatprep.subr.bf16.mxu0 0
        %812 = vmatpush2.bf16.msra.mxu0 0
        %813 = vmatprep.subr.bf16.mxu0 0
        %814 = vmatpush2.bf16.msra.mxu0 0
        %815 = vmatprep.subr.bf16.mxu0 0
        %816 = vmatpush2.bf16.msra.mxu0 0
        %817 = vmatprep.subr.bf16.mxu0 0
        %818 = vmatpush2.bf16.msra.mxu0 0
        %819 = vmatprep.subr.bf16.mxu0 0
        %820 = vmatpush2.bf16.msra.mxu0 0
        %821 = vmatprep.subr.bf16.mxu0 0
        %822 = vmatpush2.bf16.msra.mxu0 0
        %823 = vmatprep.mubr.bf16.mxu0 0
        %824 = vmatmul.mubr.bf16.gmra.mxu0 %v557
        %v825 = vpop.f32.mrf.mxu0
        %v826 = vadd.f32 0.0, %v825
        %v827 = vpop.f32.mrf.mxu0
        %v828 = vadd.f32 0.0, %v827
        %v829 = vpop.f32.mrf.mxu0
        %v830 = vpop.f32.mrf.mxu0
        %831 = vdwg.mxu0
        %v832 = vmul.f32 %v785, %v785
        %v833 = vmul.f32 %v787, %v787
        %v834 = vmul.f32 %v826, %v826
        %v835 = vmul.f32 %v828, %v828
        %v836 = vld [vmem:[#allocation3] sm:$0xff]
        %v837 = vpack.c.bf16 %v836, %v836
        %v838 = vld [vmem:[%s344] sm:$0xff]
        %v839 = vld [vmem:[%s344 + $0x8] sm:$0xff]
        %v840 = vld [vmem:[%s344 + $0x10] sm:$0xff]
        %v841 = vld [vmem:[%s344 + $0x18] sm:$0xff]
        %v846 = vunpack.c.l.b16 %v838
        %v847 = vunpack.c.h.b16 %v838
        %v848 = vunpack.c.l.b16 %v839
        %v849 = vunpack.c.h.b16 %v839
        %v850 = vunpack.c.l.b16 %v840
        %v851 = vunpack.c.h.b16 %v840
        %v852 = vunpack.c.l.b16 %v841
        %v853 = vunpack.c.h.b16 %v841
        %v854 = vpack.c.b16 %v850, %v846
        %v855 = vpack.c.b16 %v851, %v847
        %v856 = vpack.c.b16 %v852, %v848
        %v857 = vpack.c.b16 %v853, %v849
        %vm862 = vcmask 130048
        %v864 = vsel %vm862, %v837, 0
        %866 = vmatprep.subr.bf16.mxu0 0
        %867 = vmatpush1.bf16.msra.mxu0 0
        %868 = vmatprep.subr.bf16.mxu0 0
        %869 = vmatpush1.bf16.msra.mxu0 0
        %870 = vmatprep.subr.bf16.mxu0 0
        %871 = vmatpush1.bf16.msra.mxu0 0
        %872 = vmatprep.subr.bf16.mxu0 0
        %873 = vmatpush1.bf16.msra.mxu0 0
        %874 = vmatprep.subr.bf16.mxu0 0
        %875 = vmatpush1.bf16.msra.mxu0 0
        %876 = vmatprep.subr.bf16.mxu0 0
        %877 = vmatpush1.bf16.msra.mxu0 0
        %878 = vmatprep.subr.bf16.mxu0 0
        %879 = vmatpush1.bf16.msra.mxu0 0
        %880 = vmatprep.subr.bf16.mxu0 %v855
        %881 = vmatpush1.bf16.msra.mxu0 %v854
        %882 = vmatprep.subr.bf16.mxu0 0
        %883 = vmatpush2.bf16.msra.mxu0 0
        %884 = vmatprep.subr.bf16.mxu0 0
        %885 = vmatpush2.bf16.msra.mxu0 0
        %886 = vmatprep.subr.bf16.mxu0 0
        %887 = vmatpush2.bf16.msra.mxu0 0
        %888 = vmatprep.subr.bf16.mxu0 0
        %889 = vmatpush2.bf16.msra.mxu0 0
        %890 = vmatprep.subr.bf16.mxu0 0
        %891 = vmatpush2.bf16.msra.mxu0 0
        %892 = vmatprep.subr.bf16.mxu0 0
        %893 = vmatpush2.bf16.msra.mxu0 0
        %894 = vmatprep.subr.bf16.mxu0 0
        %895 = vmatpush2.bf16.msra.mxu0 0
        %896 = vmatprep.subr.bf16.mxu0 0
        %897 = vmatpush2.bf16.msra.mxu0 0
        %898 = vmatprep.mubr.bf16.mxu0 0
        %899 = vmatmul.mubr.bf16.gmra.mxu0 %v864
        %v900 = vpop.f32.mrf.mxu0
        %v901 = vadd.f32 0.0, %v900
        %v902 = vpop.f32.mrf.mxu0
        %v903 = vadd.f32 0.0, %v902
        %v904 = vpop.f32.mrf.mxu0
        %v905 = vpop.f32.mrf.mxu0
        %906 = vdwg.mxu0
        %907 = vmatprep.subr.bf16.mxu0 0
        %908 = vmatpush1.bf16.msra.mxu0 0
        %909 = vmatprep.subr.bf16.mxu0 0
        %910 = vmatpush1.bf16.msra.mxu0 0
        %911 = vmatprep.subr.bf16.mxu0 0
        %912 = vmatpush1.bf16.msra.mxu0 0
        %913 = vmatprep.subr.bf16.mxu0 0
        %914 = vmatpush1.bf16.msra.mxu0 0
        %915 = vmatprep.subr.bf16.mxu0 0
        %916 = vmatpush1.bf16.msra.mxu0 0
        %917 = vmatprep.subr.bf16.mxu0 0
        %918 = vmatpush1.bf16.msra.mxu0 0
        %919 = vmatprep.subr.bf16.mxu0 0
        %920 = vmatpush1.bf16.msra.mxu0 0
        %921 = vmatprep.subr.bf16.mxu0 %v857
        %922 = vmatpush1.bf16.msra.mxu0 %v856
        %923 = vmatprep.subr.bf16.mxu0 0
        %924 = vmatpush2.bf16.msra.mxu0 0
        %925 = vmatprep.subr.bf16.mxu0 0
        %926 = vmatpush2.bf16.msra.mxu0 0
        %927 = vmatprep.subr.bf16.mxu0 0
        %928 = vmatpush2.bf16.msra.mxu0 0
        %929 = vmatprep.subr.bf16.mxu0 0
        %930 = vmatpush2.bf16.msra.mxu0 0
        %931 = vmatprep.subr.bf16.mxu0 0
        %932 = vmatpush2.bf16.msra.mxu0 0
        %933 = vmatprep.subr.bf16.mxu0 0
        %934 = vmatpush2.bf16.msra.mxu0 0
        %935 = vmatprep.subr.bf16.mxu0 0
        %936 = vmatpush2.bf16.msra.mxu0 0
        %937 = vmatprep.subr.bf16.mxu0 0
        %938 = vmatpush2.bf16.msra.mxu0 0
        %939 = vmatprep.mubr.bf16.mxu0 0
        %940 = vmatmul.mubr.bf16.gmra.mxu0 %v864
        %v941 = vpop.f32.mrf.mxu0
        %v942 = vadd.f32 0.0, %v941
        %v943 = vpop.f32.mrf.mxu0
        %v944 = vadd.f32 0.0, %v943
        %v945 = vpop.f32.mrf.mxu0
        %v946 = vpop.f32.mrf.mxu0
        %947 = vdwg.mxu0
        %949 = vset.pattern.permute.xlu0 0
        %950 = vperm.xlu0 %949, %v399
        %v951 = vpop.permute.xlu0 %950
        %v953 = vmul.f32 %v901, %v951
        %v954 = vmul.f32 %v903, %v951
        %v955 = vmul.f32 %v942, %v951
        %v956 = vmul.f32 %v944, %v951
        %958 = vset.pattern.permute.xlu0 0
        %959 = vperm.xlu0 %958, %v398
        %v960 = vpop.permute.xlu0 %959
        %v962 = vmul.f32 %v960, %v832
        %v963 = vmul.f32 %v960, %v833
        %v964 = vmul.f32 %v960, %v834
        %v965 = vmul.f32 %v960, %v835
        %v966 = vrot.slane %v962, 4
        %v967 = vadd.f32 %v962, %v966
        %v968 = vrot.slane %v967, 2
        %v969 = vadd.f32 %v967, %v968
        %v970 = vrot.slane %v969, 1
        %v971 = vadd.f32 %v969, %v970
        %v972 = vrot.slane %v963, 4
        %v973 = vadd.f32 %v963, %v972
        %v974 = vrot.slane %v973, 2
        %v975 = vadd.f32 %v973, %v974
        %v976 = vrot.slane %v975, 1
        %v977 = vadd.f32 %v975, %v976
        %v978 = vrot.slane %v964, 4
        %v979 = vadd.f32 %v964, %v978
        %v980 = vrot.slane %v979, 2
        %v981 = vadd.f32 %v979, %v980
        %v982 = vrot.slane %v981, 1
        %v983 = vadd.f32 %v981, %v982
        %v984 = vrot.slane %v965, 4
        %v985 = vadd.f32 %v965, %v984
        %v986 = vrot.slane %v985, 2
        %v987 = vadd.f32 %v985, %v986
        %v988 = vrot.slane %v987, 1
        %v989 = vadd.f32 %v987, %v988
        %v990 = vmul.f32 %v953, %v953
        %v991 = vmul.f32 %v954, %v954
        %v992 = vmul.f32 %v955, %v955
        %v993 = vmul.f32 %v956, %v956
        %v994 = vrot.slane %v990, 4
        %v995 = vadd.f32 %v990, %v994
        %v996 = vrot.slane %v995, 2
        %v997 = vadd.f32 %v995, %v996
        %v998 = vrot.slane %v997, 1
        %v999 = vadd.f32 %v997, %v998
        %v1000 = vrot.slane %v991, 4
        %v1001 = vadd.f32 %v991, %v1000
        %v1002 = vrot.slane %v1001, 2
        %v1003 = vadd.f32 %v1001, %v1002
        %v1004 = vrot.slane %v1003, 1
        %v1005 = vadd.f32 %v1003, %v1004
        %v1006 = vrot.slane %v992, 4
        %v1007 = vadd.f32 %v992, %v1006
        %v1008 = vrot.slane %v1007, 2
        %v1009 = vadd.f32 %v1007, %v1008
        %v1010 = vrot.slane %v1009, 1
        %v1011 = vadd.f32 %v1009, %v1010
        %v1012 = vrot.slane %v993, 4
        %v1013 = vadd.f32 %v993, %v1012
        %v1014 = vrot.slane %v1013, 2
        %v1015 = vadd.f32 %v1013, %v1014
        %v1016 = vrot.slane %v1015, 1
        %v1017 = vadd.f32 %v1015, %v1016
        %v1018 = vrsqrt.pop %v999
        %v1019 = vmul.f32 %v999, %v1018
        %vm1020 = vcmp.eq.f32.partialorder %v999, inf
        %v1021 = vsel %vm1020, %v999, %v1019
        %vm1022 = vcmp.eq.f32.partialorder %v999, 0.0
        %v1023 = vand.u32 %v999, 2147483648
        %v1024 = vsel %vm1022, %v1023, %v1021
        %v1025 = vrsqrt.pop %v1005
        %v1026 = vmul.f32 %v1005, %v1025
        %vm1027 = vcmp.eq.f32.partialorder %v1005, inf
        %v1028 = vsel %vm1027, %v1005, %v1026
        %vm1029 = vcmp.eq.f32.partialorder %v1005, 0.0
        %v1030 = vand.u32 %v1005, 2147483648
        %v1031 = vsel %vm1029, %v1030, %v1028
        %v1032 = vrsqrt.pop %v1011
        %v1033 = vmul.f32 %v1011, %v1032
        %vm1034 = vcmp.eq.f32.partialorder %v1011, inf
        %v1035 = vsel %vm1034, %v1011, %v1033
        %vm1036 = vcmp.eq.f32.partialorder %v1011, 0.0
        %v1037 = vand.u32 %v1011, 2147483648
        %v1038 = vsel %vm1036, %v1037, %v1035
        %v1039 = vrsqrt.pop %v1017
        %v1040 = vmul.f32 %v1017, %v1039
        %vm1041 = vcmp.eq.f32.partialorder %v1017, inf
        %v1042 = vsel %vm1041, %v1017, %v1040
        %vm1043 = vcmp.eq.f32.partialorder %v1017, 0.0
        %v1044 = vand.u32 %v1017, 2147483648
        %v1045 = vsel %vm1043, %v1044, %v1042
        %v1046 = vadd.f32 %v1024, 1e-08
        %v1047 = vadd.f32 %v1031, 1e-08
        %v1048 = vadd.f32 %v1038, 1e-08
        %v1049 = vadd.f32 %v1045, 1e-08
        %v1050 = vrcp.pop %v1046
        %v1051 = vrcp.pop %v1047
        %v1052 = vrcp.pop %v1048
        %v1053 = vrcp.pop %v1049
        %v1054 = vrsqrt.pop %v971
        %v1055 = vmul.f32 %v971, %v1054
        %vm1056 = vcmp.eq.f32.partialorder %v971, inf
        %v1057 = vsel %vm1056, %v971, %v1055
        %vm1058 = vcmp.eq.f32.partialorder %v971, 0.0
        %v1059 = vand.u32 %v971, 2147483648
        %v1060 = vsel %vm1058, %v1059, %v1057
        %v1061 = vrsqrt.pop %v977
        %v1062 = vmul.f32 %v977, %v1061
        %vm1063 = vcmp.eq.f32.partialorder %v977, inf
        %v1064 = vsel %vm1063, %v977, %v1062
        %vm1065 = vcmp.eq.f32.partialorder %v977, 0.0
        %v1066 = vand.u32 %v977, 2147483648
        %v1067 = vsel %vm1065, %v1066, %v1064
        %v1068 = vrsqrt.pop %v983
        %v1069 = vmul.f32 %v983, %v1068
        %vm1070 = vcmp.eq.f32.partialorder %v983, inf
        %v1071 = vsel %vm1070, %v983, %v1069
        %vm1072 = vcmp.eq.f32.partialorder %v983, 0.0
        %v1073 = vand.u32 %v983, 2147483648
        %v1074 = vsel %vm1072, %v1073, %v1071
        %v1075 = vrsqrt.pop %v989
        %v1076 = vmul.f32 %v989, %v1075
        %vm1077 = vcmp.eq.f32.partialorder %v989, inf
        %v1078 = vsel %vm1077, %v989, %v1076
        %vm1079 = vcmp.eq.f32.partialorder %v989, 0.0
        %v1080 = vand.u32 %v989, 2147483648
        %v1081 = vsel %vm1079, %v1080, %v1078
        %v1082 = vmul.f32 %v1060, 0.1
        %v1083 = vmul.f32 %v1067, 0.1
        %v1084 = vmul.f32 %v1074, 0.1
        %v1085 = vmul.f32 %v1081, 0.1
        %v1086 = vmul.f32 %v1082, %v1050
        %v1087 = vmul.f32 %v1083, %v1051
        %v1088 = vmul.f32 %v1084, %v1052
        %v1089 = vmul.f32 %v1085, %v1053
        %v1090 = vmul.f32 %v1086, %v953
        %v1091 = vmul.f32 %v1087, %v954
        %v1092 = vmul.f32 %v1088, %v955
        %v1093 = vmul.f32 %v1089, %v956
        %v1094 = vadd.f32 %v785, %v1090
        %v1095 = vadd.f32 %v787, %v1091
        %v1096 = vadd.f32 %v826, %v1092
        %v1097 = vadd.f32 %v828, %v1093
        %v1098 = vld [vmem:[%s344 + $0x20] sm:$0xff]
        %v1099 = vld [vmem:[%s344 + $0x28] sm:$0xff]
        %v1100 = vld [vmem:[%s344 + $0x30] sm:$0xff]
        %v1101 = vld [vmem:[%s344 + $0x38] sm:$0xff]
        %1103 = vrot.lane.b32.xlu0 %v837, 112
        %v1104 = vpop.permute.xlu0 %1103
        %v1109 = vunpack.c.l.b16 %v1098
        %v1110 = vunpack.c.h.b16 %v1098
        %v1111 = vunpack.c.l.b16 %v1099
        %v1112 = vunpack.c.h.b16 %v1099
        %v1113 = vunpack.c.l.b16 %v1100
        %v1114 = vunpack.c.h.b16 %v1100
        %v1115 = vunpack.c.l.b16 %v1101
        %v1116 = vunpack.c.h.b16 %v1101
        %v1117 = vpack.c.b16 %v1113, %v1109
        %v1118 = vpack.c.b16 %v1114, %v1110
        %v1119 = vpack.c.b16 %v1115, %v1111
        %v1120 = vpack.c.b16 %v1116, %v1112
        %v1126 = vsel %vm862, %v1104, 0
        %1128 = vmatprep.subr.bf16.mxu0 0
        %1129 = vmatpush1.bf16.msra.mxu0 0
        %1130 = vmatprep.subr.bf16.mxu0 0
        %1131 = vmatpush1.bf16.msra.mxu0 0
        %1132 = vmatprep.subr.bf16.mxu0 0
        %1133 = vmatpush1.bf16.msra.mxu0 0
        %1134 = vmatprep.subr.bf16.mxu0 0
        %1135 = vmatpush1.bf16.msra.mxu0 0
        %1136 = vmatprep.subr.bf16.mxu0 0
        %1137 = vmatpush1.bf16.msra.mxu0 0
        %1138 = vmatprep.subr.bf16.mxu0 0
        %1139 = vmatpush1.bf16.msra.mxu0 0
        %1140 = vmatprep.subr.bf16.mxu0 0
        %1141 = vmatpush1.bf16.msra.mxu0 0
        %1142 = vmatprep.subr.bf16.mxu0 %v1118
        %1143 = vmatpush1.bf16.msra.mxu0 %v1117
        %1144 = vmatprep.subr.bf16.mxu0 0
        %1145 = vmatpush2.bf16.msra.mxu0 0
        %1146 = vmatprep.subr.bf16.mxu0 0
        %1147 = vmatpush2.bf16.msra.mxu0 0
        %1148 = vmatprep.subr.bf16.mxu0 0
        %1149 = vmatpush2.bf16.msra.mxu0 0
        %1150 = vmatprep.subr.bf16.mxu0 0
        %1151 = vmatpush2.bf16.msra.mxu0 0
        %1152 = vmatprep.subr.bf16.mxu0 0
        %1153 = vmatpush2.bf16.msra.mxu0 0
        %1154 = vmatprep.subr.bf16.mxu0 0
        %1155 = vmatpush2.bf16.msra.mxu0 0
        %1156 = vmatprep.subr.bf16.mxu0 0
        %1157 = vmatpush2.bf16.msra.mxu0 0
        %1158 = vmatprep.subr.bf16.mxu0 0
        %1159 = vmatpush2.bf16.msra.mxu0 0
        %1160 = vmatprep.mubr.bf16.mxu0 0
        %1161 = vmatmul.mubr.bf16.gmra.mxu0 %v1126
        %v1162 = vpop.f32.mrf.mxu0
        %v1163 = vadd.f32 0.0, %v1162
        %v1164 = vpop.f32.mrf.mxu0
        %v1165 = vadd.f32 0.0, %v1164
        %v1166 = vpop.f32.mrf.mxu0
        %v1167 = vpop.f32.mrf.mxu0
        %1168 = vdwg.mxu0
        %1169 = vmatprep.subr.bf16.mxu0 0
        %1170 = vmatpush1.bf16.msra.mxu0 0
        %1171 = vmatprep.subr.bf16.mxu0 0
        %1172 = vmatpush1.bf16.msra.mxu0 0
        %1173 = vmatprep.subr.bf16.mxu0 0
        %1174 = vmatpush1.bf16.msra.mxu0 0
        %1175 = vmatprep.subr.bf16.mxu0 0
        %1176 = vmatpush1.bf16.msra.mxu0 0
        %1177 = vmatprep.subr.bf16.mxu0 0
        %1178 = vmatpush1.bf16.msra.mxu0 0
        %1179 = vmatprep.subr.bf16.mxu0 0
        %1180 = vmatpush1.bf16.msra.mxu0 0
        %1181 = vmatprep.subr.bf16.mxu0 0
        %1182 = vmatpush1.bf16.msra.mxu0 0
        %1183 = vmatprep.subr.bf16.mxu0 %v1120
        %1184 = vmatpush1.bf16.msra.mxu0 %v1119
        %1185 = vmatprep.subr.bf16.mxu0 0
        %1186 = vmatpush2.bf16.msra.mxu0 0
        %1187 = vmatprep.subr.bf16.mxu0 0
        %1188 = vmatpush2.bf16.msra.mxu0 0
        %1189 = vmatprep.subr.bf16.mxu0 0
        %1190 = vmatpush2.bf16.msra.mxu0 0
        %1191 = vmatprep.subr.bf16.mxu0 0
        %1192 = vmatpush2.bf16.msra.mxu0 0
        %1193 = vmatprep.subr.bf16.mxu0 0
        %1194 = vmatpush2.bf16.msra.mxu0 0
        %1195 = vmatprep.subr.bf16.mxu0 0
        %1196 = vmatpush2.bf16.msra.mxu0 0
        %1197 = vmatprep.subr.bf16.mxu0 0
        %1198 = vmatpush2.bf16.msra.mxu0 0
        %1199 = vmatprep.subr.bf16.mxu0 0
        %1200 = vmatpush2.bf16.msra.mxu0 0
        %1201 = vmatprep.mubr.bf16.mxu0 0
        %1202 = vmatmul.mubr.bf16.gmra.mxu0 %v1126
        %v1203 = vpop.f32.mrf.mxu0
        %v1204 = vadd.f32 0.0, %v1203
        %v1205 = vpop.f32.mrf.mxu0
        %v1206 = vadd.f32 0.0, %v1205
        %v1207 = vpop.f32.mrf.mxu0
        %v1208 = vpop.f32.mrf.mxu0
        %1209 = vdwg.mxu0
        %1210 = vset.pattern.permute.xlu0 1
        %1211 = vperm.xlu0 %1210, %v399
        %v1212 = vpop.permute.xlu0 %1211
        %v1214 = vmul.f32 %v1163, %v1212
        %v1215 = vmul.f32 %v1165, %v1212
        %v1216 = vmul.f32 %v1204, %v1212
        %v1217 = vmul.f32 %v1206, %v1212
        %1218 = vset.pattern.permute.xlu0 1
        %1219 = vperm.xlu0 %1218, %v398
        %v1220 = vpop.permute.xlu0 %1219
        %v1222 = vmul.f32 %v1220, %v832
        %v1223 = vmul.f32 %v1220, %v833
        %v1224 = vmul.f32 %v1220, %v834
        %v1225 = vmul.f32 %v1220, %v835
        %v1226 = vrot.slane %v1222, 4
        %v1227 = vadd.f32 %v1222, %v1226
        %v1228 = vrot.slane %v1227, 2
        %v1229 = vadd.f32 %v1227, %v1228
        %v1230 = vrot.slane %v1229, 1
        %v1231 = vadd.f32 %v1229, %v1230
        %v1232 = vrot.slane %v1223, 4
        %v1233 = vadd.f32 %v1223, %v1232
        %v1234 = vrot.slane %v1233, 2
        %v1235 = vadd.f32 %v1233, %v1234
        %v1236 = vrot.slane %v1235, 1
        %v1237 = vadd.f32 %v1235, %v1236
        %v1238 = vrot.slane %v1224, 4
        %v1239 = vadd.f32 %v1224, %v1238
        %v1240 = vrot.slane %v1239, 2
        %v1241 = vadd.f32 %v1239, %v1240
        %v1242 = vrot.slane %v1241, 1
        %v1243 = vadd.f32 %v1241, %v1242
        %v1244 = vrot.slane %v1225, 4
        %v1245 = vadd.f32 %v1225, %v1244
        %v1246 = vrot.slane %v1245, 2
        %v1247 = vadd.f32 %v1245, %v1246
        %v1248 = vrot.slane %v1247, 1
        %v1249 = vadd.f32 %v1247, %v1248
        %v1250 = vmul.f32 %v1214, %v1214
        %v1251 = vmul.f32 %v1215, %v1215
        %v1252 = vmul.f32 %v1216, %v1216
        %v1253 = vmul.f32 %v1217, %v1217
        %v1254 = vrot.slane %v1250, 4
        %v1255 = vadd.f32 %v1250, %v1254
        %v1256 = vrot.slane %v1255, 2
        %v1257 = vadd.f32 %v1255, %v1256
        %v1258 = vrot.slane %v1257, 1
        %v1259 = vadd.f32 %v1257, %v1258
        %v1260 = vrot.slane %v1251, 4
        %v1261 = vadd.f32 %v1251, %v1260
        %v1262 = vrot.slane %v1261, 2
        %v1263 = vadd.f32 %v1261, %v1262
        %v1264 = vrot.slane %v1263, 1
        %v1265 = vadd.f32 %v1263, %v1264
        %v1266 = vrot.slane %v1252, 4
        %v1267 = vadd.f32 %v1252, %v1266
        %v1268 = vrot.slane %v1267, 2
        %v1269 = vadd.f32 %v1267, %v1268
        %v1270 = vrot.slane %v1269, 1
        %v1271 = vadd.f32 %v1269, %v1270
        %v1272 = vrot.slane %v1253, 4
        %v1273 = vadd.f32 %v1253, %v1272
        %v1274 = vrot.slane %v1273, 2
        %v1275 = vadd.f32 %v1273, %v1274
        %v1276 = vrot.slane %v1275, 1
        %v1277 = vadd.f32 %v1275, %v1276
        %v1278 = vrsqrt.pop %v1259
        %v1279 = vmul.f32 %v1259, %v1278
        %vm1280 = vcmp.eq.f32.partialorder %v1259, inf
        %v1281 = vsel %vm1280, %v1259, %v1279
        %vm1282 = vcmp.eq.f32.partialorder %v1259, 0.0
        %v1283 = vand.u32 %v1259, 2147483648
        %v1284 = vsel %vm1282, %v1283, %v1281
        %v1285 = vrsqrt.pop %v1265
        %v1286 = vmul.f32 %v1265, %v1285
        %vm1287 = vcmp.eq.f32.partialorder %v1265, inf
        %v1288 = vsel %vm1287, %v1265, %v1286
        %vm1289 = vcmp.eq.f32.partialorder %v1265, 0.0
        %v1290 = vand.u32 %v1265, 2147483648
        %v1291 = vsel %vm1289, %v1290, %v1288
        %v1292 = vrsqrt.pop %v1271
        %v1293 = vmul.f32 %v1271, %v1292
        %vm1294 = vcmp.eq.f32.partialorder %v1271, inf
        %v1295 = vsel %vm1294, %v1271, %v1293
        %vm1296 = vcmp.eq.f32.partialorder %v1271, 0.0
        %v1297 = vand.u32 %v1271, 2147483648
        %v1298 = vsel %vm1296, %v1297, %v1295
        %v1299 = vrsqrt.pop %v1277
        %v1300 = vmul.f32 %v1277, %v1299
        %vm1301 = vcmp.eq.f32.partialorder %v1277, inf
        %v1302 = vsel %vm1301, %v1277, %v1300
        %vm1303 = vcmp.eq.f32.partialorder %v1277, 0.0
        %v1304 = vand.u32 %v1277, 2147483648
        %v1305 = vsel %vm1303, %v1304, %v1302
        %v1306 = vadd.f32 %v1284, 1e-08
        %v1307 = vadd.f32 %v1291, 1e-08
        %v1308 = vadd.f32 %v1298, 1e-08
        %v1309 = vadd.f32 %v1305, 1e-08
        %v1310 = vrcp.pop %v1306
        %v1311 = vrcp.pop %v1307
        %v1312 = vrcp.pop %v1308
        %v1313 = vrcp.pop %v1309
        %v1314 = vrsqrt.pop %v1231
        %v1315 = vmul.f32 %v1231, %v1314
        %vm1316 = vcmp.eq.f32.partialorder %v1231, inf
        %v1317 = vsel %vm1316, %v1231, %v1315
        %vm1318 = vcmp.eq.f32.partialorder %v1231, 0.0
        %v1319 = vand.u32 %v1231, 2147483648
        %v1320 = vsel %vm1318, %v1319, %v1317
        %v1321 = vrsqrt.pop %v1237
        %v1322 = vmul.f32 %v1237, %v1321
        %vm1323 = vcmp.eq.f32.partialorder %v1237, inf
        %v1324 = vsel %vm1323, %v1237, %v1322
        %vm1325 = vcmp.eq.f32.partialorder %v1237, 0.0
        %v1326 = vand.u32 %v1237, 2147483648
        %v1327 = vsel %vm1325, %v1326, %v1324
        %v1328 = vrsqrt.pop %v1243
        %v1329 = vmul.f32 %v1243, %v1328
        %vm1330 = vcmp.eq.f32.partialorder %v1243, inf
        %v1331 = vsel %vm1330, %v1243, %v1329
        %vm1332 = vcmp.eq.f32.partialorder %v1243, 0.0
        %v1333 = vand.u32 %v1243, 2147483648
        %v1334 = vsel %vm1332, %v1333, %v1331
        %v1335 = vrsqrt.pop %v1249
        %v1336 = vmul.f32 %v1249, %v1335
        %vm1337 = vcmp.eq.f32.partialorder %v1249, inf
        %v1338 = vsel %vm1337, %v1249, %v1336
        %vm1339 = vcmp.eq.f32.partialorder %v1249, 0.0
        %v1340 = vand.u32 %v1249, 2147483648
        %v1341 = vsel %vm1339, %v1340, %v1338
        %v1342 = vmul.f32 %v1320, 0.1
        %v1343 = vmul.f32 %v1327, 0.1
        %v1344 = vmul.f32 %v1334, 0.1
        %v1345 = vmul.f32 %v1341, 0.1
        %v1346 = vmul.f32 %v1342, %v1310
        %v1347 = vmul.f32 %v1343, %v1311
        %v1348 = vmul.f32 %v1344, %v1312
        %v1349 = vmul.f32 %v1345, %v1313
        %v1350 = vmul.f32 %v1346, %v1214
        %v1351 = vmul.f32 %v1347, %v1215
        %v1352 = vmul.f32 %v1348, %v1216
        %v1353 = vmul.f32 %v1349, %v1217
        %v1354 = vadd.f32 %v1094, %v1350
        %v1355 = vadd.f32 %v1095, %v1351
        %v1356 = vadd.f32 %v1096, %v1352
        %v1357 = vadd.f32 %v1097, %v1353
        %v1358 = vld [vmem:[%s344 + $0x40] sm:$0xff]
        %v1359 = vld [vmem:[%s344 + $0x48] sm:$0xff]
        %v1360 = vld [vmem:[%s344 + $0x50] sm:$0xff]
        %v1361 = vld [vmem:[%s344 + $0x58] sm:$0xff]
        %1362 = vrot.lane.b32.xlu0 %v837, 96
        %v1363 = vpop.permute.xlu0 %1362
        %v1368 = vunpack.c.l.b16 %v1358
        %v1369 = vunpack.c.h.b16 %v1358
        %v1370 = vunpack.c.l.b16 %v1359
        %v1371 = vunpack.c.h.b16 %v1359
        %v1372 = vunpack.c.l.b16 %v1360
        %v1373 = vunpack.c.h.b16 %v1360
        %v1374 = vunpack.c.l.b16 %v1361
        %v1375 = vunpack.c.h.b16 %v1361
        %v1376 = vpack.c.b16 %v1372, %v1368
        %v1377 = vpack.c.b16 %v1373, %v1369
        %v1378 = vpack.c.b16 %v1374, %v1370
        %v1379 = vpack.c.b16 %v1375, %v1371
        %v1385 = vsel %vm862, %v1363, 0
        %1387 = vmatprep.subr.bf16.mxu0 0
        %1388 = vmatpush1.bf16.msra.mxu0 0
        %1389 = vmatprep.subr.bf16.mxu0 0
        %1390 = vmatpush1.bf16.msra.mxu0 0
        %1391 = vmatprep.subr.bf16.mxu0 0
        %1392 = vmatpush1.bf16.msra.mxu0 0
        %1393 = vmatprep.subr.bf16.mxu0 0
        %1394 = vmatpush1.bf16.msra.mxu0 0
        %1395 = vmatprep.subr.bf16.mxu0 0
        %1396 = vmatpush1.bf16.msra.mxu0 0
        %1397 = vmatprep.subr.bf16.mxu0 0
        %1398 = vmatpush1.bf16.msra.mxu0 0
        %1399 = vmatprep.subr.bf16.mxu0 0
        %1400 = vmatpush1.bf16.msra.mxu0 0
        %1401 = vmatprep.subr.bf16.mxu0 %v1377
        %1402 = vmatpush1.bf16.msra.mxu0 %v1376
        %1403 = vmatprep.subr.bf16.mxu0 0
        %1404 = vmatpush2.bf16.msra.mxu0 0
        %1405 = vmatprep.subr.bf16.mxu0 0
        %1406 = vmatpush2.bf16.msra.mxu0 0
        %1407 = vmatprep.subr.bf16.mxu0 0
        %1408 = vmatpush2.bf16.msra.mxu0 0
        %1409 = vmatprep.subr.bf16.mxu0 0
        %1410 = vmatpush2.bf16.msra.mxu0 0
        %1411 = vmatprep.subr.bf16.mxu0 0
        %1412 = vmatpush2.bf16.msra.mxu0 0
        %1413 = vmatprep.subr.bf16.mxu0 0
        %1414 = vmatpush2.bf16.msra.mxu0 0
        %1415 = vmatprep.subr.bf16.mxu0 0
        %1416 = vmatpush2.bf16.msra.mxu0 0
        %1417 = vmatprep.subr.bf16.mxu0 0
        %1418 = vmatpush2.bf16.msra.mxu0 0
        %1419 = vmatprep.mubr.bf16.mxu0 0
        %1420 = vmatmul.mubr.bf16.gmra.mxu0 %v1385
        %v1421 = vpop.f32.mrf.mxu0
        %v1422 = vadd.f32 0.0, %v1421
        %v1423 = vpop.f32.mrf.mxu0
        %v1424 = vadd.f32 0.0, %v1423
        %v1425 = vpop.f32.mrf.mxu0
        %v1426 = vpop.f32.mrf.mxu0
        %1427 = vdwg.mxu0
        %1428 = vmatprep.subr.bf16.mxu0 0
        %1429 = vmatpush1.bf16.msra.mxu0 0
        %1430 = vmatprep.subr.bf16.mxu0 0
        %1431 = vmatpush1.bf16.msra.mxu0 0
        %1432 = vmatprep.subr.bf16.mxu0 0
        %1433 = vmatpush1.bf16.msra.mxu0 0
        %1434 = vmatprep.subr.bf16.mxu0 0
        %1435 = vmatpush1.bf16.msra.mxu0 0
        %1436 = vmatprep.subr.bf16.mxu0 0
        %1437 = vmatpush1.bf16.msra.mxu0 0
        %1438 = vmatprep.subr.bf16.mxu0 0
        %1439 = vmatpush1.bf16.msra.mxu0 0
        %1440 = vmatprep.subr.bf16.mxu0 0
        %1441 = vmatpush1.bf16.msra.mxu0 0
        %1442 = vmatprep.subr.bf16.mxu0 %v1379
        %1443 = vmatpush1.bf16.msra.mxu0 %v1378
        %1444 = vmatprep.subr.bf16.mxu0 0
        %1445 = vmatpush2.bf16.msra.mxu0 0
        %1446 = vmatprep.subr.bf16.mxu0 0
        %1447 = vmatpush2.bf16.msra.mxu0 0
        %1448 = vmatprep.subr.bf16.mxu0 0
        %1449 = vmatpush2.bf16.msra.mxu0 0
        %1450 = vmatprep.subr.bf16.mxu0 0
        %1451 = vmatpush2.bf16.msra.mxu0 0
        %1452 = vmatprep.subr.bf16.mxu0 0
        %1453 = vmatpush2.bf16.msra.mxu0 0
        %1454 = vmatprep.subr.bf16.mxu0 0
        %1455 = vmatpush2.bf16.msra.mxu0 0
        %1456 = vmatprep.subr.bf16.mxu0 0
        %1457 = vmatpush2.bf16.msra.mxu0 0
        %1458 = vmatprep.subr.bf16.mxu0 0
        %1459 = vmatpush2.bf16.msra.mxu0 0
        %1460 = vmatprep.mubr.bf16.mxu0 0
        %1461 = vmatmul.mubr.bf16.gmra.mxu0 %v1385
        %v1462 = vpop.f32.mrf.mxu0
        %v1463 = vadd.f32 0.0, %v1462
        %v1464 = vpop.f32.mrf.mxu0
        %v1465 = vadd.f32 0.0, %v1464
        %v1466 = vpop.f32.mrf.mxu0
        %v1467 = vpop.f32.mrf.mxu0
        %1468 = vdwg.mxu0
        %1469 = vset.pattern.permute.xlu0 2
        %1470 = vperm.xlu0 %1469, %v399
        %v1471 = vpop.permute.xlu0 %1470
        %v1473 = vmul.f32 %v1422, %v1471
        %v1474 = vmul.f32 %v1424, %v1471
        %v1475 = vmul.f32 %v1463, %v1471
        %v1476 = vmul.f32 %v1465, %v1471
        %1477 = vset.pattern.permute.xlu0 2
        %1478 = vperm.xlu0 %1477, %v398
        %v1479 = vpop.permute.xlu0 %1478
        %v1481 = vmul.f32 %v1479, %v832
        %v1482 = vmul.f32 %v1479, %v833
        %v1483 = vmul.f32 %v1479, %v834
        %v1484 = vmul.f32 %v1479, %v835
        %v1485 = vrot.slane %v1481, 4
        %v1486 = vadd.f32 %v1481, %v1485
        %v1487 = vrot.slane %v1486, 2
        %v1488 = vadd.f32 %v1486, %v1487
        %v1489 = vrot.slane %v1488, 1
        %v1490 = vadd.f32 %v1488, %v1489
        %v1491 = vrot.slane %v1482, 4
        %v1492 = vadd.f32 %v1482, %v1491
        %v1493 = vrot.slane %v1492, 2
        %v1494 = vadd.f32 %v1492, %v1493
        %v1495 = vrot.slane %v1494, 1
        %v1496 = vadd.f32 %v1494, %v1495
        %v1497 = vrot.slane %v1483, 4
        %v1498 = vadd.f32 %v1483, %v1497
        %v1499 = vrot.slane %v1498, 2
        %v1500 = vadd.f32 %v1498, %v1499
        %v1501 = vrot.slane %v1500, 1
        %v1502 = vadd.f32 %v1500, %v1501
        %v1503 = vrot.slane %v1484, 4
        %v1504 = vadd.f32 %v1484, %v1503
        %v1505 = vrot.slane %v1504, 2
        %v1506 = vadd.f32 %v1504, %v1505
        %v1507 = vrot.slane %v1506, 1
        %v1508 = vadd.f32 %v1506, %v1507
        %v1509 = vmul.f32 %v1473, %v1473
        %v1510 = vmul.f32 %v1474, %v1474
        %v1511 = vmul.f32 %v1475, %v1475
        %v1512 = vmul.f32 %v1476, %v1476
        %v1513 = vrot.slane %v1509, 4
        %v1514 = vadd.f32 %v1509, %v1513
        %v1515 = vrot.slane %v1514, 2
        %v1516 = vadd.f32 %v1514, %v1515
        %v1517 = vrot.slane %v1516, 1
        %v1518 = vadd.f32 %v1516, %v1517
        %v1519 = vrot.slane %v1510, 4
        %v1520 = vadd.f32 %v1510, %v1519
        %v1521 = vrot.slane %v1520, 2
        %v1522 = vadd.f32 %v1520, %v1521
        %v1523 = vrot.slane %v1522, 1
        %v1524 = vadd.f32 %v1522, %v1523
        %v1525 = vrot.slane %v1511, 4
        %v1526 = vadd.f32 %v1511, %v1525
        %v1527 = vrot.slane %v1526, 2
        %v1528 = vadd.f32 %v1526, %v1527
        %v1529 = vrot.slane %v1528, 1
        %v1530 = vadd.f32 %v1528, %v1529
        %v1531 = vrot.slane %v1512, 4
        %v1532 = vadd.f32 %v1512, %v1531
        %v1533 = vrot.slane %v1532, 2
        %v1534 = vadd.f32 %v1532, %v1533
        %v1535 = vrot.slane %v1534, 1
        %v1536 = vadd.f32 %v1534, %v1535
        %v1537 = vrsqrt.pop %v1518
        %v1538 = vmul.f32 %v1518, %v1537
        %vm1539 = vcmp.eq.f32.partialorder %v1518, inf
        %v1540 = vsel %vm1539, %v1518, %v1538
        %vm1541 = vcmp.eq.f32.partialorder %v1518, 0.0
        %v1542 = vand.u32 %v1518, 2147483648
        %v1543 = vsel %vm1541, %v1542, %v1540
        %v1544 = vrsqrt.pop %v1524
        %v1545 = vmul.f32 %v1524, %v1544
        %vm1546 = vcmp.eq.f32.partialorder %v1524, inf
        %v1547 = vsel %vm1546, %v1524, %v1545
        %vm1548 = vcmp.eq.f32.partialorder %v1524, 0.0
        %v1549 = vand.u32 %v1524, 2147483648
        %v1550 = vsel %vm1548, %v1549, %v1547
        %v1551 = vrsqrt.pop %v1530
        %v1552 = vmul.f32 %v1530, %v1551
        %vm1553 = vcmp.eq.f32.partialorder %v1530, inf
        %v1554 = vsel %vm1553, %v1530, %v1552
        %vm1555 = vcmp.eq.f32.partialorder %v1530, 0.0
        %v1556 = vand.u32 %v1530, 2147483648
        %v1557 = vsel %vm1555, %v1556, %v1554
        %v1558 = vrsqrt.pop %v1536
        %v1559 = vmul.f32 %v1536, %v1558
        %vm1560 = vcmp.eq.f32.partialorder %v1536, inf
        %v1561 = vsel %vm1560, %v1536, %v1559
        %vm1562 = vcmp.eq.f32.partialorder %v1536, 0.0
        %v1563 = vand.u32 %v1536, 2147483648
        %v1564 = vsel %vm1562, %v1563, %v1561
        %v1565 = vadd.f32 %v1543, 1e-08
        %v1566 = vadd.f32 %v1550, 1e-08
        %v1567 = vadd.f32 %v1557, 1e-08
        %v1568 = vadd.f32 %v1564, 1e-08
        %v1569 = vrcp.pop %v1565
        %v1570 = vrcp.pop %v1566
        %v1571 = vrcp.pop %v1567
        %v1572 = vrcp.pop %v1568
        %v1573 = vrsqrt.pop %v1490
        %v1574 = vmul.f32 %v1490, %v1573
        %vm1575 = vcmp.eq.f32.partialorder %v1490, inf
        %v1576 = vsel %vm1575, %v1490, %v1574
        %vm1577 = vcmp.eq.f32.partialorder %v1490, 0.0
        %v1578 = vand.u32 %v1490, 2147483648
        %v1579 = vsel %vm1577, %v1578, %v1576
        %v1580 = vrsqrt.pop %v1496
        %v1581 = vmul.f32 %v1496, %v1580
        %vm1582 = vcmp.eq.f32.partialorder %v1496, inf
        %v1583 = vsel %vm1582, %v1496, %v1581
        %vm1584 = vcmp.eq.f32.partialorder %v1496, 0.0
        %v1585 = vand.u32 %v1496, 2147483648
        %v1586 = vsel %vm1584, %v1585, %v1583
        %v1587 = vrsqrt.pop %v1502
        %v1588 = vmul.f32 %v1502, %v1587
        %vm1589 = vcmp.eq.f32.partialorder %v1502, inf
        %v1590 = vsel %vm1589, %v1502, %v1588
        %vm1591 = vcmp.eq.f32.partialorder %v1502, 0.0
        %v1592 = vand.u32 %v1502, 2147483648
        %v1593 = vsel %vm1591, %v1592, %v1590
        %v1594 = vrsqrt.pop %v1508
        %v1595 = vmul.f32 %v1508, %v1594
        %vm1596 = vcmp.eq.f32.partialorder %v1508, inf
        %v1597 = vsel %vm1596, %v1508, %v1595
        %vm1598 = vcmp.eq.f32.partialorder %v1508, 0.0
        %v1599 = vand.u32 %v1508, 2147483648
        %v1600 = vsel %vm1598, %v1599, %v1597
        %v1601 = vmul.f32 %v1579, 0.1
        %v1602 = vmul.f32 %v1586, 0.1
        %v1603 = vmul.f32 %v1593, 0.1
        %v1604 = vmul.f32 %v1600, 0.1
        %v1605 = vmul.f32 %v1601, %v1569
        %v1606 = vmul.f32 %v1602, %v1570
        %v1607 = vmul.f32 %v1603, %v1571
        %v1608 = vmul.f32 %v1604, %v1572
        %v1609 = vmul.f32 %v1605, %v1473
        %v1610 = vmul.f32 %v1606, %v1474
        %v1611 = vmul.f32 %v1607, %v1475
        %v1612 = vmul.f32 %v1608, %v1476
        %v1613 = vadd.f32 %v1354, %v1609
        %v1614 = vadd.f32 %v1355, %v1610
        %v1615 = vadd.f32 %v1356, %v1611
        %v1616 = vadd.f32 %v1357, %v1612
        %v1617 = vld [vmem:[%s344 + $0x60] sm:$0xff]
        %v1618 = vld [vmem:[%s344 + $0x68] sm:$0xff]
        %v1619 = vld [vmem:[%s344 + $0x70] sm:$0xff]
        %v1620 = vld [vmem:[%s344 + $0x78] sm:$0xff]
        %1621 = vrot.lane.b32.xlu0 %v837, 80
        %v1622 = vpop.permute.xlu0 %1621
        %v1627 = vunpack.c.l.b16 %v1617
        %v1628 = vunpack.c.h.b16 %v1617
        %v1629 = vunpack.c.l.b16 %v1618
        %v1630 = vunpack.c.h.b16 %v1618
        %v1631 = vunpack.c.l.b16 %v1619
        %v1632 = vunpack.c.h.b16 %v1619
        %v1633 = vunpack.c.l.b16 %v1620
        %v1634 = vunpack.c.h.b16 %v1620
        %v1635 = vpack.c.b16 %v1631, %v1627
        %v1636 = vpack.c.b16 %v1632, %v1628
        %v1637 = vpack.c.b16 %v1633, %v1629
        %v1638 = vpack.c.b16 %v1634, %v1630
        %v1644 = vsel %vm862, %v1622, 0
        %1646 = vmatprep.subr.bf16.mxu0 0
        %1647 = vmatpush1.bf16.msra.mxu0 0
        %1648 = vmatprep.subr.bf16.mxu0 0
        %1649 = vmatpush1.bf16.msra.mxu0 0
        %1650 = vmatprep.subr.bf16.mxu0 0
        %1651 = vmatpush1.bf16.msra.mxu0 0
        %1652 = vmatprep.subr.bf16.mxu0 0
        %1653 = vmatpush1.bf16.msra.mxu0 0
        %1654 = vmatprep.subr.bf16.mxu0 0
        %1655 = vmatpush1.bf16.msra.mxu0 0
        %1656 = vmatprep.subr.bf16.mxu0 0
        %1657 = vmatpush1.bf16.msra.mxu0 0
        %1658 = vmatprep.subr.bf16.mxu0 0
        %1659 = vmatpush1.bf16.msra.mxu0 0
        %1660 = vmatprep.subr.bf16.mxu0 %v1636
        %1661 = vmatpush1.bf16.msra.mxu0 %v1635
        %1662 = vmatprep.subr.bf16.mxu0 0
        %1663 = vmatpush2.bf16.msra.mxu0 0
        %1664 = vmatprep.subr.bf16.mxu0 0
        %1665 = vmatpush2.bf16.msra.mxu0 0
        %1666 = vmatprep.subr.bf16.mxu0 0
        %1667 = vmatpush2.bf16.msra.mxu0 0
        %1668 = vmatprep.subr.bf16.mxu0 0
        %1669 = vmatpush2.bf16.msra.mxu0 0
        %1670 = vmatprep.subr.bf16.mxu0 0
        %1671 = vmatpush2.bf16.msra.mxu0 0
        %1672 = vmatprep.subr.bf16.mxu0 0
        %1673 = vmatpush2.bf16.msra.mxu0 0
        %1674 = vmatprep.subr.bf16.mxu0 0
        %1675 = vmatpush2.bf16.msra.mxu0 0
        %1676 = vmatprep.subr.bf16.mxu0 0
        %1677 = vmatpush2.bf16.msra.mxu0 0
        %1678 = vmatprep.mubr.bf16.mxu0 0
        %1679 = vmatmul.mubr.bf16.gmra.mxu0 %v1644
        %v1680 = vpop.f32.mrf.mxu0
        %v1681 = vadd.f32 0.0, %v1680
        %v1682 = vpop.f32.mrf.mxu0
        %v1683 = vadd.f32 0.0, %v1682
        %v1684 = vpop.f32.mrf.mxu0
        %v1685 = vpop.f32.mrf.mxu0
        %1686 = vdwg.mxu0
        %1687 = vmatprep.subr.bf16.mxu0 0
        %1688 = vmatpush1.bf16.msra.mxu0 0
        %1689 = vmatprep.subr.bf16.mxu0 0
        %1690 = vmatpush1.bf16.msra.mxu0 0
        %1691 = vmatprep.subr.bf16.mxu0 0
        %1692 = vmatpush1.bf16.msra.mxu0 0
        %1693 = vmatprep.subr.bf16.mxu0 0
        %1694 = vmatpush1.bf16.msra.mxu0 0
        %1695 = vmatprep.subr.bf16.mxu0 0
        %1696 = vmatpush1.bf16.msra.mxu0 0
        %1697 = vmatprep.subr.bf16.mxu0 0
        %1698 = vmatpush1.bf16.msra.mxu0 0
        %1699 = vmatprep.subr.bf16.mxu0 0
        %1700 = vmatpush1.bf16.msra.mxu0 0
        %1701 = vmatprep.subr.bf16.mxu0 %v1638
        %1702 = vmatpush1.bf16.msra.mxu0 %v1637
        %1703 = vmatprep.subr.bf16.mxu0 0
        %1704 = vmatpush2.bf16.msra.mxu0 0
        %1705 = vmatprep.subr.bf16.mxu0 0
        %1706 = vmatpush2.bf16.msra.mxu0 0
        %1707 = vmatprep.subr.bf16.mxu0 0
        %1708 = vmatpush2.bf16.msra.mxu0 0
        %1709 = vmatprep.subr.bf16.mxu0 0
        %1710 = vmatpush2.bf16.msra.mxu0 0
        %1711 = vmatprep.subr.bf16.mxu0 0
        %1712 = vmatpush2.bf16.msra.mxu0 0
        %1713 = vmatprep.subr.bf16.mxu0 0
        %1714 = vmatpush2.bf16.msra.mxu0 0
        %1715 = vmatprep.subr.bf16.mxu0 0
        %1716 = vmatpush2.bf16.msra.mxu0 0
        %1717 = vmatprep.subr.bf16.mxu0 0
        %1718 = vmatpush2.bf16.msra.mxu0 0
        %1719 = vmatprep.mubr.bf16.mxu0 0
        %1720 = vmatmul.mubr.bf16.gmra.mxu0 %v1644
        %v1721 = vpop.f32.mrf.mxu0
        %v1722 = vadd.f32 0.0, %v1721
        %v1723 = vpop.f32.mrf.mxu0
        %v1724 = vadd.f32 0.0, %v1723
        %v1725 = vpop.f32.mrf.mxu0
        %v1726 = vpop.f32.mrf.mxu0
        %1727 = vdwg.mxu0
        %1728 = vset.pattern.permute.xlu0 3
        %1729 = vperm.xlu0 %1728, %v399
        %v1730 = vpop.permute.xlu0 %1729
        %v1732 = vmul.f32 %v1681, %v1730
        %v1733 = vmul.f32 %v1683, %v1730
        %v1734 = vmul.f32 %v1722, %v1730
        %v1735 = vmul.f32 %v1724, %v1730
        %1736 = vset.pattern.permute.xlu0 3
        %1737 = vperm.xlu0 %1736, %v398
        %v1738 = vpop.permute.xlu0 %1737
        %v1740 = vmul.f32 %v1738, %v832
        %v1741 = vmul.f32 %v1738, %v833
        %v1742 = vmul.f32 %v1738, %v834
        %v1743 = vmul.f32 %v1738, %v835
        %v1744 = vrot.slane %v1740, 4
        %v1745 = vadd.f32 %v1740, %v1744
        %v1746 = vrot.slane %v1745, 2
        %v1747 = vadd.f32 %v1745, %v1746
        %v1748 = vrot.slane %v1747, 1
        %v1749 = vadd.f32 %v1747, %v1748
        %v1750 = vrot.slane %v1741, 4
        %v1751 = vadd.f32 %v1741, %v1750
        %v1752 = vrot.slane %v1751, 2
        %v1753 = vadd.f32 %v1751, %v1752
        %v1754 = vrot.slane %v1753, 1
        %v1755 = vadd.f32 %v1753, %v1754
        %v1756 = vrot.slane %v1742, 4
        %v1757 = vadd.f32 %v1742, %v1756
        %v1758 = vrot.slane %v1757, 2
        %v1759 = vadd.f32 %v1757, %v1758
        %v1760 = vrot.slane %v1759, 1
        %v1761 = vadd.f32 %v1759, %v1760
        %v1762 = vrot.slane %v1743, 4
        %v1763 = vadd.f32 %v1743, %v1762
        %v1764 = vrot.slane %v1763, 2
        %v1765 = vadd.f32 %v1763, %v1764
        %v1766 = vrot.slane %v1765, 1
        %v1767 = vadd.f32 %v1765, %v1766
        %v1768 = vmul.f32 %v1732, %v1732
        %v1769 = vmul.f32 %v1733, %v1733
        %v1770 = vmul.f32 %v1734, %v1734
        %v1771 = vmul.f32 %v1735, %v1735
        %v1772 = vrot.slane %v1768, 4
        %v1773 = vadd.f32 %v1768, %v1772
        %v1774 = vrot.slane %v1773, 2
        %v1775 = vadd.f32 %v1773, %v1774
        %v1776 = vrot.slane %v1775, 1
        %v1777 = vadd.f32 %v1775, %v1776
        %v1778 = vrot.slane %v1769, 4
        %v1779 = vadd.f32 %v1769, %v1778
        %v1780 = vrot.slane %v1779, 2
        %v1781 = vadd.f32 %v1779, %v1780
        %v1782 = vrot.slane %v1781, 1
        %v1783 = vadd.f32 %v1781, %v1782
        %v1784 = vrot.slane %v1770, 4
        %v1785 = vadd.f32 %v1770, %v1784
        %v1786 = vrot.slane %v1785, 2
        %v1787 = vadd.f32 %v1785, %v1786
        %v1788 = vrot.slane %v1787, 1
        %v1789 = vadd.f32 %v1787, %v1788
        %v1790 = vrot.slane %v1771, 4
        %v1791 = vadd.f32 %v1771, %v1790
        %v1792 = vrot.slane %v1791, 2
        %v1793 = vadd.f32 %v1791, %v1792
        %v1794 = vrot.slane %v1793, 1
        %v1795 = vadd.f32 %v1793, %v1794
        %v1796 = vrsqrt.pop %v1777
        %v1797 = vmul.f32 %v1777, %v1796
        %vm1798 = vcmp.eq.f32.partialorder %v1777, inf
        %v1799 = vsel %vm1798, %v1777, %v1797
        %vm1800 = vcmp.eq.f32.partialorder %v1777, 0.0
        %v1801 = vand.u32 %v1777, 2147483648
        %v1802 = vsel %vm1800, %v1801, %v1799
        %v1803 = vrsqrt.pop %v1783
        %v1804 = vmul.f32 %v1783, %v1803
        %vm1805 = vcmp.eq.f32.partialorder %v1783, inf
        %v1806 = vsel %vm1805, %v1783, %v1804
        %vm1807 = vcmp.eq.f32.partialorder %v1783, 0.0
        %v1808 = vand.u32 %v1783, 2147483648
        %v1809 = vsel %vm1807, %v1808, %v1806
        %v1810 = vrsqrt.pop %v1789
        %v1811 = vmul.f32 %v1789, %v1810
        %vm1812 = vcmp.eq.f32.partialorder %v1789, inf
        %v1813 = vsel %vm1812, %v1789, %v1811
        %vm1814 = vcmp.eq.f32.partialorder %v1789, 0.0
        %v1815 = vand.u32 %v1789, 2147483648
        %v1816 = vsel %vm1814, %v1815, %v1813
        %v1817 = vrsqrt.pop %v1795
        %v1818 = vmul.f32 %v1795, %v1817
        %vm1819 = vcmp.eq.f32.partialorder %v1795, inf
        %v1820 = vsel %vm1819, %v1795, %v1818
        %vm1821 = vcmp.eq.f32.partialorder %v1795, 0.0
        %v1822 = vand.u32 %v1795, 2147483648
        %v1823 = vsel %vm1821, %v1822, %v1820
        %v1824 = vadd.f32 %v1802, 1e-08
        %v1825 = vadd.f32 %v1809, 1e-08
        %v1826 = vadd.f32 %v1816, 1e-08
        %v1827 = vadd.f32 %v1823, 1e-08
        %v1828 = vrcp.pop %v1824
        %v1829 = vrcp.pop %v1825
        %v1830 = vrcp.pop %v1826
        %v1831 = vrcp.pop %v1827
        %v1832 = vrsqrt.pop %v1749
        %v1833 = vmul.f32 %v1749, %v1832
        %vm1834 = vcmp.eq.f32.partialorder %v1749, inf
        %v1835 = vsel %vm1834, %v1749, %v1833
        %vm1836 = vcmp.eq.f32.partialorder %v1749, 0.0
        %v1837 = vand.u32 %v1749, 2147483648
        %v1838 = vsel %vm1836, %v1837, %v1835
        %v1839 = vrsqrt.pop %v1755
        %v1840 = vmul.f32 %v1755, %v1839
        %vm1841 = vcmp.eq.f32.partialorder %v1755, inf
        %v1842 = vsel %vm1841, %v1755, %v1840
        %vm1843 = vcmp.eq.f32.partialorder %v1755, 0.0
        %v1844 = vand.u32 %v1755, 2147483648
        %v1845 = vsel %vm1843, %v1844, %v1842
        %v1846 = vrsqrt.pop %v1761
        %v1847 = vmul.f32 %v1761, %v1846
        %vm1848 = vcmp.eq.f32.partialorder %v1761, inf
        %v1849 = vsel %vm1848, %v1761, %v1847
        %vm1850 = vcmp.eq.f32.partialorder %v1761, 0.0
        %v1851 = vand.u32 %v1761, 2147483648
        %v1852 = vsel %vm1850, %v1851, %v1849
        %v1853 = vrsqrt.pop %v1767
        %v1854 = vmul.f32 %v1767, %v1853
        %vm1855 = vcmp.eq.f32.partialorder %v1767, inf
        %v1856 = vsel %vm1855, %v1767, %v1854
        %vm1857 = vcmp.eq.f32.partialorder %v1767, 0.0
        %v1858 = vand.u32 %v1767, 2147483648
        %v1859 = vsel %vm1857, %v1858, %v1856
        %v1860 = vmul.f32 %v1838, 0.1
        %v1861 = vmul.f32 %v1845, 0.1
        %v1862 = vmul.f32 %v1852, 0.1
        %v1863 = vmul.f32 %v1859, 0.1
        %v1864 = vmul.f32 %v1860, %v1828
        %v1865 = vmul.f32 %v1861, %v1829
        %v1866 = vmul.f32 %v1862, %v1830
        %v1867 = vmul.f32 %v1863, %v1831
        %v1868 = vmul.f32 %v1864, %v1732
        %v1869 = vmul.f32 %v1865, %v1733
        %v1870 = vmul.f32 %v1866, %v1734
        %v1871 = vmul.f32 %v1867, %v1735
        %v1872 = vadd.f32 %v1613, %v1868
        %v1873 = vadd.f32 %v1614, %v1869
        %v1874 = vadd.f32 %v1615, %v1870
        %v1875 = vadd.f32 %v1616, %v1871
        %v1876 = vxor.u32 %v1872, 2147483648
        %v1877 = vxor.u32 %v1873, 2147483648
        %v1878 = vmul.f32 %v1876, 1.442695
        %v1879 = vpow.pop %v1878
        %v1880 = vmul.f32 %v1877, 1.442695
        %v1881 = vpow.pop %v1880
        %v1882 = vadd.f32 %v1879, 1.0
        %v1883 = vadd.f32 %v1881, 1.0
        %v1884 = vrcp.pop %v1882
        %v1885 = vmul.f32 1.0, %v1884
        %v1886 = vrcp.pop %v1883
        %v1887 = vmul.f32 1.0, %v1886
        %v1888 = vmul.f32 %v1872, %v1885
        %v1889 = vmul.f32 %v1873, %v1887
        %v1890 = vmul.f32 %v1888, %v1874
        %v1891 = vmul.f32 %v1889, %v1875
        %v1892 = vpack.c.bf16 %v1890, %v1890
        %v1893 = vpack.c.bf16 %v1891, %v1891
        %v1894 = vld [vmem:[#allocation4] sm:$0xff]
        %v1895 = vld [vmem:[#allocation4 + $0x8] sm:$0xff]
        %v1896 = vld [vmem:[%s353] sm:$0xff]
        %v1897 = vld [vmem:[%s353 + $0x8] sm:$0xff]
        %v1898 = vld [vmem:[%s353 + $0x10] sm:$0xff]
        %v1899 = vld [vmem:[%s353 + $0x18] sm:$0xff]
        %v1900 = vld [vmem:[%s353 + $0x20] sm:$0xff]
        %v1901 = vld [vmem:[%s353 + $0x28] sm:$0xff]
        %v1902 = vld [vmem:[%s353 + $0x30] sm:$0xff]
        %v1903 = vld [vmem:[%s353 + $0x38] sm:$0xff]
        %v1904 = vld [vmem:[%s353 + $0x40] sm:$0xff]
        %v1905 = vld [vmem:[%s353 + $0x48] sm:$0xff]
        %v1906 = vld [vmem:[%s353 + $0x50] sm:$0xff]
        %v1907 = vld [vmem:[%s353 + $0x58] sm:$0xff]
        %v1908 = vld [vmem:[%s353 + $0x60] sm:$0xff]
        %v1909 = vld [vmem:[%s353 + $0x68] sm:$0xff]
        %v1910 = vld [vmem:[%s353 + $0x70] sm:$0xff]
        %v1911 = vld [vmem:[%s353 + $0x78] sm:$0xff]
        %v1912 = vld [vmem:[%s353 + $0x80] sm:$0xff]
        %v1913 = vld [vmem:[%s353 + $0x88] sm:$0xff]
        %v1914 = vld [vmem:[%s353 + $0x90] sm:$0xff]
        %v1915 = vld [vmem:[%s353 + $0x98] sm:$0xff]
        %v1916 = vld [vmem:[%s353 + $0xa0] sm:$0xff]
        %v1917 = vld [vmem:[%s353 + $0xa8] sm:$0xff]
        %v1918 = vld [vmem:[%s353 + $0xb0] sm:$0xff]
        %v1919 = vld [vmem:[%s353 + $0xb8] sm:$0xff]
        %v1920 = vld [vmem:[%s353 + $0xc0] sm:$0xff]
        %v1921 = vld [vmem:[%s353 + $0xc8] sm:$0xff]
        %v1922 = vld [vmem:[%s353 + $0xd0] sm:$0xff]
        %v1923 = vld [vmem:[%s353 + $0xd8] sm:$0xff]
        %v1924 = vld [vmem:[%s353 + $0xe0] sm:$0xff]
        %v1925 = vld [vmem:[%s353 + $0xe8] sm:$0xff]
        %v1926 = vld [vmem:[%s353 + $0xf0] sm:$0xff]
        %v1927 = vld [vmem:[%s353 + $0xf8] sm:$0xff]
        %v1960 = vunpack.c.l.b16 %v1896
        %v1961 = vunpack.c.h.b16 %v1896
        %v1962 = vunpack.c.l.b16 %v1897
        %v1963 = vunpack.c.h.b16 %v1897
        %v1964 = vunpack.c.l.b16 %v1898
        %v1965 = vunpack.c.h.b16 %v1898
        %v1966 = vunpack.c.l.b16 %v1899
        %v1967 = vunpack.c.h.b16 %v1899
        %v1968 = vunpack.c.l.b16 %v1900
        %v1969 = vunpack.c.h.b16 %v1900
        %v1970 = vunpack.c.l.b16 %v1901
        %v1971 = vunpack.c.h.b16 %v1901
        %v1972 = vunpack.c.l.b16 %v1902
        %v1973 = vunpack.c.h.b16 %v1902
        %v1974 = vunpack.c.l.b16 %v1903
        %v1975 = vunpack.c.h.b16 %v1903
        %v1976 = vunpack.c.l.b16 %v1904
        %v1977 = vunpack.c.h.b16 %v1904
        %v1978 = vunpack.c.l.b16 %v1905
        %v1979 = vunpack.c.h.b16 %v1905
        %v1980 = vunpack.c.l.b16 %v1906
        %v1981 = vunpack.c.h.b16 %v1906
        %v1982 = vunpack.c.l.b16 %v1907
        %v1983 = vunpack.c.h.b16 %v1907
        %v1984 = vunpack.c.l.b16 %v1908
        %v1985 = vunpack.c.h.b16 %v1908
        %v1986 = vunpack.c.l.b16 %v1909
        %v1987 = vunpack.c.h.b16 %v1909
        %v1988 = vunpack.c.l.b16 %v1910
        %v1989 = vunpack.c.h.b16 %v1910
        %v1990 = vunpack.c.l.b16 %v1911
        %v1991 = vunpack.c.h.b16 %v1911
        %v1992 = vunpack.c.l.b16 %v1912
        %v1993 = vunpack.c.h.b16 %v1912
        %v1994 = vunpack.c.l.b16 %v1913
        %v1995 = vunpack.c.h.b16 %v1913
        %v1996 = vunpack.c.l.b16 %v1914
        %v1997 = vunpack.c.h.b16 %v1914
        %v1998 = vunpack.c.l.b16 %v1915
        %v1999 = vunpack.c.h.b16 %v1915
        %v2000 = vunpack.c.l.b16 %v1916
        %v2001 = vunpack.c.h.b16 %v1916
        %v2002 = vunpack.c.l.b16 %v1917
        %v2003 = vunpack.c.h.b16 %v1917
        %v2004 = vunpack.c.l.b16 %v1918
        %v2005 = vunpack.c.h.b16 %v1918
        %v2006 = vunpack.c.l.b16 %v1919
        %v2007 = vunpack.c.h.b16 %v1919
        %v2008 = vunpack.c.l.b16 %v1920
        %v2009 = vunpack.c.h.b16 %v1920
        %v2010 = vunpack.c.l.b16 %v1921
        %v2011 = vunpack.c.h.b16 %v1921
        %v2012 = vunpack.c.l.b16 %v1922
        %v2013 = vunpack.c.h.b16 %v1922
        %v2014 = vunpack.c.l.b16 %v1923
        %v2015 = vunpack.c.h.b16 %v1923
        %v2016 = vunpack.c.l.b16 %v1924
        %v2017 = vunpack.c.h.b16 %v1924
        %v2018 = vunpack.c.l.b16 %v1925
        %v2019 = vunpack.c.h.b16 %v1925
        %v2020 = vunpack.c.l.b16 %v1926
        %v2021 = vunpack.c.h.b16 %v1926
        %v2022 = vunpack.c.l.b16 %v1927
        %v2023 = vunpack.c.h.b16 %v1927
        %v2024 = vpack.c.b16 %v1962, %v1960
        %v2025 = vpack.c.b16 %v1963, %v1961
        %v2026 = vpack.c.b16 %v1966, %v1964
        %v2027 = vpack.c.b16 %v1967, %v1965
        %v2028 = vpack.c.b16 %v1970, %v1968
        %v2029 = vpack.c.b16 %v1971, %v1969
        %v2030 = vpack.c.b16 %v1974, %v1972
        %v2031 = vpack.c.b16 %v1975, %v1973
        %v2032 = vpack.c.b16 %v1978, %v1976
        %v2033 = vpack.c.b16 %v1979, %v1977
        %v2034 = vpack.c.b16 %v1982, %v1980
        %v2035 = vpack.c.b16 %v1983, %v1981
        %v2036 = vpack.c.b16 %v1986, %v1984
        %v2037 = vpack.c.b16 %v1987, %v1985
        %v2038 = vpack.c.b16 %v1990, %v1988
        %v2039 = vpack.c.b16 %v1991, %v1989
        %v2040 = vpack.c.b16 %v1994, %v1992
        %v2041 = vpack.c.b16 %v1995, %v1993
        %v2042 = vpack.c.b16 %v1998, %v1996
        %v2043 = vpack.c.b16 %v1999, %v1997
        %v2044 = vpack.c.b16 %v2002, %v2000
        %v2045 = vpack.c.b16 %v2003, %v2001
        %v2046 = vpack.c.b16 %v2006, %v2004
        %v2047 = vpack.c.b16 %v2007, %v2005
        %v2048 = vpack.c.b16 %v2010, %v2008
        %v2049 = vpack.c.b16 %v2011, %v2009
        %v2050 = vpack.c.b16 %v2014, %v2012
        %v2051 = vpack.c.b16 %v2015, %v2013
        %v2052 = vpack.c.b16 %v2018, %v2016
        %v2053 = vpack.c.b16 %v2019, %v2017
        %v2054 = vpack.c.b16 %v2022, %v2020
        %v2055 = vpack.c.b16 %v2023, %v2021
        %2088 = vmatprep.subr.bf16.mxu0 %v2039
        %2089 = vmatpush1.bf16.msra.mxu0 %v2038
        %2090 = vmatprep.subr.bf16.mxu0 %v2037
        %2091 = vmatpush1.bf16.msra.mxu0 %v2036
        %2092 = vmatprep.subr.bf16.mxu0 %v2035
        %2093 = vmatpush1.bf16.msra.mxu0 %v2034
        %2094 = vmatprep.subr.bf16.mxu0 %v2033
        %2095 = vmatpush1.bf16.msra.mxu0 %v2032
        %2096 = vmatprep.subr.bf16.mxu0 %v2031
        %2097 = vmatpush1.bf16.msra.mxu0 %v2030
        %2098 = vmatprep.subr.bf16.mxu0 %v2029
        %2099 = vmatpush1.bf16.msra.mxu0 %v2028
        %2100 = vmatprep.subr.bf16.mxu0 %v2027
        %2101 = vmatpush1.bf16.msra.mxu0 %v2026
        %2102 = vmatprep.subr.bf16.mxu0 %v2025
        %2103 = vmatpush1.bf16.msra.mxu0 %v2024
        %2104 = vmatprep.subr.bf16.mxu0 %v2055
        %2105 = vmatpush2.bf16.msra.mxu0 %v2054
        %2106 = vmatprep.subr.bf16.mxu0 %v2053
        %2107 = vmatpush2.bf16.msra.mxu0 %v2052
        %2108 = vmatprep.subr.bf16.mxu0 %v2051
        %2109 = vmatpush2.bf16.msra.mxu0 %v2050
        %2110 = vmatprep.subr.bf16.mxu0 %v2049
        %2111 = vmatpush2.bf16.msra.mxu0 %v2048
        %2112 = vmatprep.subr.bf16.mxu0 %v2047
        %2113 = vmatpush2.bf16.msra.mxu0 %v2046
        %2114 = vmatprep.subr.bf16.mxu0 %v2045
        %2115 = vmatpush2.bf16.msra.mxu0 %v2044
        %2116 = vmatprep.subr.bf16.mxu0 %v2043
        %2117 = vmatpush2.bf16.msra.mxu0 %v2042
        %2118 = vmatprep.subr.bf16.mxu0 %v2041
        %2119 = vmatpush2.bf16.msra.mxu0 %v2040
        %2120 = vmatprep.mubr.bf16.mxu0 %v1893
        %2121 = vmatmul.mubr.bf16.gmra.mxu0 %v1892
        %v2122 = vpop.f32.mrf.mxu0
        %v2123 = vadd.f32 0.0, %v2122
        %v2124 = vpop.f32.mrf.mxu0
        %v2125 = vadd.f32 0.0, %v2124
        %v2126 = vpop.f32.mrf.mxu0
        %v2127 = vpop.f32.mrf.mxu0
        %2128 = vdwg.mxu0
        %v2129 = vadd.f32 %v1894, %v2123
        %v2130 = vadd.f32 %v1895, %v2125
        %2131 = vst [vmem:[#allocation4] sm:$0xff] %v2129
        %2132 = vst [vmem:[#allocation4 + $0x8] sm:$0xff] %v2130
        %p2133 = scmp.eq.s32.totalorder %s26, 1
        // Predicated region
        $region69: #{tpu_custom_call.1} parent=51 // pred_check
          %p2134 = pneg %p2133
        $region70: #{tpu_custom_call.1} parent=51 // pred_check_branch
          %2136 = sbr.rel (%p2134) target = $region72
        $region71: #{tpu_custom_call.1} parent=51 // pred_region
          %v2137 = vld [vmem:[#allocation4] sm:$0xff]
          %v2138 = vld [vmem:[#allocation4 + $0x8] sm:$0xff]
          %v2139 = vmul.f32 %v2137, %v2137
          %v2140 = vpack.c.bf16 %v2138, %v2138
          %v2141 = vld [vmem:[%s7] sm:$0xf]
          %vm2142 = vcmask 64512
          %v2144 = vsel %vm2142, %v2140, 0
          %vm2146 = vcmask 1043456
          %v2148 = vsel %vm2146, %v2141, 0
          %2150 = vmatprep.subr.bf16.mxu0 0
          %2151 = vmatpush1.bf16.msra.mxu0 0
          %2152 = vmatprep.subr.bf16.mxu0 0
          %2153 = vmatpush1.bf16.msra.mxu0 0
          %2154 = vmatprep.subr.bf16.mxu0 0
          %2155 = vmatpush1.bf16.msra.mxu0 0
          %2156 = vmatprep.subr.bf16.mxu0 0
          %2157 = vmatpush1.bf16.msra.mxu0 0
          %2158 = vmatprep.subr.bf16.mxu0 0
          %2159 = vmatpush1.bf16.msra.mxu0 0
          %2160 = vmatprep.subr.bf16.mxu0 0
          %2161 = vmatpush1.bf16.msra.mxu0 0
          %2162 = vmatprep.subr.bf16.mxu0 0
          %2163 = vmatpush1.bf16.msra.mxu0 0
          %2164 = vmatprep.subr.bf16.mxu0 0
          %2165 = vmatpush1.bf16.msra.mxu0 %v2148
          %2166 = vmatprep.subr.bf16.mxu0 0
          %2167 = vmatpush2.bf16.msra.mxu0 0
          %2168 = vmatprep.subr.bf16.mxu0 0
          %2169 = vmatpush2.bf16.msra.mxu0 0
          %2170 = vmatprep.subr.bf16.mxu0 0
          %2171 = vmatpush2.bf16.msra.mxu0 0
          %2172 = vmatprep.subr.bf16.mxu0 0
          %2173 = vmatpush2.bf16.msra.mxu0 0
          %2174 = vmatprep.subr.bf16.mxu0 0
          %2175 = vmatpush2.bf16.msra.mxu0 0
          %2176 = vmatprep.subr.bf16.mxu0 0
          %2177 = vmatpush2.bf16.msra.mxu0 0
          %2178 = vmatprep.subr.bf16.mxu0 0
          %2179 = vmatpush2.bf16.msra.mxu0 0
          %2180 = vmatprep.subr.bf16.mxu0 0
          %2181 = vmatpush2.bf16.msra.mxu0 0
          %2182 = vmatprep.mubr.bf16.mxu0 0
          %2183 = vmatmul.mubr.bf16.gmra.mxu0 %v2144
          %v2184 = vpop.f32.mrf.mxu0
          %v2185 = vadd.f32 0.0, %v2184
          %v2186 = vpop.f32.mrf.mxu0
          %v2187 = vpop.f32.mrf.mxu0
          %v2188 = vpop.f32.mrf.mxu0
          %2189 = vdwg.mxu0
          %v2190 = vmul.f32 %v2185, %v951
          %v2191 = vmul.f32 %v960, %v2139
          %v2192 = vrot.slane %v2191, 4
          %v2193 = vadd.f32 %v2191, %v2192
          %v2194 = vrot.slane %v2193, 2
          %v2195 = vadd.f32 %v2193, %v2194
          %v2196 = vrot.slane %v2195, 1
          %v2197 = vadd.f32 %v2195, %v2196
          %v2198 = vmul.f32 %v2190, %v2190
          %v2199 = vrot.slane %v2198, 4
          %v2200 = vadd.f32 %v2198, %v2199
          %v2201 = vrot.slane %v2200, 2
          %v2202 = vadd.f32 %v2200, %v2201
          %v2203 = vrot.slane %v2202, 1
          %v2204 = vadd.f32 %v2202, %v2203
          %v2205 = vrsqrt.pop %v2204
          %v2206 = vmul.f32 %v2204, %v2205
          %vm2207 = vcmp.eq.f32.partialorder %v2204, inf
          %v2208 = vsel %vm2207, %v2204, %v2206
          %vm2209 = vcmp.eq.f32.partialorder %v2204, 0.0
          %v2210 = vand.u32 %v2204, 2147483648
          %v2211 = vsel %vm2209, %v2210, %v2208
          %v2212 = vadd.f32 %v2211, 1e-08
          %v2213 = vrcp.pop %v2212
          %v2214 = vrsqrt.pop %v2197
          %v2215 = vmul.f32 %v2197, %v2214
          %vm2216 = vcmp.eq.f32.partialorder %v2197, inf
          %v2217 = vsel %vm2216, %v2197, %v2215
          %vm2218 = vcmp.eq.f32.partialorder %v2197, 0.0
          %v2219 = vand.u32 %v2197, 2147483648
          %v2220 = vsel %vm2218, %v2219, %v2217
          %v2221 = vmul.f32 %v2220, 0.1
          %v2222 = vmul.f32 %v2221, %v2213
          %v2223 = vmul.f32 %v2222, %v2190
          %v2224 = vadd.f32 %v2137, %v2223
          %v2225 = vld [vmem:[%s7 + $0x4] sm:$0xf]
          %2227 = vrot.lane.b32.xlu0 %v2140, 120
          %v2228 = vpop.permute.xlu0 %2227
          %v2230 = vsel %vm2142, %v2228, 0
          %v2233 = vsel %vm2146, %v2225, 0
          %2235 = vmatprep.subr.bf16.mxu0 0
          %2236 = vmatpush1.bf16.msra.mxu0 0
          %2237 = vmatprep.subr.bf16.mxu0 0
          %2238 = vmatpush1.bf16.msra.mxu0 0
          %2239 = vmatprep.subr.bf16.mxu0 0
          %2240 = vmatpush1.bf16.msra.mxu0 0
          %2241 = vmatprep.subr.bf16.mxu0 0
          %2242 = vmatpush1.bf16.msra.mxu0 0
          %2243 = vmatprep.subr.bf16.mxu0 0
          %2244 = vmatpush1.bf16.msra.mxu0 0
          %2245 = vmatprep.subr.bf16.mxu0 0
          %2246 = vmatpush1.bf16.msra.mxu0 0
          %2247 = vmatprep.subr.bf16.mxu0 0
          %2248 = vmatpush1.bf16.msra.mxu0 0
          %2249 = vmatprep.subr.bf16.mxu0 0
          %2250 = vmatpush1.bf16.msra.mxu0 %v2233
          %2251 = vmatprep.subr.bf16.mxu0 0
          %2252 = vmatpush2.bf16.msra.mxu0 0
          %2253 = vmatprep.subr.bf16.mxu0 0
          %2254 = vmatpush2.bf16.msra.mxu0 0
          %2255 = vmatprep.subr.bf16.mxu0 0
          %2256 = vmatpush2.bf16.msra.mxu0 0
          %2257 = vmatprep.subr.bf16.mxu0 0
          %2258 = vmatpush2.bf16.msra.mxu0 0
          %2259 = vmatprep.subr.bf16.mxu0 0
          %2260 = vmatpush2.bf16.msra.mxu0 0
          %2261 = vmatprep.subr.bf16.mxu0 0
          %2262 = vmatpush2.bf16.msra.mxu0 0
          %2263 = vmatprep.subr.bf16.mxu0 0
          %2264 = vmatpush2.bf16.msra.mxu0 0
          %2265 = vmatprep.subr.bf16.mxu0 0
          %2266 = vmatpush2.bf16.msra.mxu0 0
          %2267 = vmatprep.mubr.bf16.mxu0 0
          %2268 = vmatmul.mubr.bf16.gmra.mxu0 %v2230
          %v2269 = vpop.f32.mrf.mxu0
          %v2270 = vadd.f32 0.0, %v2269
          %v2271 = vpop.f32.mrf.mxu0
          %v2272 = vpop.f32.mrf.mxu0
          %v2273 = vpop.f32.mrf.mxu0
          %2274 = vdwg.mxu0
          %v2275 = vmul.f32 %v2270, %v1212
          %v2276 = vmul.f32 %v1220, %v2139
          %v2277 = vrot.slane %v2276, 4
          %v2278 = vadd.f32 %v2276, %v2277
          %v2279 = vrot.slane %v2278, 2
          %v2280 = vadd.f32 %v2278, %v2279
          %v2281 = vrot.slane %v2280, 1
          %v2282 = vadd.f32 %v2280, %v2281
          %v2283 = vmul.f32 %v2275, %v2275
          %v2284 = vrot.slane %v2283, 4
          %v2285 = vadd.f32 %v2283, %v2284
          %v2286 = vrot.slane %v2285, 2
          %v2287 = vadd.f32 %v2285, %v2286
          %v2288 = vrot.slane %v2287, 1
          %v2289 = vadd.f32 %v2287, %v2288
          %v2290 = vrsqrt.pop %v2289
          %v2291 = vmul.f32 %v2289, %v2290
          %vm2292 = vcmp.eq.f32.partialorder %v2289, inf
          %v2293 = vsel %vm2292, %v2289, %v2291
          %vm2294 = vcmp.eq.f32.partialorder %v2289, 0.0
          %v2295 = vand.u32 %v2289, 2147483648
          %v2296 = vsel %vm2294, %v2295, %v2293
          %v2297 = vadd.f32 %v2296, 1e-08
          %v2298 = vrcp.pop %v2297
          %v2299 = vrsqrt.pop %v2282
          %v2300 = vmul.f32 %v2282, %v2299
          %vm2301 = vcmp.eq.f32.partialorder %v2282, inf
          %v2302 = vsel %vm2301, %v2282, %v2300
          %vm2303 = vcmp.eq.f32.partialorder %v2282, 0.0
          %v2304 = vand.u32 %v2282, 2147483648
          %v2305 = vsel %vm2303, %v2304, %v2302
          %v2306 = vmul.f32 %v2305, 0.1
          %v2307 = vmul.f32 %v2306, %v2298
          %v2308 = vmul.f32 %v2307, %v2275
          %v2309 = vadd.f32 %v2224, %v2308
          %v2310 = vld [vmem:[%s7 + $0x8] sm:$0xf]
          %2311 = vrot.lane.b32.xlu0 %v2140, 112
          %v2312 = vpop.permute.xlu0 %2311
          %v2314 = vsel %vm2142, %v2312, 0
          %v2317 = vsel %vm2146, %v2310, 0
          %2319 = vmatprep.subr.bf16.mxu0 0
          %2320 = vmatpush1.bf16.msra.mxu0 0
          %2321 = vmatprep.subr.bf16.mxu0 0
          %2322 = vmatpush1.bf16.msra.mxu0 0
          %2323 = vmatprep.subr.bf16.mxu0 0
          %2324 = vmatpush1.bf16.msra.mxu0 0
          %2325 = vmatprep.subr.bf16.mxu0 0
          %2326 = vmatpush1.bf16.msra.mxu0 0
          %2327 = vmatprep.subr.bf16.mxu0 0
          %2328 = vmatpush1.bf16.msra.mxu0 0
          %2329 = vmatprep.subr.bf16.mxu0 0
          %2330 = vmatpush1.bf16.msra.mxu0 0
          %2331 = vmatprep.subr.bf16.mxu0 0
          %2332 = vmatpush1.bf16.msra.mxu0 0
          %2333 = vmatprep.subr.bf16.mxu0 0
          %2334 = vmatpush1.bf16.msra.mxu0 %v2317
          %2335 = vmatprep.subr.bf16.mxu0 0
          %2336 = vmatpush2.bf16.msra.mxu0 0
          %2337 = vmatprep.subr.bf16.mxu0 0
          %2338 = vmatpush2.bf16.msra.mxu0 0
          %2339 = vmatprep.subr.bf16.mxu0 0
          %2340 = vmatpush2.bf16.msra.mxu0 0
          %2341 = vmatprep.subr.bf16.mxu0 0
          %2342 = vmatpush2.bf16.msra.mxu0 0
          %2343 = vmatprep.subr.bf16.mxu0 0
          %2344 = vmatpush2.bf16.msra.mxu0 0
          %2345 = vmatprep.subr.bf16.mxu0 0
          %2346 = vmatpush2.bf16.msra.mxu0 0
          %2347 = vmatprep.subr.bf16.mxu0 0
          %2348 = vmatpush2.bf16.msra.mxu0 0
          %2349 = vmatprep.subr.bf16.mxu0 0
          %2350 = vmatpush2.bf16.msra.mxu0 0
          %2351 = vmatprep.mubr.bf16.mxu0 0
          %2352 = vmatmul.mubr.bf16.gmra.mxu0 %v2314
          %v2353 = vpop.f32.mrf.mxu0
          %v2354 = vadd.f32 0.0, %v2353
          %v2355 = vpop.f32.mrf.mxu0
          %v2356 = vpop.f32.mrf.mxu0
          %v2357 = vpop.f32.mrf.mxu0
          %2358 = vdwg.mxu0
          %v2359 = vmul.f32 %v2354, %v1471
          %v2360 = vmul.f32 %v1479, %v2139
          %v2361 = vrot.slane %v2360, 4
          %v2362 = vadd.f32 %v2360, %v2361
          %v2363 = vrot.slane %v2362, 2
          %v2364 = vadd.f32 %v2362, %v2363
          %v2365 = vrot.slane %v2364, 1
          %v2366 = vadd.f32 %v2364, %v2365
          %v2367 = vmul.f32 %v2359, %v2359
          %v2368 = vrot.slane %v2367, 4
          %v2369 = vadd.f32 %v2367, %v2368
          %v2370 = vrot.slane %v2369, 2
          %v2371 = vadd.f32 %v2369, %v2370
          %v2372 = vrot.slane %v2371, 1
          %v2373 = vadd.f32 %v2371, %v2372
          %v2374 = vrsqrt.pop %v2373
          %v2375 = vmul.f32 %v2373, %v2374
          %vm2376 = vcmp.eq.f32.partialorder %v2373, inf
          %v2377 = vsel %vm2376, %v2373, %v2375
          %vm2378 = vcmp.eq.f32.partialorder %v2373, 0.0
          %v2379 = vand.u32 %v2373, 2147483648
          %v2380 = vsel %vm2378, %v2379, %v2377
          %v2381 = vadd.f32 %v2380, 1e-08
          %v2382 = vrcp.pop %v2381
          %v2383 = vrsqrt.pop %v2366
          %v2384 = vmul.f32 %v2366, %v2383
          %vm2385 = vcmp.eq.f32.partialorder %v2366, inf
          %v2386 = vsel %vm2385, %v2366, %v2384
          %vm2387 = vcmp.eq.f32.partialorder %v2366, 0.0
          %v2388 = vand.u32 %v2366, 2147483648
          %v2389 = vsel %vm2387, %v2388, %v2386
          %v2390 = vmul.f32 %v2389, 0.1
          %v2391 = vmul.f32 %v2390, %v2382
          %v2392 = vmul.f32 %v2391, %v2359
          %v2393 = vadd.f32 %v2309, %v2392
          %v2394 = vld [vmem:[%s7 + $0xc] sm:$0xf]
          %2395 = vrot.lane.b32.xlu0 %v2140, 104
          %v2396 = vpop.permute.xlu0 %2395
          %v2398 = vsel %vm2142, %v2396, 0
          %v2401 = vsel %vm2146, %v2394, 0
          %2403 = vmatprep.subr.bf16.mxu0 0
          %2404 = vmatpush1.bf16.msra.mxu0 0
          %2405 = vmatprep.subr.bf16.mxu0 0
          %2406 = vmatpush1.bf16.msra.mxu0 0
          %2407 = vmatprep.subr.bf16.mxu0 0
          %2408 = vmatpush1.bf16.msra.mxu0 0
          %2409 = vmatprep.subr.bf16.mxu0 0
          %2410 = vmatpush1.bf16.msra.mxu0 0
          %2411 = vmatprep.subr.bf16.mxu0 0
          %2412 = vmatpush1.bf16.msra.mxu0 0
          %2413 = vmatprep.subr.bf16.mxu0 0
          %2414 = vmatpush1.bf16.msra.mxu0 0
          %2415 = vmatprep.subr.bf16.mxu0 0
          %2416 = vmatpush1.bf16.msra.mxu0 0
          %2417 = vmatprep.subr.bf16.mxu0 0
          %2418 = vmatpush1.bf16.msra.mxu0 %v2401
          %2419 = vmatprep.subr.bf16.mxu0 0
          %2420 = vmatpush2.bf16.msra.mxu0 0
          %2421 = vmatprep.subr.bf16.mxu0 0
          %2422 = vmatpush2.bf16.msra.mxu0 0
          %2423 = vmatprep.subr.bf16.mxu0 0
          %2424 = vmatpush2.bf16.msra.mxu0 0
          %2425 = vmatprep.subr.bf16.mxu0 0
          %2426 = vmatpush2.bf16.msra.mxu0 0
          %2427 = vmatprep.subr.bf16.mxu0 0
          %2428 = vmatpush2.bf16.msra.mxu0 0
          %2429 = vmatprep.subr.bf16.mxu0 0
          %2430 = vmatpush2.bf16.msra.mxu0 0
          %2431 = vmatprep.subr.bf16.mxu0 0
          %2432 = vmatpush2.bf16.msra.mxu0 0
          %2433 = vmatprep.subr.bf16.mxu0 0
          %2434 = vmatpush2.bf16.msra.mxu0 0
          %2435 = vmatprep.mubr.bf16.mxu0 0
          %2436 = vmatmul.mubr.bf16.gmra.mxu0 %v2398
          %v2437 = vpop.f32.mrf.mxu0
          %v2438 = vadd.f32 0.0, %v2437
          %v2439 = vpop.f32.mrf.mxu0
          %v2440 = vpop.f32.mrf.mxu0
          %v2441 = vpop.f32.mrf.mxu0
          %2442 = vdwg.mxu0
          %v2443 = vmul.f32 %v2438, %v1730
          %v2444 = vmul.f32 %v1738, %v2139
          %v2445 = vrot.slane %v2444, 4
          %v2446 = vadd.f32 %v2444, %v2445
          %v2447 = vrot.slane %v2446, 2
          %v2448 = vadd.f32 %v2446, %v2447
          %v2449 = vrot.slane %v2448, 1
          %v2450 = vadd.f32 %v2448, %v2449
          %v2451 = vmul.f32 %v2443, %v2443
          %v2452 = vrot.slane %v2451, 4
          %v2453 = vadd.f32 %v2451, %v2452
          %v2454 = vrot.slane %v2453, 2
          %v2455 = vadd.f32 %v2453, %v2454
          %v2456 = vrot.slane %v2455, 1
          %v2457 = vadd.f32 %v2455, %v2456
          %v2458 = vrsqrt.pop %v2457
          %v2459 = vmul.f32 %v2457, %v2458
          %vm2460 = vcmp.eq.f32.partialorder %v2457, inf
          %v2461 = vsel %vm2460, %v2457, %v2459
          %vm2462 = vcmp.eq.f32.partialorder %v2457, 0.0
          %v2463 = vand.u32 %v2457, 2147483648
          %v2464 = vsel %vm2462, %v2463, %v2461
          %v2465 = vadd.f32 %v2464, 1e-08
          %v2466 = vrcp.pop %v2465
          %v2467 = vrsqrt.pop %v2450
          %v2468 = vmul.f32 %v2450, %v2467
          %vm2469 = vcmp.eq.f32.partialorder %v2450, inf
          %v2470 = vsel %vm2469, %v2450, %v2468
          %vm2471 = vcmp.eq.f32.partialorder %v2450, 0.0
          %v2472 = vand.u32 %v2450, 2147483648
          %v2473 = vsel %vm2471, %v2472, %v2470
          %v2474 = vmul.f32 %v2473, 0.1
          %v2475 = vmul.f32 %v2474, %v2466
          %v2476 = vmul.f32 %v2475, %v2443
          %v2477 = vadd.f32 %v2393, %v2476
          %2478 = vst [vmem:[#allocation11] sm:$0xff] %v2477
        $region72: #{tpu_custom_call.1} parent=51 // pred_fallthru
          _
        // Predicated region
        $region73: #{tpu_custom_call.1} parent=51 // pred_check
          %p2479 = pneg %p222
        $region74: #{tpu_custom_call.1} parent=51 // pred_check_branch
          %2481 = sbr.rel (%p2479) target = $region76
        $region75: #{tpu_custom_call.1} parent=51 // pred_region
          %s2483 = ssub.s32 128, 128
          %2484 = vsyncadd [#allocation7], %s2483
          %s2486 = sshll.u32 [#allocation11], 4
          %s2487 = int_to_ptr.vmem [resolvable:$true] %s2486
          %2489 = dma.vmem_to_hbm [thread:$0]  %s2487, 128, %s8, [#allocation7]
        $region76: #{tpu_custom_call.1} parent=51 // pred_fallthru
          _
        // Predicated region
        $region77: #{tpu_custom_call.1} parent=51 // pred_check
          %p2490 = pneg %p222
        $region78: #{tpu_custom_call.1} parent=51 // pred_check_branch
          %2492 = sbr.rel (%p2490) target = $region80
        $region79: #{tpu_custom_call.1} parent=51 // pred_region
          %2493 = dma.done [#allocation7], 128
        $region80: #{tpu_custom_call.1} parent=51 // pred_fallthru
          _
      $region52: #{tpu_custom_call.1} parent=5 // pred_fallthru
        _
      %p2494 = scmp.le.s32.totalorder 2, %s21
      // Predicated region
      $region81: #{tpu_custom_call.1} parent=5 // pred_check
        %p2495 = pneg %p2494
      $region82: #{tpu_custom_call.1} parent=5 // pred_check_branch
        %2497 = sbr.rel (%p2495) target = $region84
      $region83: #{tpu_custom_call.1} parent=5 // pred_region
        %s2498 = ssub.s32 %s21, 2
      $region84: #{tpu_custom_call.1} parent=5 // pred_fallthru
        _
    $region6: #{tpu_custom_call.1} parent=1 // loop_footer
      %s25 = sadd.s32 1, %s21
    $region7: #{tpu_custom_call.1} parent=1 // loop_footer_branch
      %20 = sbr.rel target = $region3
    $region8: #{tpu_custom_call.1} parent=1 // loop_exit
      _
    %2499 = vsyncpa [#allocation6], 1
    %s2500 = scalar_lea.sflag [#allocation6], 1
    %2501 = vsyncpa %s2500, 1
    %2502 = vsyncpa [#allocation9], 1
    %s2503 = scalar_lea.sflag [#allocation9], 1
    %2504 = vsyncpa %s2503, 1
    %2505 = vsyncpa [#allocation7], 1
    %s2506 = scalar_lea.sflag [#allocation7], 1
    %2507 = vsyncpa %s2506, 1

</llo_original>
